<compile_context>
chip_gen: v7x
topology: tpu7x:2x2x1
jax: 0.10.0
libtpu: 0.0.40
codegen_flags: <defaults>
</compile_context>

<pallas_src>
import functools

import numpy as np
import jax
import jax.numpy as jnp
from jax import lax
from jax.experimental import pallas as pl
from jax.experimental.pallas import tpu as pltpu

EPS = 1e-5


def _round_up(x, m):
    return (x + m - 1) // m * m


def _bottleneck_kernel(W, H,
                       xb_ref, xa_ref, xc_ref,      # padded input: body rows + 2 halo rows
                       w1_ref, w2_ref, w3_ref,      # bf16, BN scales folded in
                       b1_ref, b2_ref, b3_ref,      # f32 (1, C) biases
                       out_ref):
    t = pl.program_id(1)
    TH = xb_ref.shape[1]
    WP = xb_ref.shape[2]
    Cip = xb_ref.shape[3]
    Cwp = w1_ref.shape[1]
    Cop = w3_ref.shape[1]
    f32 = jnp.float32

    body = xb_ref[0]                                        # (TH, WP, Cip) bf16
    halo = jnp.concatenate([xa_ref[0], xc_ref[0]], axis=0)  # (2,  WP, Cip) bf16

    # ---- conv1 (1x1) + bn1 bias + ReLU --------------------------------------
    # Computed on the padded grid; the conv-padding ring of the result must be
    # exactly zero for the following 3x3 conv -> iota masks (no mask input).
    def conv1(x3d, row0):
        rows = x3d.shape[0]
        h = jnp.dot(x3d.reshape(rows * WP, Cip), w1_ref[...],
                    preferred_element_type=f32)
        h = jnp.maximum(h + b1_ref[...], 0.0).reshape(rows, WP, Cwp)
        col = lax.broadcasted_iota(jnp.int32, (rows, WP, Cwp), 1)
        row = lax.broadcasted_iota(jnp.int32, (rows, WP, Cwp), 0) + row0
        keep = (col >= 1) & (col <= W) & (row >= 1) & (row <= H)
        return jnp.where(keep, h, 0.0)

    hb = conv1(body, t * TH)                  # (TH, WP, Cwp) f32
    hh = conv1(halo, (t + 1) * TH)            # (2,  WP, Cwp) f32
    hp = jnp.concatenate([hb, hh], axis=0)    # (TH+2, WP, Cwp), zero padding ring

    # ---- conv2 (3x3, stride 1, pad 1) + bn2 bias + ReLU ----------------------
    # dx taps concatenated along K (one K=3*Cwp matmul per dy); the +-1 column
    # shifts are sublane rotations on the XLU, not strided slices.
    hp_cat = jnp.concatenate(
        [pltpu.roll(hp, shift=1, axis=1),         # tap kx=0 : hp[., c-1]
         hp,                                      # tap kx=1 : hp[., c]
         pltpu.roll(hp, shift=WP - 1, axis=1)],   # tap kx=2 : hp[., c+1]
        axis=-1).astype(jnp.bfloat16)             # (TH+2, WP, 3*Cwp)

    acc = jnp.zeros((TH * WP, Cwp), f32)
    for dy in range(3):
        sl = hp_cat[dy:dy + TH].reshape(TH * WP, 3 * Cwp)
        acc = acc + jnp.dot(sl, w2_ref[dy], preferred_element_type=f32)
    h2 = jnp.maximum(acc + b2_ref[...], 0.0).astype(jnp.bfloat16)

    # ---- conv3 (1x1) + bn3 bias ----------------------------------------------
    h3 = jnp.dot(h2, w3_ref[...], preferred_element_type=f32) + b3_ref[...]
    h3 = h3.reshape(TH, WP, Cop)

    # ---- residual (downsample is None -> identity) + ReLU --------------------
    # identity rows are the interior rows of the already-resident padded input
    # block: body rows 1..TH-1 plus the first halo row (no extra HBM read).
    ident = jnp.concatenate([body[1:TH], xa_ref[0]], axis=0).astype(f32)
    out_ref[0] = jnp.maximum(h3 + ident, 0.0).astype(out_ref.dtype)


def _fold_bn(gamma, beta, mean, var):
    scale = gamma / jnp.sqrt(var + EPS)
    bias = beta - mean * scale
    return scale.astype(jnp.float32), bias.astype(jnp.float32)


def _pick_tile_h(H, WP, cpad, budget_bytes=2 << 20):
    """Largest divisor of H whose f32 row-tile stays within a per-buffer budget."""
    best = None
    for d in range(2, H + 1):
        if H % d == 0 and d * WP * cpad * 4 <= budget_bytes:
            best = d
    if best is not None:
        return best
    for d in range(2, H + 1):
        if H % d == 0:
            return d
    return H


def bottleneck_forward(x, params, *, tile_h=None):
    """x: (N, H, W, Cin) float32 NHWC.  Returns (N, H, W, Cin) float32."""
    N, H, W, Cin = x.shape
    width = params['w1'].shape[1]
    Cout = params['w3'].shape[1]
    assert Cout == Cin, "default Bottleneck (downsample=None) needs inplanes == 4*planes"
    assert H >= 2

    # Fold eval-mode BN into the conv weights (scale) + per-channel biases.
    s1, b1 = _fold_bn(*params['bn1'])
    s2, b2 = _fold_bn(*params['bn2'])
    s3, b3 = _fold_bn(*params['bn3'])
    w1f = params['w1'].astype(jnp.float32) * s1[None, :]
    w2f = params['w2'].astype(jnp.float32) * s2[None, None, None, :]
    w3f = params['w3'].astype(jnp.float32) * s3[None, :]

    # Lane-dense channel padding (multiples of 128) and 8-aligned padded width.
    Cp = _round_up(Cin, 128)            # == padded Cout (Cin == Cout here)
    Cwp = _round_up(width, 128)
    WP = _round_up(W + 2, 8)

    # Single pad+cast of the activation: conv zero-padding ring + alignment pad.
    xp = jnp.pad(x, ((0, 0), (1, 1), (1, WP - W - 1), (0, Cp - Cin))
                 ).astype(jnp.bfloat16)                       # (N, H+2, WP, Cp)

    w1p = jnp.pad(w1f, ((0, Cp - Cin), (0, Cwp - width))).astype(jnp.bfloat16)
    w2p = jnp.pad(w2f, ((0, 0), (0, 0), (0, Cwp - width), (0, Cwp - width)))
    w2cat = w2p.reshape(3, 3 * Cwp, Cwp).astype(jnp.bfloat16)  # dx taps stacked on K
    w3p = jnp.pad(w3f, ((0, Cwp - width), (0, Cp - Cout))).astype(jnp.bfloat16)
    b1p = jnp.pad(b1, (0, Cwp - width))[None, :]
    b2p = jnp.pad(b2, (0, Cwp - width))[None, :]
    b3p = jnp.pad(b3, (0, Cp - Cout))[None, :]

    TILE_H = tile_h if tile_h is not None else _pick_tile_h(H, WP, Cp)
    assert H % TILE_H == 0 and TILE_H >= 2
    T = H // TILE_H

    body_spec = pl.BlockSpec((1, TILE_H, WP, Cp), lambda n, t: (n, t, 0, 0))
    halo_a = pl.BlockSpec((1, 1, WP, Cp), lambda n, t: (n, (t + 1) * TILE_H, 0, 0))
    halo_b = pl.BlockSpec((1, 1, WP, Cp), lambda n, t: (n, (t + 1) * TILE_H + 1, 0, 0))
    const2 = lambda n, t: (0, 0)
    const3 = lambda n, t: (0, 0, 0)

    flops = 2 * N * H * W * (Cin * width + 9 * width * width + width * Cout)
    bytes_accessed = int(xp.nbytes + N * H * WP * Cp * 4 + w1p.nbytes
                         + w2cat.nbytes + w3p.nbytes
                         + b1p.nbytes + b2p.nbytes + b3p.nbytes)

    out_padded = pl.pallas_call(
        functools.partial(_bottleneck_kernel, W, H),
        out_shape=jax.ShapeDtypeStruct((N, H, WP, Cp), jnp.float32),
        grid=(N, T),
        in_specs=[
            body_spec, halo_a, halo_b,
            pl.BlockSpec((Cp, Cwp), const2),          # w1 (resident across grid)
            pl.BlockSpec((3, 3 * Cwp, Cwp), const3),  # w2 (dx-concatenated)
            pl.BlockSpec((Cwp, Cp), const2),          # w3
            pl.BlockSpec((1, Cwp), const2),           # b1
            pl.BlockSpec((1, Cwp), const2),           # b2
            pl.BlockSpec((1, Cp), const2),            # b3
        ],
        out_specs=pl.BlockSpec((1, TILE_H, WP, Cp), lambda n, t: (n, t, 0, 0)),
        compiler_params=pltpu.CompilerParams(
            dimension_semantics=("parallel", "parallel")),
        cost_estimate=pl.CostEstimate(flops=flops, transcendentals=0,
                                      bytes_accessed=bytes_accessed),
    )(xp, xp, xp, w1p, w2cat, w3p, b1p, b2p, b3p)

    # Interior (real) columns / channels; fuses into the consumer in a real net.
    return out_padded[:, :, 1:W + 1, :Cout]


def bottleneck_ref(x, params):
    """Pure-JAX f32 reference (conv + eval-mode BN), NHWC."""
    def bn(y, g, b, m, v):
        return (y - m) * (g / jnp.sqrt(v + EPS)) + b

    dn = ('NHWC', 'HWIO', 'NHWC')
    h = lax.conv_general_dilated(x, params['w1'][None, None], (1, 1), 'VALID',
                                 dimension_numbers=dn)
    h = jax.nn.relu(bn(h, *params['bn1']))
    h = lax.conv_general_dilated(h, params['w2'], (1, 1), 'SAME',
                                 dimension_numbers=dn)
    h = jax.nn.relu(bn(h, *params['bn2']))
    h = lax.conv_general_dilated(h, params['w3'][None, None], (1, 1), 'VALID',
                                 dimension_numbers=dn)
    h = bn(h, *params['bn3'])
    return jax.nn.relu(h + x)


def make_params(key, inplanes, planes):
    """Synthetic parameters with the shapes Bottleneck(inplanes, planes) implies."""
    width = planes                      # base_width=64, groups=1 -> width = planes
    out_planes = planes * 4             # expansion = 4
    assert out_planes == inplanes       # downsample=None is only valid then

    ks = jax.random.split(key, 6)

    def bn_params(k, c):
        k1, k2, k3, k4 = jax.random.split(k, 4)
        gamma = 1.0 + 0.1 * jax.random.normal(k1, (c,), jnp.float32)
        beta = 0.1 * jax.random.normal(k2, (c,), jnp.float32)
        mean = 0.1 * jax.random.normal(k3, (c,), jnp.float32)
        var = 0.5 + 0.5 * jnp.abs(jax.random.normal(k4, (c,), jnp.float32))
        return (gamma, beta, mean, var)

    return {
        'w1': 0.1 * jax.random.normal(ks[0], (inplanes, width), jnp.float32),
        'w2': 0.1 * jax.random.normal(ks[1], (3, 3, width, width), jnp.float32),
        'w3': 0.1 * jax.random.normal(ks[2], (width, out_planes), jnp.float32),
        'bn1': bn_params(ks[3], width),
        'bn2': bn_params(ks[4], width),
        'bn3': bn_params(ks[5], out_planes),
    }


if __name__ == "__main__":
    key = jax.random.PRNGKey(0)
    kx, kp = jax.random.split(key)

    N, H, W = 2, 16, 16
    inplanes, planes = 128, 32          # width = 32, output channels = 128

    x = jax.random.normal(kx, (N, H, W, inplanes), jnp.float32)
    params = make_params(kp, inplanes, planes)

    fwd = jax.jit(functools.partial(bottleneck_forward, tile_h=8))  # grid (2, 2)
    out = jax.block_until_ready(fwd(x, params))
    ref = jax.block_until_ready(bottleneck_ref(x, params))

    out_np, ref_np = np.asarray(out), np.asarray(ref)
    # tolerance sized for three chained bf16 matmuls with f32 accumulation
    if not np.allclose(out_np, ref_np, atol=5e-2, rtol=5e-2):
        raise AssertionError(
            f"Pallas Bottleneck mismatch vs JAX reference "
            f"(max abs err {float(np.max(np.abs(out_np - ref_np)))})")
    print("KERNEL_OK")
</pallas_src>

<mosaic_0001>
module attributes {stable_mosaic.version = 11 : i64} {
  func.func @_bottleneck_kernel(%arg0: i32, %arg1: i32, %arg2: memref<1x8x24x128xbf16, #tpu.memory_space<vmem>>, %arg3: memref<1x1x24x128xbf16, #tpu.memory_space<vmem>>, %arg4: memref<1x1x24x128xbf16, #tpu.memory_space<vmem>>, %arg5: memref<128x128xbf16, #tpu.memory_space<vmem>>, %arg6: memref<3x384x128xbf16, #tpu.memory_space<vmem>>, %arg7: memref<128x128xbf16, #tpu.memory_space<vmem>>, %arg8: memref<1x128xf32, #tpu.memory_space<vmem>>, %arg9: memref<1x128xf32, #tpu.memory_space<vmem>>, %arg10: memref<1x128xf32, #tpu.memory_space<vmem>>, %arg11: memref<1x8x24x128xf32, #tpu.memory_space<vmem>>) attributes {dimension_semantics = [#tpu.dimension_semantics<parallel>, #tpu.dimension_semantics<parallel>], iteration_bounds = array<i64: 2, 2>, scalar_prefetch = 0 : i64, scratch_operands = 0 : i64, tpu.core_type = #tpu.core_type<tc>, window_params = [{transform_indices = @transform_0, window_bounds = array<i64: 1, 8, 24, 128>}, {transform_indices = @transform_1, window_bounds = array<i64: 1, 1, 24, 128>}, {transform_indices = @transform_2, window_bounds = array<i64: 1, 1, 24, 128>}, {pipeline_mode = #tpu.pipeline_mode<synchronous>, transform_indices = @transform_3, window_bounds = array<i64: 128, 128>}, {pipeline_mode = #tpu.pipeline_mode<synchronous>, transform_indices = @transform_4, window_bounds = array<i64: 3, 384, 128>}, {pipeline_mode = #tpu.pipeline_mode<synchronous>, transform_indices = @transform_5, window_bounds = array<i64: 128, 128>}, {pipeline_mode = #tpu.pipeline_mode<synchronous>, transform_indices = @transform_6, window_bounds = array<i64: 1, 128>}, {pipeline_mode = #tpu.pipeline_mode<synchronous>, transform_indices = @transform_7, window_bounds = array<i64: 1, 128>}, {pipeline_mode = #tpu.pipeline_mode<synchronous>, transform_indices = @transform_8, window_bounds = array<i64: 1, 128>}, {transform_indices = @transform_9, window_bounds = array<i64: 1, 8, 24, 128>}]} {
    %c0 = arith.constant 0 : index
    %c0_0 = arith.constant 0 : index
    %c0_1 = arith.constant 0 : index
    %c0_2 = arith.constant 0 : index
    %0 = vector.load %arg2[%c0, %c0_0, %c0_1, %c0_2] : memref<1x8x24x128xbf16, #tpu.memory_space<vmem>>, vector<1x8x24x128xbf16>
    %1 = vector.shape_cast %0 : vector<1x8x24x128xbf16> to vector<8x24x128xbf16>
    %c0_3 = arith.constant 0 : index
    %c0_4 = arith.constant 0 : index
    %c0_5 = arith.constant 0 : index
    %c0_6 = arith.constant 0 : index
    %2 = vector.load %arg3[%c0_3, %c0_4, %c0_5, %c0_6] : memref<1x1x24x128xbf16, #tpu.memory_space<vmem>>, vector<1x1x24x128xbf16>
    %3 = vector.shape_cast %2 : vector<1x1x24x128xbf16> to vector<1x24x128xbf16>
    %c0_7 = arith.constant 0 : index
    %c0_8 = arith.constant 0 : index
    %c0_9 = arith.constant 0 : index
    %c0_10 = arith.constant 0 : index
    %4 = vector.load %arg4[%c0_7, %c0_8, %c0_9, %c0_10] : memref<1x1x24x128xbf16, #tpu.memory_space<vmem>>, vector<1x1x24x128xbf16>
    %5 = vector.shape_cast %4 : vector<1x1x24x128xbf16> to vector<1x24x128xbf16>
    %6 = tpu.concatenate %3, %5 in 0 : vector<1x24x128xbf16>, vector<1x24x128xbf16> -> vector<2x24x128xbf16>
    %c8_i32 = arith.constant 8 : i32
    %7 = arith.muli %arg1, %c8_i32 : i32
    %8 = vector.shape_cast %1 : vector<8x24x128xbf16> to vector<192x128xbf16>
    %c0_11 = arith.constant 0 : index
    %c0_12 = arith.constant 0 : index
    %9 = vector.load %arg5[%c0_11, %c0_12] : memref<128x128xbf16, #tpu.memory_space<vmem>>, vector<128x128xbf16>
    %cst = arith.constant dense<0.000000e+00> : vector<192x128xf32>
    %10 = tpu.matmul %8, %9, %cst {dimension_numbers = #tpu.dot_dimension_numbers<[1], [0], [0], [1], [0, 0, 1, 1], [], []>} : vector<192x128xbf16>, vector<128x128xbf16>, vector<192x128xf32> -> vector<192x128xf32>
    %c0_13 = arith.constant 0 : index
    %c0_14 = arith.constant 0 : index
    %11 = vector.load %arg8[%c0_13, %c0_14] : memref<1x128xf32, #tpu.memory_space<vmem>>, vector<1x128xf32>
    %12 = vector.broadcast %11 : vector<1x128xf32> to vector<192x128xf32>
    %13 = arith.addf %10, %12 : vector<192x128xf32>
    %cst_15 = arith.constant 0.000000e+00 : f32
    %14 = vector.broadcast %cst_15 : f32 to vector<192x128xf32>
    %15 = arith.maximumf %13, %14 : vector<192x128xf32>
    %16 = vector.shape_cast %15 : vector<192x128xf32> to vector<8x24x128xf32>
    %17 = tpu.iota {dimensions = array<i32: 1>} : vector<8x24x128xi32>
    %18 = tpu.iota {dimensions = array<i32: 0>} : vector<8x24x128xi32>
    %19 = vector.broadcast %7 : i32 to vector<8x24x128xi32>
    %20 = arith.addi %18, %19 : vector<8x24x128xi32>
    %c1_i32 = arith.constant 1 : i32
    %21 = vector.broadcast %c1_i32 : i32 to vector<8x24x128xi32>
    %22 = arith.cmpi sge, %17, %21 : vector<8x24x128xi32>
    %c16_i32 = arith.constant 16 : i32
    %23 = vector.broadcast %c16_i32 : i32 to vector<8x24x128xi32>
    %24 = arith.cmpi sle, %17, %23 : vector<8x24x128xi32>
    %25 = arith.andi %22, %24 : vector<8x24x128xi1>
    %c1_i32_16 = arith.constant 1 : i32
    %26 = vector.broadcast %c1_i32_16 : i32 to vector<8x24x128xi32>
    %27 = arith.cmpi sge, %20, %26 : vector<8x24x128xi32>
    %28 = arith.andi %25, %27 : vector<8x24x128xi1>
    %c16_i32_17 = arith.constant 16 : i32
    %29 = vector.broadcast %c16_i32_17 : i32 to vector<8x24x128xi32>
    %30 = arith.cmpi sle, %20, %29 : vector<8x24x128xi32>
    %31 = arith.andi %28, %30 : vector<8x24x128xi1>
    %cst_18 = arith.constant 0.000000e+00 : f32
    %32 = vector.broadcast %cst_18 : f32 to vector<8x24x128xf32>
    %33 = arith.select %31, %16, %32 : vector<8x24x128xi1>, vector<8x24x128xf32>
    %c1_i32_19 = arith.constant 1 : i32
    %34 = arith.addi %arg1, %c1_i32_19 : i32
    %c8_i32_20 = arith.constant 8 : i32
    %35 = arith.muli %34, %c8_i32_20 : i32
    %36 = vector.shape_cast %6 : vector<2x24x128xbf16> to vector<48x128xbf16>
    %c0_21 = arith.constant 0 : index
    %c0_22 = arith.constant 0 : index
    %37 = vector.load %arg5[%c0_21, %c0_22] : memref<128x128xbf16, #tpu.memory_space<vmem>>, vector<128x128xbf16>
    %cst_23 = arith.constant dense<0.000000e+00> : vector<48x128xf32>
    %38 = tpu.matmul %36, %37, %cst_23 {dimension_numbers = #tpu.dot_dimension_numbers<[1], [0], [0], [1], [0, 0, 1, 1], [], []>} : vector<48x128xbf16>, vector<128x128xbf16>, vector<48x128xf32> -> vector<48x128xf32>
    %c0_24 = arith.constant 0 : index
    %c0_25 = arith.constant 0 : index
    %39 = vector.load %arg8[%c0_24, %c0_25] : memref<1x128xf32, #tpu.memory_space<vmem>>, vector<1x128xf32>
    %40 = vector.broadcast %39 : vector<1x128xf32> to vector<48x128xf32>
    %41 = arith.addf %38, %40 : vector<48x128xf32>
    %cst_26 = arith.constant 0.000000e+00 : f32
    %42 = vector.broadcast %cst_26 : f32 to vector<48x128xf32>
    %43 = arith.maximumf %41, %42 : vector<48x128xf32>
    %44 = vector.shape_cast %43 : vector<48x128xf32> to vector<2x24x128xf32>
    %45 = tpu.iota {dimensions = array<i32: 1>} : vector<2x24x128xi32>
    %46 = tpu.iota {dimensions = array<i32: 0>} : vector<2x24x128xi32>
    %47 = vector.broadcast %35 : i32 to vector<2x24x128xi32>
    %48 = arith.addi %46, %47 : vector<2x24x128xi32>
    %c1_i32_27 = arith.constant 1 : i32
    %49 = vector.broadcast %c1_i32_27 : i32 to vector<2x24x128xi32>
    %50 = arith.cmpi sge, %45, %49 : vector<2x24x128xi32>
    %c16_i32_28 = arith.constant 16 : i32
    %51 = vector.broadcast %c16_i32_28 : i32 to vector<2x24x128xi32>
    %52 = arith.cmpi sle, %45, %51 : vector<2x24x128xi32>
    %53 = arith.andi %50, %52 : vector<2x24x128xi1>
    %c1_i32_29 = arith.constant 1 : i32
    %54 = vector.broadcast %c1_i32_29 : i32 to vector<2x24x128xi32>
    %55 = arith.cmpi sge, %48, %54 : vector<2x24x128xi32>
    %56 = arith.andi %53, %55 : vector<2x24x128xi1>
    %c16_i32_30 = arith.constant 16 : i32
    %57 = vector.broadcast %c16_i32_30 : i32 to vector<2x24x128xi32>
    %58 = arith.cmpi sle, %48, %57 : vector<2x24x128xi32>
    %59 = arith.andi %56, %58 : vector<2x24x128xi1>
    %cst_31 = arith.constant 0.000000e+00 : f32
    %60 = vector.broadcast %cst_31 : f32 to vector<2x24x128xf32>
    %61 = arith.select %59, %44, %60 : vector<2x24x128xi1>, vector<2x24x128xf32>
    %62 = tpu.concatenate %33, %61 in 0 : vector<8x24x128xf32>, vector<2x24x128xf32> -> vector<10x24x128xf32>
    %c1_i32_32 = arith.constant 1 : i32
    %63 = tpu.dynamic_rotate %62 by %c1_i32_32 dim 1 : vector<10x24x128xf32>, i32 -> vector<10x24x128xf32>
    %c23_i32 = arith.constant 23 : i32
    %64 = tpu.dynamic_rotate %62 by %c23_i32 dim 1 : vector<10x24x128xf32>, i32 -> vector<10x24x128xf32>
    %65 = tpu.concatenate %63, %62, %64 in 2 : vector<10x24x128xf32>, vector<10x24x128xf32>, vector<10x24x128xf32> -> vector<10x24x384xf32>
    %66 = arith.truncf %65 : vector<10x24x384xf32> to vector<10x24x384xbf16>
    %cst_33 = arith.constant 0.000000e+00 : f32
    %67 = vector.broadcast %cst_33 : f32 to vector<192x128xf32>
    %68 = vector.extract_strided_slice %66 {offsets = [0, 0, 0], sizes = [8, 24, 384], strides = [1, 1, 1]} : vector<10x24x384xbf16> to vector<8x24x384xbf16>
    %69 = vector.shape_cast %68 : vector<8x24x384xbf16> to vector<192x384xbf16>
    %c0_34 = arith.constant 0 : index
    %c0_35 = arith.constant 0 : index
    %c0_36 = arith.constant 0 : index
    %70 = vector.load %arg6[%c0_34, %c0_35, %c0_36] : memref<3x384x128xbf16, #tpu.memory_space<vmem>>, vector<1x384x128xbf16>
    %71 = vector.shape_cast %70 : vector<1x384x128xbf16> to vector<384x128xbf16>
    %cst_37 = arith.constant dense<0.000000e+00> : vector<192x128xf32>
    %72 = tpu.matmul %69, %71, %cst_37 {dimension_numbers = #tpu.dot_dimension_numbers<[1], [0], [0], [1], [0, 0, 1, 1], [], []>} : vector<192x384xbf16>, vector<384x128xbf16>, vector<192x128xf32> -> vector<192x128xf32>
    %73 = arith.addf %67, %72 : vector<192x128xf32>
    %74 = vector.extract_strided_slice %66 {offsets = [1, 0, 0], sizes = [8, 24, 384], strides = [1, 1, 1]} : vector<10x24x384xbf16> to vector<8x24x384xbf16>
    %75 = vector.shape_cast %74 : vector<8x24x384xbf16> to vector<192x384xbf16>
    %c1 = arith.constant 1 : index
    %c0_38 = arith.constant 0 : index
    %c0_39 = arith.constant 0 : index
    %76 = vector.load %arg6[%c1, %c0_38, %c0_39] : memref<3x384x128xbf16, #tpu.memory_space<vmem>>, vector<1x384x128xbf16>
    %77 = vector.shape_cast %76 : vector<1x384x128xbf16> to vector<384x128xbf16>
    %cst_40 = arith.constant dense<0.000000e+00> : vector<192x128xf32>
    %78 = tpu.matmul %75, %77, %cst_40 {dimension_numbers = #tpu.dot_dimension_numbers<[1], [0], [0], [1], [0, 0, 1, 1], [], []>} : vector<192x384xbf16>, vector<384x128xbf16>, vector<192x128xf32> -> vector<192x128xf32>
    %79 = arith.addf %73, %78 : vector<192x128xf32>
    %80 = vector.extract_strided_slice %66 {offsets = [2, 0, 0], sizes = [8, 24, 384], strides = [1, 1, 1]} : vector<10x24x384xbf16> to vector<8x24x384xbf16>
    %81 = vector.shape_cast %80 : vector<8x24x384xbf16> to vector<192x384xbf16>
    %c2 = arith.constant 2 : index
    %c0_41 = arith.constant 0 : index
    %c0_42 = arith.constant 0 : index
    %82 = vector.load %arg6[%c2, %c0_41, %c0_42] : memref<3x384x128xbf16, #tpu.memory_space<vmem>>, vector<1x384x128xbf16>
    %83 = vector.shape_cast %82 : vector<1x384x128xbf16> to vector<384x128xbf16>
    %cst_43 = arith.constant dense<0.000000e+00> : vector<192x128xf32>
    %84 = tpu.matmul %81, %83, %cst_43 {dimension_numbers = #tpu.dot_dimension_numbers<[1], [0], [0], [1], [0, 0, 1, 1], [], []>} : vector<192x384xbf16>, vector<384x128xbf16>, vector<192x128xf32> -> vector<192x128xf32>
    %85 = arith.addf %79, %84 : vector<192x128xf32>
    %c0_44 = arith.constant 0 : index
    %c0_45 = arith.constant 0 : index
    %86 = vector.load %arg9[%c0_44, %c0_45] : memref<1x128xf32, #tpu.memory_space<vmem>>, vector<1x128xf32>
    %87 = vector.broadcast %86 : vector<1x128xf32> to vector<192x128xf32>
    %88 = arith.addf %85, %87 : vector<192x128xf32>
    %cst_46 = arith.constant 0.000000e+00 : f32
    %89 = vector.broadcast %cst_46 : f32 to vector<192x128xf32>
    %90 = arith.maximumf %88, %89 : vector<192x128xf32>
    %91 = arith.truncf %90 : vector<192x128xf32> to vector<192x128xbf16>
    %c0_47 = arith.constant 0 : index
    %c0_48 = arith.constant 0 : index
    %92 = vector.load %arg7[%c0_47, %c0_48] : memref<128x128xbf16, #tpu.memory_space<vmem>>, vector<128x128xbf16>
    %cst_49 = arith.constant dense<0.000000e+00> : vector<192x128xf32>
    %93 = tpu.matmul %91, %92, %cst_49 {dimension_numbers = #tpu.dot_dimension_numbers<[1], [0], [0], [1], [0, 0, 1, 1], [], []>} : vector<192x128xbf16>, vector<128x128xbf16>, vector<192x128xf32> -> vector<192x128xf32>
    %c0_50 = arith.constant 0 : index
    %c0_51 = arith.constant 0 : index
    %94 = vector.load %arg10[%c0_50, %c0_51] : memref<1x128xf32, #tpu.memory_space<vmem>>, vector<1x128xf32>
    %95 = vector.broadcast %94 : vector<1x128xf32> to vector<192x128xf32>
    %96 = arith.addf %93, %95 : vector<192x128xf32>
    %97 = vector.shape_cast %96 : vector<192x128xf32> to vector<8x24x128xf32>
    %98 = vector.extract_strided_slice %1 {offsets = [1, 0, 0], sizes = [7, 24, 128], strides = [1, 1, 1]} : vector<8x24x128xbf16> to vector<7x24x128xbf16>
    %c0_52 = arith.constant 0 : index
    %c0_53 = arith.constant 0 : index
    %c0_54 = arith.constant 0 : index
    %c0_55 = arith.constant 0 : index
    %99 = vector.load %arg3[%c0_52, %c0_53, %c0_54, %c0_55] : memref<1x1x24x128xbf16, #tpu.memory_space<vmem>>, vector<1x1x24x128xbf16>
    %100 = vector.shape_cast %99 : vector<1x1x24x128xbf16> to vector<1x24x128xbf16>
    %101 = tpu.concatenate %98, %100 in 0 : vector<7x24x128xbf16>, vector<1x24x128xbf16> -> vector<8x24x128xbf16>
    %102 = arith.extf %101 : vector<8x24x128xbf16> to vector<8x24x128xf32>
    %103 = arith.addf %97, %102 : vector<8x24x128xf32>
    %cst_56 = arith.constant 0.000000e+00 : f32
    %104 = vector.broadcast %cst_56 : f32 to vector<8x24x128xf32>
    %105 = arith.maximumf %103, %104 : vector<8x24x128xf32>
    %c0_57 = arith.constant 0 : index
    %c0_58 = arith.constant 0 : index
    %c0_59 = arith.constant 0 : index
    %c0_60 = arith.constant 0 : index
    %106 = vector.load %arg11[%c0_57, %c0_58, %c0_59, %c0_60] : memref<1x8x24x128xf32, #tpu.memory_space<vmem>>, vector<1x8x24x128xf32>
    %107 = vector.shape_cast %106 : vector<1x8x24x128xf32> to vector<8x24x128xf32>
    %108 = vector.shape_cast %105 : vector<8x24x128xf32> to vector<1x8x24x128xf32>
    tpu.vector_store %arg11[%c0_57, %c0_58, %c0_59, %c0_60], %108 {strides = array<i32>} : memref<1x8x24x128xf32, #tpu.memory_space<vmem>>, vector<1x8x24x128xf32>,
    return
  }
  func.func @transform_0(%arg0: i32, %arg1: i32) -> (i32, i32, i32, i32) {
    %c0_i32 = arith.constant 0 : i32
    %c0_i32_0 = arith.constant 0 : i32
    %c0_i32_1 = arith.constant 0 : i32
    return %arg0, %arg1, %c0_i32, %c0_i32_0 : i32, i32, i32, i32
  }
  func.func @transform_1(%arg0: i32, %arg1: i32) -> (i32, i32, i32, i32) {
    %c1_i32 = arith.constant 1 : i32
    %0 = arith.addi %arg1, %c1_i32 : i32
    %c8_i32 = arith.constant 8 : i32
    %1 = arith.muli %0, %c8_i32 : i32
    %c0_i32 = arith.constant 0 : i32
    %c0_i32_0 = arith.constant 0 : i32
    %c0_i32_1 = arith.constant 0 : i32
    return %arg0, %1, %c0_i32, %c0_i32_0 : i32, i32, i32, i32
  }
  func.func @transform_2(%arg0: i32, %arg1: i32) -> (i32, i32, i32, i32) {
    %c1_i32 = arith.constant 1 : i32
    %0 = arith.addi %arg1, %c1_i32 : i32
    %c8_i32 = arith.constant 8 : i32
    %1 = arith.muli %0, %c8_i32 : i32
    %c1_i32_0 = arith.constant 1 : i32
    %2 = arith.addi %1, %c1_i32_0 : i32
    %c0_i32 = arith.constant 0 : i32
    %c0_i32_1 = arith.constant 0 : i32
    %c0_i32_2 = arith.constant 0 : i32
    return %arg0, %2, %c0_i32, %c0_i32_1 : i32, i32, i32, i32
  }
  func.func @transform_3(%arg0: i32, %arg1: i32) -> (i32, i32) {
    %c0_i32 = arith.constant 0 : i32
    %c0_i32_0 = arith.constant 0 : i32
    %c0_i32_1 = arith.constant 0 : i32
    return %c0_i32, %c0_i32_0 : i32, i32
  }
  func.func @transform_4(%arg0: i32, %arg1: i32) -> (i32, i32, i32) {
    %c0_i32 = arith.constant 0 : i32
    %c0_i32_0 = arith.constant 0 : i32
    %c0_i32_1 = arith.constant 0 : i32
    %c0_i32_2 = arith.constant 0 : i32
    return %c0_i32, %c0_i32_0, %c0_i32_1 : i32, i32, i32
  }
  func.func @transform_5(%arg0: i32, %arg1: i32) -> (i32, i32) {
    %c0_i32 = arith.constant 0 : i32
    %c0_i32_0 = arith.constant 0 : i32
    %c0_i32_1 = arith.constant 0 : i32
    return %c0_i32, %c0_i32_0 : i32, i32
  }
  func.func @transform_6(%arg0: i32, %arg1: i32) -> (i32, i32) {
    %c0_i32 = arith.constant 0 : i32
    %c0_i32_0 = arith.constant 0 : i32
    %c0_i32_1 = arith.constant 0 : i32
    return %c0_i32, %c0_i32_0 : i32, i32
  }
  func.func @transform_7(%arg0: i32, %arg1: i32) -> (i32, i32) {
    %c0_i32 = arith.constant 0 : i32
    %c0_i32_0 = arith.constant 0 : i32
    %c0_i32_1 = arith.constant 0 : i32
    return %c0_i32, %c0_i32_0 : i32, i32
  }
  func.func @transform_8(%arg0: i32, %arg1: i32) -> (i32, i32) {
    %c0_i32 = arith.constant 0 : i32
    %c0_i32_0 = arith.constant 0 : i32
    %c0_i32_1 = arith.constant 0 : i32
    return %c0_i32, %c0_i32_0 : i32, i32
  }
  func.func @transform_9(%arg0: i32, %arg1: i32) -> (i32, i32, i32, i32) {
    %c0_i32 = arith.constant 0 : i32
    %c0_i32_0 = arith.constant 0 : i32
    %c0_i32_1 = arith.constant 0 : i32
    return %arg0, %arg1, %c0_i32, %c0_i32_0 : i32, i32, i32, i32
  }
}

</mosaic_0001>

<llo_original>
// kernel: bottleneck_forward.1
$region0: #{bottleneck_forward.1}
  #allocation0 [shape = 'u32[]', space=smem, size = 0x4, offset = 0x4, fixed_abs, tag = 'smem constant byte address 0x4 - core index']
  #allocation1 [shape = 'u32[144,128]{1,0:T(1,128)}', space=vmem, size = 0x12000, scoped, tag = 'internal scratch']
  %s0 = inlined_call_operand.vmem [shape: bf16[2,18,24,128], index: 0, kind: input, shape index: {}, may-alias: {0,1,2}]
  %s1 = inlined_call_operand.vmem [shape: bf16[2,18,24,128], index: 1, kind: input, shape index: {}, may-alias: {0,1,2}]
  %s2 = inlined_call_operand.vmem [shape: bf16[2,18,24,128], index: 2, kind: input, shape index: {}, may-alias: {0,1,2}]
  %s3 = inlined_call_operand.vmem [shape: bf16[128,128], index: 3, kind: input, shape index: {}]
  %s4 = inlined_call_operand.vmem [shape: bf16[3,384,128], index: 4, kind: input, shape index: {}]
  %s5 = inlined_call_operand.vmem [shape: bf16[128,128], index: 5, kind: input, shape index: {}]
  %s6 = inlined_call_operand.vmem [shape: f32[1,128], index: 6, kind: input, shape index: {}]
  %s7 = inlined_call_operand.vmem [shape: f32[1,128], index: 7, kind: input, shape index: {}]
  %s8 = inlined_call_operand.vmem [shape: f32[1,128], index: 8, kind: input, shape index: {}]
  %s9 = inlined_call_operand.vmem [shape: f32[2,16,24,128], index: 9, kind: output, shape index: {}]
  %s10 = sld [smem:[#allocation0]]
  $region69: #{bottleneck_forward.1} parent=0
    _
  %s12 = ssub.s32 1, %s10
  %s13 = scalar_select 0, %s12, %s10
  loop: start=0, step=1, limit=6
  $region2: #{bottleneck_forward.1} parent=0 // loop_pre_header
    _
  $region3: #{bottleneck_forward.1} parent=0 // loop_header
    %s15 = sphi 0, %s19
    %p16 = scmp.ge.s32.totalorder %s15, 6
    %s22 = sphi 0, %s34
    %s23 = sphi 0, %s30
    %s24 = sphi 0, %s22
    %s25 = sphi 0, %s23
    %s26 = sphi 0, %s24
    %s27 = sphi 0, %s25
    %s39 = sphi 0, %s41
    %s42 = sphi 0, %s39
    %s43 = sphi 0, %s42
    %s59 = sphi 0, %s43
    %s71 = sphi 0, %s73
    %s74 = sphi 0, %s71
    %s75 = sphi 0, %s74
    %s91 = sphi 0, %s75
    %s105 = sphi 0, %s107
    %s108 = sphi 0, %s105
    %s109 = sphi 0, %s108
    %s125 = sphi 0, %s109
    %s129 = sphi 0, %s129
    %s131 = sphi 0, %s129
    %s132 = sphi 0, %s131
    %s146 = sphi 0, %s132
    %s150 = sphi 0, %s150
    %s152 = sphi 0, %s150
    %s153 = sphi 0, %s152
    %s167 = sphi 0, %s153
    %s171 = sphi 0, %s171
    %s173 = sphi 0, %s171
    %s174 = sphi 0, %s173
    %s188 = sphi 0, %s174
    %s192 = sphi 0, %s192
    %s194 = sphi 0, %s192
    %s195 = sphi 0, %s194
    %s209 = sphi 0, %s195
    %s213 = sphi 0, %s213
    %s215 = sphi 0, %s213
    %s216 = sphi 0, %s215
    %s230 = sphi 0, %s216
    %s234 = sphi 0, %s234
    %s236 = sphi 0, %s234
    %s237 = sphi 0, %s236
    %s251 = sphi 0, %s237
    %s259 = sphi 0, %s261
    %s262 = sphi 0, %s259
    %s263 = sphi 0, %s262
    %s279 = sphi 0, %s263
  $region4: #{bottleneck_forward.1} parent=0 // loop_header_branch
    %18 = sbr.rel (%p16) target = $region8
  $region5: #{bottleneck_forward.1} parent=0 // loop_body
    %s20 = ssub.s32 %s15, 1
    %s21 = ssub.s32 %s15, 2
    %s28 = sadd.s32 1, %s23
    %p29 = scmp.ge.s32.totalorder %s28, 2
    %s30 = scalar_select %p29, 0, %s28
    %s31 = sadd.s32 1, %s22
    %s32 = scalar_select %p29, %s31, %s22
    %p33 = scmp.ge.s32.totalorder %s32, 2
    %s34 = scalar_select %p33, 0, %s32
    %s35 = ssub.s32 %s22, %s34
    %s36 = ssub.s32 %s23, %s30
    %s37 = sor.u32 %s35, %s36
    %p38 = scmp.eq.s32.totalorder %s37, 0
    %s40 = sadd.s32 %s39, 1
    %s41 = scalar_select %p38, %s39, %s40
    %p44 = pneg %p38
    %p45 = scmp.eq.s32.totalorder %s15, 3
    %p46 = por %p44, %p45
    %p47 = scmp.ne.s32.totalorder %s39, %s42
    %p48 = scmp.eq.s32.totalorder %s15, 0
    %p49 = por %p47, %p48
    %p50 = scmp.ne.s32.totalorder %s39, %s42
    %p51 = scmp.eq.s32.totalorder %s20, 3
    %p52 = por %p50, %p51
    %p53 = scmp.ne.s32.totalorder %s42, %s43
    %p54 = scmp.eq.s32.totalorder %s20, 0
    %p55 = por %p53, %p54
    %p56 = scmp.ne.s32.totalorder %s42, %s43
    %p57 = scmp.eq.s32.totalorder %s21, 3
    %p58 = por %p56, %p57
    %p60 = scmp.ne.s32.totalorder %s43, %s59
    %p61 = scmp.eq.s32.totalorder %s21, 0
    %p62 = por %p60, %p61
    %s63 = sadd.s32 %s23, 1
    %s64 = smul.u32 %s63, 8
    %s65 = sadd.s32 %s30, 1
    %s66 = smul.u32 %s65, 8
    %s67 = ssub.s32 %s22, %s34
    %s68 = ssub.s32 %s64, %s66
    %s69 = sor.u32 %s67, %s68
    %p70 = scmp.eq.s32.totalorder %s69, 0
    %s72 = sadd.s32 %s71, 1
    %s73 = scalar_select %p70, %s71, %s72
    %p76 = pneg %p70
    %p77 = scmp.eq.s32.totalorder %s15, 3
    %p78 = por %p76, %p77
    %p79 = scmp.ne.s32.totalorder %s71, %s74
    %p80 = scmp.eq.s32.totalorder %s15, 0
    %p81 = por %p79, %p80
    %p82 = scmp.ne.s32.totalorder %s71, %s74
    %p83 = scmp.eq.s32.totalorder %s20, 3
    %p84 = por %p82, %p83
    %p85 = scmp.ne.s32.totalorder %s74, %s75
    %p86 = scmp.eq.s32.totalorder %s20, 0
    %p87 = por %p85, %p86
    %p88 = scmp.ne.s32.totalorder %s74, %s75
    %p89 = scmp.eq.s32.totalorder %s21, 3
    %p90 = por %p88, %p89
    %p92 = scmp.ne.s32.totalorder %s75, %s91
    %p93 = scmp.eq.s32.totalorder %s21, 0
    %p94 = por %p92, %p93
    %s95 = sadd.s32 %s23, 1
    %s96 = smul.u32 %s95, 8
    %s97 = sadd.s32 %s96, 1
    %s98 = sadd.s32 %s30, 1
    %s99 = smul.u32 %s98, 8
    %s100 = sadd.s32 %s99, 1
    %s101 = ssub.s32 %s22, %s34
    %s102 = ssub.s32 %s97, %s100
    %s103 = sor.u32 %s101, %s102
    %p104 = scmp.eq.s32.totalorder %s103, 0
    %s106 = sadd.s32 %s105, 1
    %s107 = scalar_select %p104, %s105, %s106
    %p110 = pneg %p104
    %p111 = scmp.eq.s32.totalorder %s15, 3
    %p112 = por %p110, %p111
    %p113 = scmp.ne.s32.totalorder %s105, %s108
    %p114 = scmp.eq.s32.totalorder %s15, 0
    %p115 = por %p113, %p114
    %p116 = scmp.ne.s32.totalorder %s105, %s108
    %p117 = scmp.eq.s32.totalorder %s20, 3
    %p118 = por %p116, %p117
    %p119 = scmp.ne.s32.totalorder %s108, %s109
    %p120 = scmp.eq.s32.totalorder %s20, 0
    %p121 = por %p119, %p120
    %p122 = scmp.ne.s32.totalorder %s108, %s109
    %p123 = scmp.eq.s32.totalorder %s21, 3
    %p124 = por %p122, %p123
    %p126 = scmp.ne.s32.totalorder %s109, %s125
    %p127 = scmp.eq.s32.totalorder %s21, 0
    %p128 = por %p126, %p127
    %s130 = sadd.s32 %s129, 1
    %p133 = scmp.eq.s32.totalorder %s15, 3
    %p134 = scmp.ne.s32.totalorder %s129, %s131
    %p135 = scmp.eq.s32.totalorder %s15, 0
    %p136 = por %p134, %p135
    %p137 = scmp.ne.s32.totalorder %s129, %s131
    %p138 = scmp.eq.s32.totalorder %s20, 3
    %p139 = por %p137, %p138
    %p140 = scmp.ne.s32.totalorder %s131, %s132
    %p141 = scmp.eq.s32.totalorder %s20, 0
    %p142 = por %p140, %p141
    %p143 = scmp.ne.s32.totalorder %s131, %s132
    %p144 = scmp.eq.s32.totalorder %s21, 3
    %p145 = por %p143, %p144
    %p147 = scmp.ne.s32.totalorder %s132, %s146
    %p148 = scmp.eq.s32.totalorder %s21, 0
    %p149 = por %p147, %p148
    %s151 = sadd.s32 %s150, 1
    %p154 = scmp.eq.s32.totalorder %s15, 3
    %p155 = scmp.ne.s32.totalorder %s150, %s152
    %p156 = scmp.eq.s32.totalorder %s15, 0
    %p157 = por %p155, %p156
    %p158 = scmp.ne.s32.totalorder %s150, %s152
    %p159 = scmp.eq.s32.totalorder %s20, 3
    %p160 = por %p158, %p159
    %p161 = scmp.ne.s32.totalorder %s152, %s153
    %p162 = scmp.eq.s32.totalorder %s20, 0
    %p163 = por %p161, %p162
    %p164 = scmp.ne.s32.totalorder %s152, %s153
    %p165 = scmp.eq.s32.totalorder %s21, 3
    %p166 = por %p164, %p165
    %p168 = scmp.ne.s32.totalorder %s153, %s167
    %p169 = scmp.eq.s32.totalorder %s21, 0
    %p170 = por %p168, %p169
    %s172 = sadd.s32 %s171, 1
    %p175 = scmp.eq.s32.totalorder %s15, 3
    %p176 = scmp.ne.s32.totalorder %s171, %s173
    %p177 = scmp.eq.s32.totalorder %s15, 0
    %p178 = por %p176, %p177
    %p179 = scmp.ne.s32.totalorder %s171, %s173
    %p180 = scmp.eq.s32.totalorder %s20, 3
    %p181 = por %p179, %p180
    %p182 = scmp.ne.s32.totalorder %s173, %s174
    %p183 = scmp.eq.s32.totalorder %s20, 0
    %p184 = por %p182, %p183
    %p185 = scmp.ne.s32.totalorder %s173, %s174
    %p186 = scmp.eq.s32.totalorder %s21, 3
    %p187 = por %p185, %p186
    %p189 = scmp.ne.s32.totalorder %s174, %s188
    %p190 = scmp.eq.s32.totalorder %s21, 0
    %p191 = por %p189, %p190
    %s193 = sadd.s32 %s192, 1
    %p196 = scmp.eq.s32.totalorder %s15, 3
    %p197 = scmp.ne.s32.totalorder %s192, %s194
    %p198 = scmp.eq.s32.totalorder %s15, 0
    %p199 = por %p197, %p198
    %p200 = scmp.ne.s32.totalorder %s192, %s194
    %p201 = scmp.eq.s32.totalorder %s20, 3
    %p202 = por %p200, %p201
    %p203 = scmp.ne.s32.totalorder %s194, %s195
    %p204 = scmp.eq.s32.totalorder %s20, 0
    %p205 = por %p203, %p204
    %p206 = scmp.ne.s32.totalorder %s194, %s195
    %p207 = scmp.eq.s32.totalorder %s21, 3
    %p208 = por %p206, %p207
    %p210 = scmp.ne.s32.totalorder %s195, %s209
    %p211 = scmp.eq.s32.totalorder %s21, 0
    %p212 = por %p210, %p211
    %s214 = sadd.s32 %s213, 1
    %p217 = scmp.eq.s32.totalorder %s15, 3
    %p218 = scmp.ne.s32.totalorder %s213, %s215
    %p219 = scmp.eq.s32.totalorder %s15, 0
    %p220 = por %p218, %p219
    %p221 = scmp.ne.s32.totalorder %s213, %s215
    %p222 = scmp.eq.s32.totalorder %s20, 3
    %p223 = por %p221, %p222
    %p224 = scmp.ne.s32.totalorder %s215, %s216
    %p225 = scmp.eq.s32.totalorder %s20, 0
    %p226 = por %p224, %p225
    %p227 = scmp.ne.s32.totalorder %s215, %s216
    %p228 = scmp.eq.s32.totalorder %s21, 3
    %p229 = por %p227, %p228
    %p231 = scmp.ne.s32.totalorder %s216, %s230
    %p232 = scmp.eq.s32.totalorder %s21, 0
    %p233 = por %p231, %p232
    %s235 = sadd.s32 %s234, 1
    %p238 = scmp.eq.s32.totalorder %s15, 3
    %p239 = scmp.ne.s32.totalorder %s234, %s236
    %p240 = scmp.eq.s32.totalorder %s15, 0
    %p241 = por %p239, %p240
    %p242 = scmp.ne.s32.totalorder %s234, %s236
    %p243 = scmp.eq.s32.totalorder %s20, 3
    %p244 = por %p242, %p243
    %p245 = scmp.ne.s32.totalorder %s236, %s237
    %p246 = scmp.eq.s32.totalorder %s20, 0
    %p247 = por %p245, %p246
    %p248 = scmp.ne.s32.totalorder %s236, %s237
    %p249 = scmp.eq.s32.totalorder %s21, 3
    %p250 = por %p248, %p249
    %p252 = scmp.ne.s32.totalorder %s237, %s251
    %p253 = scmp.eq.s32.totalorder %s21, 0
    %p254 = por %p252, %p253
    %s255 = ssub.s32 %s22, %s34
    %s256 = ssub.s32 %s23, %s30
    %s257 = sor.u32 %s255, %s256
    %p258 = scmp.eq.s32.totalorder %s257, 0
    %s260 = sadd.s32 %s259, 1
    %s261 = scalar_select %p258, %s259, %s260
    %p264 = pneg %p258
    %p265 = scmp.eq.s32.totalorder %s15, 3
    %p266 = por %p264, %p265
    %p267 = scmp.ne.s32.totalorder %s259, %s262
    %p268 = scmp.eq.s32.totalorder %s15, 0
    %p269 = por %p267, %p268
    %p270 = scmp.ne.s32.totalorder %s259, %s262
    %p271 = scmp.eq.s32.totalorder %s20, 3
    %p272 = por %p270, %p271
    %p273 = scmp.ne.s32.totalorder %s262, %s263
    %p274 = scmp.eq.s32.totalorder %s20, 0
    %p275 = por %p273, %p274
    %p276 = scmp.ne.s32.totalorder %s262, %s263
    %p277 = scmp.eq.s32.totalorder %s21, 3
    %p278 = por %p276, %p277
    %p280 = scmp.ne.s32.totalorder %s263, %s279
    %p281 = scmp.eq.s32.totalorder %s21, 0
    %p282 = por %p280, %p281
    %p283 = scmp.le.s32.totalorder 1, %s15
    %p284 = scmp.lt.s32.totalorder %s15, 5
    %p285 = pnand %p283, %p284
    %p286 = pneg %p285
    // Predicated region
    $region9: #{bottleneck_forward.1} parent=5 // pred_check
      _
    $region10: #{bottleneck_forward.1} parent=5 // pred_check_branch
      %288 = sbr.rel (%p285) target = $region12
    $region11: #{bottleneck_forward.1} parent=5 // pred_region
      %s289 = ssub.s32 %s15, 1
      // Predicated region
      $region13: #{bottleneck_forward.1} parent=11 // pred_check
        %p290 = pneg %p142
      $region14: #{bottleneck_forward.1} parent=11 // pred_check_branch
        %292 = sbr.rel (%p290) target = $region16
      $region15: #{bottleneck_forward.1} parent=11 // pred_region
        _
      $region16: #{bottleneck_forward.1} parent=11 // pred_fallthru
        _
      // Predicated region
      $region17: #{bottleneck_forward.1} parent=11 // pred_check
        %p293 = pneg %p163
      $region18: #{bottleneck_forward.1} parent=11 // pred_check_branch
        %295 = sbr.rel (%p293) target = $region20
      $region19: #{bottleneck_forward.1} parent=11 // pred_region
        _
      $region20: #{bottleneck_forward.1} parent=11 // pred_fallthru
        _
      // Predicated region
      $region21: #{bottleneck_forward.1} parent=11 // pred_check
        %p296 = pneg %p184
      $region22: #{bottleneck_forward.1} parent=11 // pred_check_branch
        %298 = sbr.rel (%p296) target = $region24
      $region23: #{bottleneck_forward.1} parent=11 // pred_region
        _
      $region24: #{bottleneck_forward.1} parent=11 // pred_fallthru
        _
      // Predicated region
      $region25: #{bottleneck_forward.1} parent=11 // pred_check
        %p299 = pneg %p205
      $region26: #{bottleneck_forward.1} parent=11 // pred_check_branch
        %301 = sbr.rel (%p299) target = $region28
      $region27: #{bottleneck_forward.1} parent=11 // pred_region
        _
      $region28: #{bottleneck_forward.1} parent=11 // pred_fallthru
        _
      // Predicated region
      $region29: #{bottleneck_forward.1} parent=11 // pred_check
        %p302 = pneg %p226
      $region30: #{bottleneck_forward.1} parent=11 // pred_check_branch
        %304 = sbr.rel (%p302) target = $region32
      $region31: #{bottleneck_forward.1} parent=11 // pred_region
        _
      $region32: #{bottleneck_forward.1} parent=11 // pred_fallthru
        _
      // Predicated region
      $region33: #{bottleneck_forward.1} parent=11 // pred_check
        %p305 = pneg %p247
      $region34: #{bottleneck_forward.1} parent=11 // pred_check_branch
        %307 = sbr.rel (%p305) target = $region36
      $region35: #{bottleneck_forward.1} parent=11 // pred_region
        _
      $region36: #{bottleneck_forward.1} parent=11 // pred_fallthru
        _
    $region12: #{bottleneck_forward.1} parent=5 // pred_fallthru
      _
    %p308 = scmp.lt.s32.totalorder %s15, 4
    // Predicated region
    $region37: #{bottleneck_forward.1} parent=5 // pred_check
      %p309 = pneg %p308
    $region38: #{bottleneck_forward.1} parent=5 // pred_check_branch
      %311 = sbr.rel (%p309) target = $region40
    $region39: #{bottleneck_forward.1} parent=5 // pred_region
      // Predicated region
      $region41: #{bottleneck_forward.1} parent=39 // pred_check
        %p312 = pneg %p49
      $region42: #{bottleneck_forward.1} parent=39 // pred_check_branch
        %314 = sbr.rel (%p312) target = $region44
      $region43: #{bottleneck_forward.1} parent=39 // pred_region
        %s315 = smul.u32 8, %s23
        %s316 = ssub.s32 18, %s315
        %p317 = scmp.lt.s32.totalorder %s316, 8
        %s318 = scalar_select %p317, %s316, 8
        %s319 = smul.u32 64, %s318
        %s320 = smul.u32 %s319, 3
        %p321 = scmp.lt.s32.totalorder %s22, 1
        %s322 = scalar_select %p321, %s22, 1
        %p323 = scmp.lt.s32.totalorder %s315, 17
        %s324 = scalar_select %p323, %s315, 17
        %s325 = smul.addr %s324, 3
        %s326 = smul.addr %s322, 54
        %s327 = sadd.s32 %s325, %s326
        %s328 = smul.addr %s327, 4
        %s329 = scalar_lea.vmem %s0, %s328
        %s330 = smul.u32 8, %s23
        %s331 = ssub.s32 18, %s330
        %p332 = scmp.lt.s32.totalorder %s331, 8
        %s333 = scalar_select %p332, %s331, 8
        %s334 = smul.u32 64, %s333
        %s335 = smul.u32 %s334, 3
      $region44: #{bottleneck_forward.1} parent=39 // pred_fallthru
        _
      // Predicated region
      $region45: #{bottleneck_forward.1} parent=39 // pred_check
        %p336 = pneg %p81
      $region46: #{bottleneck_forward.1} parent=39 // pred_check_branch
        %338 = sbr.rel (%p336) target = $region48
      $region47: #{bottleneck_forward.1} parent=39 // pred_region
        %s339 = sadd.s32 %s23, 1
        %s340 = smul.u32 %s339, 8
        %p341 = scmp.lt.s32.totalorder %s22, 1
        %s342 = scalar_select %p341, %s22, 1
        %p343 = scmp.lt.s32.totalorder %s340, 17
        %s344 = scalar_select %p343, %s340, 17
        %s345 = smul.addr %s344, 3
        %s346 = smul.addr %s342, 54
        %s347 = sadd.s32 %s345, %s346
        %s348 = smul.addr %s347, 4
        %s349 = scalar_lea.vmem %s1, %s348
        %s350 = sadd.s32 %s23, 1
        %s351 = smul.u32 %s350, 8
      $region48: #{bottleneck_forward.1} parent=39 // pred_fallthru
        _
      // Predicated region
      $region49: #{bottleneck_forward.1} parent=39 // pred_check
        %p352 = pneg %p115
      $region50: #{bottleneck_forward.1} parent=39 // pred_check_branch
        %354 = sbr.rel (%p352) target = $region52
      $region51: #{bottleneck_forward.1} parent=39 // pred_region
        %s355 = sadd.s32 %s23, 1
        %s356 = smul.u32 %s355, 8
        %s357 = sadd.s32 %s356, 1
        %p358 = scmp.lt.s32.totalorder %s22, 1
        %s359 = scalar_select %p358, %s22, 1
        %p360 = scmp.lt.s32.totalorder %s357, 17
        %s361 = scalar_select %p360, %s357, 17
        %s362 = smul.addr %s361, 3
        %s363 = smul.addr %s359, 54
        %s364 = sadd.s32 %s362, %s363
        %s365 = smul.addr %s364, 4
        %s366 = scalar_lea.vmem %s2, %s365
        %s367 = sadd.s32 %s23, 1
        %s368 = smul.u32 %s367, 8
        %s369 = sadd.s32 %s368, 1
      $region52: #{bottleneck_forward.1} parent=39 // pred_fallthru
        _
    $region40: #{bottleneck_forward.1} parent=5 // pred_fallthru
      _
    %p370 = scmp.le.s32.totalorder 1, %s15
    %p371 = scmp.lt.s32.totalorder %s15, 5
    %p372 = pnand %p370, %p371
    %p373 = pneg %p372
    // Predicated region
    $region53: #{bottleneck_forward.1} parent=5 // pred_check
      _
    $region54: #{bottleneck_forward.1} parent=5 // pred_check_branch
      %375 = sbr.rel (%p372) target = $region56
    $region55: #{bottleneck_forward.1} parent=5 // pred_region
      %s376 = ssub.s32 %s15, 1
      %s377 = smul.u32 8, %s25
      %s378 = ssub.s32 18, %s377
      %p379 = scmp.lt.s32.totalorder %s378, 8
      %s380 = scalar_select %p379, %s378, 8
      %s381 = smul.u32 64, %s380
      %s382 = smul.u32 %s381, 3
      %p383 = scmp.lt.s32.totalorder %s24, 1
      %s384 = scalar_select %p383, %s24, 1
      %p385 = scmp.lt.s32.totalorder %s377, 17
      %s386 = scalar_select %p385, %s377, 17
      %s387 = smul.addr %s386, 3
      %s388 = smul.addr %s384, 54
      %s389 = sadd.s32 %s387, %s388
      %s390 = smul.addr %s389, 4
      %s391 = scalar_lea.vmem %s0, %s390
      %p392 = pneg %p55
      %p393 = pneg %p52
      %s394 = sadd.s32 %s25, 1
      %s395 = smul.u32 %s394, 8
      %p396 = scmp.lt.s32.totalorder %s24, 1
      %s397 = scalar_select %p396, %s24, 1
      %p398 = scmp.lt.s32.totalorder %s395, 17
      %s399 = scalar_select %p398, %s395, 17
      %s400 = smul.addr %s399, 3
      %s401 = smul.addr %s397, 54
      %s402 = sadd.s32 %s400, %s401
      %s403 = smul.addr %s402, 4
      %s404 = scalar_lea.vmem %s1, %s403
      %p405 = pneg %p87
      %p406 = pneg %p84
      %s407 = sadd.s32 %s25, 1
      %s408 = smul.u32 %s407, 8
      %s409 = sadd.s32 %s408, 1
      %p410 = scmp.lt.s32.totalorder %s24, 1
      %s411 = scalar_select %p410, %s24, 1
      %p412 = scmp.lt.s32.totalorder %s409, 17
      %s413 = scalar_select %p412, %s409, 17
      %s414 = smul.addr %s413, 3
      %s415 = smul.addr %s411, 54
      %s416 = sadd.s32 %s414, %s415
      %s417 = smul.addr %s416, 4
      %s418 = scalar_lea.vmem %s2, %s417
      %p419 = pneg %p121
      %p420 = pneg %p118
      %p421 = pneg %p142
      %p422 = pneg %p139
      %p423 = pneg %p163
      %p424 = pneg %p160
      %p425 = pneg %p184
      %p426 = pneg %p181
      %p427 = pneg %p205
      %p428 = pneg %p202
      %p429 = pneg %p226
      %p430 = pneg %p223
      %p431 = pneg %p247
      %p432 = pneg %p244
      %p433 = pneg %p275
      %p434 = pneg %p272
      %s435 = smul.u32 8, %s25
      %p436 = scmp.lt.s32.totalorder %s24, 1
      %s437 = scalar_select %p436, %s24, 1
      %p438 = scmp.lt.s32.totalorder %s435, 15
      %s439 = scalar_select %p438, %s435, 15
      %s440 = smul.addr %s439, 3
      %s441 = smul.addr %s437, 48
      %s442 = sadd.s32 %s440, %s441
      %s443 = smul.addr %s442, 8
      %s444 = scalar_lea.vmem %s9, %s443
      %s445 = smul.u32 8, %s25
      %s446 = ssub.s32 18, %s445
      %p447 = scmp.lt.s32.totalorder %s446, 8
      %s448 = scalar_select %p447, %s446, 8
      %s449 = smul.u32 64, %s448
      %s450 = smul.u32 %s449, 3
      %p451 = scmp.lt.s32.totalorder %s24, 1
      %s452 = scalar_select %p451, %s24, 1
      %p453 = scmp.lt.s32.totalorder %s445, 17
      %s454 = scalar_select %p453, %s445, 17
      %s455 = smul.addr %s454, 3
      %s456 = smul.addr %s452, 54
      %s457 = sadd.s32 %s455, %s456
      %s458 = smul.addr %s457, 4
      %s459 = scalar_lea.vmem %s0, %s458
      %s460 = smul.u32 8, %s25
      %s461 = ssub.s32 18, %s460
      %p462 = scmp.lt.s32.totalorder %s461, 8
      %s463 = scalar_select %p462, %s461, 8
      %s464 = smul.u32 64, %s463
      %s465 = smul.u32 %s464, 3
      %s466 = sadd.s32 %s25, 1
      %s467 = smul.u32 %s466, 8
      %p468 = scmp.lt.s32.totalorder %s24, 1
      %s469 = scalar_select %p468, %s24, 1
      %p470 = scmp.lt.s32.totalorder %s467, 17
      %s471 = scalar_select %p470, %s467, 17
      %s472 = smul.addr %s471, 3
      %s473 = smul.addr %s469, 54
      %s474 = sadd.s32 %s472, %s473
      %s475 = smul.addr %s474, 4
      %s476 = scalar_lea.vmem %s1, %s475
      %s477 = sadd.s32 %s25, 1
      %s478 = smul.u32 %s477, 8
      %s479 = sadd.s32 %s25, 1
      %s480 = smul.u32 %s479, 8
      %s481 = sadd.s32 %s480, 1
      %p482 = scmp.lt.s32.totalorder %s24, 1
      %s483 = scalar_select %p482, %s24, 1
      %p484 = scmp.lt.s32.totalorder %s481, 17
      %s485 = scalar_select %p484, %s481, 17
      %s486 = smul.addr %s485, 3
      %s487 = smul.addr %s483, 54
      %s488 = sadd.s32 %s486, %s487
      %s489 = smul.addr %s488, 4
      %s490 = scalar_lea.vmem %s2, %s489
      %s491 = sadd.s32 %s25, 1
      %s492 = smul.u32 %s491, 8
      %s493 = sadd.s32 %s492, 1
      %s494 = smul.u32 8, %s25
      %p495 = scmp.lt.s32.totalorder %s24, 1
      %s496 = scalar_select %p495, %s24, 1
      %p497 = scmp.lt.s32.totalorder %s494, 15
      %s498 = scalar_select %p497, %s494, 15
      %s499 = smul.addr %s498, 3
      %s500 = smul.addr %s496, 48
      %s501 = sadd.s32 %s499, %s500
      %s502 = smul.addr %s501, 8
      %s503 = scalar_lea.vmem %s9, %s502
      %s504 = smul.u32 8, %s25
      %v506 = vld [vmem:[%s459] sm:$0xf]
      %v507 = vld [vmem:[%s459 + $0x4] sm:$0xf]
      %v508 = vld [vmem:[%s459 + $0x8] sm:$0xf]
      %v509 = vld [vmem:[%s459 + $0xc] sm:$0xf]
      %v510 = vld [vmem:[%s459 + $0x10] sm:$0xf]
      %v511 = vld [vmem:[%s459 + $0x14] sm:$0xf]
      %v512 = vld [vmem:[%s459 + $0x18] sm:$0xf]
      %v513 = vld [vmem:[%s459 + $0x1c] sm:$0xf]
      %v514 = vld [vmem:[%s459 + $0x20] sm:$0xf]
      %v515 = vld [vmem:[%s459 + $0x24] sm:$0xf]
      %v516 = vld [vmem:[%s459 + $0x28] sm:$0xf]
      %v517 = vld [vmem:[%s459 + $0x2c] sm:$0xf]
      %v518 = vld [vmem:[%s459 + $0x30] sm:$0xf]
      %v519 = vld [vmem:[%s459 + $0x34] sm:$0xf]
      %v520 = vld [vmem:[%s459 + $0x38] sm:$0xf]
      %v521 = vld [vmem:[%s459 + $0x3c] sm:$0xf]
      %v522 = vld [vmem:[%s459 + $0x40] sm:$0xf]
      %v523 = vld [vmem:[%s459 + $0x44] sm:$0xf]
      %v524 = vld [vmem:[%s459 + $0x48] sm:$0xf]
      %v525 = vld [vmem:[%s459 + $0x4c] sm:$0xf]
      %v526 = vld [vmem:[%s459 + $0x50] sm:$0xf]
      %v527 = vld [vmem:[%s459 + $0x54] sm:$0xf]
      %v528 = vld [vmem:[%s459 + $0x58] sm:$0xf]
      %v529 = vld [vmem:[%s459 + $0x5c] sm:$0xf]
      %v530 = vld [vmem:[%s476] sm:$0xf]
      %v531 = vld [vmem:[%s476 + $0x4] sm:$0xf]
      %v532 = vld [vmem:[%s476 + $0x8] sm:$0xf]
      %v533 = vld [vmem:[%s490] sm:$0xf]
      %v534 = vld [vmem:[%s490 + $0x4] sm:$0xf]
      %v535 = vld [vmem:[%s490 + $0x8] sm:$0xf]
      %s536 = smul.u32 %s25, 8
      %v537 = vld [vmem:[%s3] sm:$0xf]
      %v538 = vld [vmem:[%s3 + $0x4] sm:$0xf]
      %v539 = vld [vmem:[%s3 + $0x8] sm:$0xf]
      %v540 = vld [vmem:[%s3 + $0xc] sm:$0xf]
      %v541 = vld [vmem:[%s3 + $0x10] sm:$0xf]
      %v542 = vld [vmem:[%s3 + $0x14] sm:$0xf]
      %v543 = vld [vmem:[%s3 + $0x18] sm:$0xf]
      %v544 = vld [vmem:[%s3 + $0x1c] sm:$0xf]
      %v545 = vld [vmem:[%s3 + $0x20] sm:$0xf]
      %v546 = vld [vmem:[%s3 + $0x24] sm:$0xf]
      %v547 = vld [vmem:[%s3 + $0x28] sm:$0xf]
      %v548 = vld [vmem:[%s3 + $0x2c] sm:$0xf]
      %v549 = vld [vmem:[%s3 + $0x30] sm:$0xf]
      %v550 = vld [vmem:[%s3 + $0x34] sm:$0xf]
      %v551 = vld [vmem:[%s3 + $0x38] sm:$0xf]
      %v552 = vld [vmem:[%s3 + $0x3c] sm:$0xf]
      %v553 = vld [vmem:[%s6] sm:$0x1]
      %v555 = vlaneseq
      %v556 = vshrl.u32 %v555, 7
      %v557 = vsub.s32 0, %v556
      %v558 = vrot.slane %v553, %v557
      %v584 = vunpack.c.l.b16 %v506
      %v585 = vunpack.c.l.b16 %v507
      %v586 = vunpack.c.l.b16 %v508
      %v587 = vunpack.c.l.b16 %v509
      %v588 = vunpack.c.l.b16 %v510
      %v589 = vunpack.c.l.b16 %v511
      %v590 = vunpack.c.l.b16 %v512
      %v591 = vunpack.c.l.b16 %v513
      %v592 = vunpack.c.l.b16 %v514
      %v593 = vunpack.c.l.b16 %v515
      %v594 = vunpack.c.l.b16 %v516
      %v595 = vunpack.c.l.b16 %v517
      %v596 = vunpack.c.l.b16 %v518
      %v597 = vunpack.c.l.b16 %v519
      %v598 = vunpack.c.l.b16 %v520
      %v599 = vunpack.c.l.b16 %v521
      %v600 = vunpack.c.l.b16 %v522
      %v601 = vunpack.c.l.b16 %v523
      %v602 = vunpack.c.l.b16 %v524
      %v603 = vunpack.c.l.b16 %v525
      %v604 = vunpack.c.l.b16 %v526
      %v605 = vunpack.c.l.b16 %v527
      %v606 = vunpack.c.l.b16 %v528
      %v607 = vunpack.c.l.b16 %v529
      %v608 = vpack.c.b16 %v585, %v584
      %v609 = vpack.c.b16 %v587, %v586
      %v610 = vpack.c.b16 %v589, %v588
      %v611 = vpack.c.b16 %v591, %v590
      %v612 = vpack.c.b16 %v593, %v592
      %v613 = vpack.c.b16 %v595, %v594
      %v614 = vpack.c.b16 %v597, %v596
      %v615 = vpack.c.b16 %v599, %v598
      %v616 = vpack.c.b16 %v601, %v600
      %v617 = vpack.c.b16 %v603, %v602
      %v618 = vpack.c.b16 %v605, %v604
      %v619 = vpack.c.b16 %v607, %v606
      %v648 = vunpack.c.l.b16 %v537
      %v649 = vunpack.c.l.b16 %v538
      %v650 = vunpack.c.l.b16 %v539
      %v651 = vunpack.c.l.b16 %v540
      %v652 = vunpack.c.l.b16 %v541
      %v653 = vunpack.c.l.b16 %v542
      %v654 = vunpack.c.l.b16 %v543
      %v655 = vunpack.c.l.b16 %v544
      %v656 = vunpack.c.l.b16 %v545
      %v657 = vunpack.c.l.b16 %v546
      %v658 = vunpack.c.l.b16 %v547
      %v659 = vunpack.c.l.b16 %v548
      %v660 = vunpack.c.l.b16 %v549
      %v661 = vunpack.c.l.b16 %v550
      %v662 = vunpack.c.l.b16 %v551
      %v663 = vunpack.c.l.b16 %v552
      %v664 = vpack.c.b16 %v649, %v648
      %v665 = vpack.c.b16 %v651, %v650
      %v666 = vpack.c.b16 %v653, %v652
      %v667 = vpack.c.b16 %v655, %v654
      %v668 = vpack.c.b16 %v657, %v656
      %v669 = vpack.c.b16 %v659, %v658
      %v670 = vpack.c.b16 %v661, %v660
      %v671 = vpack.c.b16 %v663, %v662
      %680 = vmatprep.subr.bf16.mxu0 0
      %681 = vmatpush1.bf16.msra.mxu0 %v664
      %682 = vmatprep.subr.bf16.mxu0 0
      %683 = vmatpush1.bf16.msra.mxu0 %v665
      %684 = vmatprep.subr.bf16.mxu0 0
      %685 = vmatpush1.bf16.msra.mxu0 %v666
      %686 = vmatprep.subr.bf16.mxu0 0
      %687 = vmatpush1.bf16.msra.mxu0 %v667
      %688 = vmatprep.subr.bf16.mxu0 0
      %689 = vmatpush1.bf16.msra.mxu0 %v668
      %690 = vmatprep.subr.bf16.mxu0 0
      %691 = vmatpush1.bf16.msra.mxu0 %v669
      %692 = vmatprep.subr.bf16.mxu0 0
      %693 = vmatpush1.bf16.msra.mxu0 %v670
      %694 = vmatprep.subr.bf16.mxu0 0
      %695 = vmatpush1.bf16.msra.mxu0 %v671
      %696 = vmatprep.subr.bf16.mxu0 0
      %697 = vmatpush1.bf16.msra.mxu0 0
      %698 = vmatprep.subr.bf16.mxu0 0
      %699 = vmatpush1.bf16.msra.mxu0 0
      %700 = vmatprep.subr.bf16.mxu0 0
      %701 = vmatpush1.bf16.msra.mxu0 0
      %702 = vmatprep.subr.bf16.mxu0 0
      %703 = vmatpush1.bf16.msra.mxu0 0
      %704 = vmatprep.subr.bf16.mxu0 0
      %705 = vmatpush1.bf16.msra.mxu0 0
      %706 = vmatprep.subr.bf16.mxu0 0
      %707 = vmatpush1.bf16.msra.mxu0 0
      %708 = vmatprep.subr.bf16.mxu0 0
      %709 = vmatpush1.bf16.msra.mxu0 0
      %710 = vmatprep.subr.bf16.mxu0 0
      %711 = vmatpush1.bf16.msra.mxu0 0
      %712 = vmatprep.mubr.bf16.mxu0 0
      %713 = vmatmul.mubr.bf16.gmra.mrb[0].mxu0 %v608
      %v714 = vpop.f32.mrb[0].mxu0
      %v715 = vadd.f32 %v558, %v714
      %v716 = vpop.f32.mrb[0].mxu0
      %v717 = vpop.f32.mrb[0].mxu0
      %v718 = vadd.f32 %v558, %v717
      %v719 = vpop.f32.mrb[0].mxu0
      %720 = vmatprep.mubr.bf16.mxu0 0
      %721 = vmatmul.mubr.bf16.gmra.mrb[0].mxu0 %v609
      %v722 = vpop.f32.mrb[0].mxu0
      %v723 = vadd.f32 %v558, %v722
      %v724 = vpop.f32.mrb[0].mxu0
      %v725 = vpop.f32.mrb[0].mxu0
      %v726 = vadd.f32 %v558, %v725
      %v727 = vpop.f32.mrb[0].mxu0
      %728 = vmatprep.mubr.bf16.mxu0 0
      %729 = vmatmul.mubr.bf16.gmra.mrb[0].mxu0 %v610
      %v730 = vpop.f32.mrb[0].mxu0
      %v731 = vadd.f32 %v558, %v730
      %v732 = vpop.f32.mrb[0].mxu0
      %v733 = vpop.f32.mrb[0].mxu0
      %v734 = vadd.f32 %v558, %v733
      %v735 = vpop.f32.mrb[0].mxu0
      %736 = vmatprep.mubr.bf16.mxu0 0
      %737 = vmatmul.mubr.bf16.gmra.mrb[0].mxu0 %v611
      %v738 = vpop.f32.mrb[0].mxu0
      %v739 = vadd.f32 %v558, %v738
      %v740 = vpop.f32.mrb[0].mxu0
      %v741 = vpop.f32.mrb[0].mxu0
      %v742 = vadd.f32 %v558, %v741
      %v743 = vpop.f32.mrb[0].mxu0
      %744 = vmatprep.mubr.bf16.mxu0 0
      %745 = vmatmul.mubr.bf16.gmra.mrb[0].mxu0 %v612
      %v746 = vpop.f32.mrb[0].mxu0
      %v747 = vadd.f32 %v558, %v746
      %v748 = vpop.f32.mrb[0].mxu0
      %v749 = vpop.f32.mrb[0].mxu0
      %v750 = vadd.f32 %v558, %v749
      %v751 = vpop.f32.mrb[0].mxu0
      %752 = vmatprep.mubr.bf16.mxu0 0
      %753 = vmatmul.mubr.bf16.gmra.mrb[0].mxu0 %v613
      %v754 = vpop.f32.mrb[0].mxu0
      %v755 = vadd.f32 %v558, %v754
      %v756 = vpop.f32.mrb[0].mxu0
      %v757 = vpop.f32.mrb[0].mxu0
      %v758 = vadd.f32 %v558, %v757
      %v759 = vpop.f32.mrb[0].mxu0
      %760 = vmatprep.mubr.bf16.mxu0 0
      %761 = vmatmul.mubr.bf16.gmra.mrb[0].mxu0 %v614
      %v762 = vpop.f32.mrb[0].mxu0
      %v763 = vadd.f32 %v558, %v762
      %v764 = vpop.f32.mrb[0].mxu0
      %v765 = vpop.f32.mrb[0].mxu0
      %v766 = vadd.f32 %v558, %v765
      %v767 = vpop.f32.mrb[0].mxu0
      %768 = vmatprep.mubr.bf16.mxu0 0
      %769 = vmatmul.mubr.bf16.gmra.mrb[0].mxu0 %v615
      %v770 = vpop.f32.mrb[0].mxu0
      %v771 = vadd.f32 %v558, %v770
      %v772 = vpop.f32.mrb[0].mxu0
      %v773 = vpop.f32.mrb[0].mxu0
      %v774 = vadd.f32 %v558, %v773
      %v775 = vpop.f32.mrb[0].mxu0
      %776 = vmatprep.mubr.bf16.mxu0 0
      %777 = vmatmul.mubr.bf16.gmra.mrb[0].mxu0 %v616
      %v778 = vpop.f32.mrb[0].mxu0
      %v779 = vadd.f32 %v558, %v778
      %v780 = vpop.f32.mrb[0].mxu0
      %v781 = vpop.f32.mrb[0].mxu0
      %v782 = vadd.f32 %v558, %v781
      %v783 = vpop.f32.mrb[0].mxu0
      %784 = vmatprep.mubr.bf16.mxu0 0
      %785 = vmatmul.mubr.bf16.gmra.mrb[0].mxu0 %v617
      %v786 = vpop.f32.mrb[0].mxu0
      %v787 = vadd.f32 %v558, %v786
      %v788 = vpop.f32.mrb[0].mxu0
      %v789 = vpop.f32.mrb[0].mxu0
      %v790 = vadd.f32 %v558, %v789
      %v791 = vpop.f32.mrb[0].mxu0
      %792 = vmatprep.mubr.bf16.mxu0 0
      %793 = vmatmul.mubr.bf16.gmra.mrb[0].mxu0 %v618
      %v794 = vpop.f32.mrb[0].mxu0
      %v795 = vadd.f32 %v558, %v794
      %v796 = vpop.f32.mrb[0].mxu0
      %v797 = vpop.f32.mrb[0].mxu0
      %v798 = vadd.f32 %v558, %v797
      %v799 = vpop.f32.mrb[0].mxu0
      %800 = vmatprep.mubr.bf16.mxu0 0
      %801 = vmatmul.mubr.bf16.gmra.mrb[0].mxu0 %v619
      %v802 = vpop.f32.mrb[0].mxu0
      %v803 = vadd.f32 %v558, %v802
      %v804 = vpop.f32.mrb[0].mxu0
      %v805 = vpop.f32.mrb[0].mxu0
      %v806 = vadd.f32 %v558, %v805
      %v807 = vpop.f32.mrb[0].mxu0
      %808 = vdwg.mxu0
      %v809 = vmax.f32 %v715, 0.0
      %v810 = vmax.f32 %v718, 0.0
      %v811 = vmax.f32 %v723, 0.0
      %v812 = vmax.f32 %v726, 0.0
      %v813 = vmax.f32 %v731, 0.0
      %v814 = vmax.f32 %v734, 0.0
      %v815 = vmax.f32 %v739, 0.0
      %v816 = vmax.f32 %v742, 0.0
      %v817 = vmax.f32 %v747, 0.0
      %v818 = vmax.f32 %v750, 0.0
      %v819 = vmax.f32 %v755, 0.0
      %v820 = vmax.f32 %v758, 0.0
      %v821 = vmax.f32 %v763, 0.0
      %v822 = vmax.f32 %v766, 0.0
      %v823 = vmax.f32 %v771, 0.0
      %v824 = vmax.f32 %v774, 0.0
      %v825 = vmax.f32 %v779, 0.0
      %v826 = vmax.f32 %v782, 0.0
      %v827 = vmax.f32 %v787, 0.0
      %v828 = vmax.f32 %v790, 0.0
      %v829 = vmax.f32 %v795, 0.0
      %v830 = vmax.f32 %v798, 0.0
      %v831 = vmax.f32 %v803, 0.0
      %v832 = vmax.f32 %v806, 0.0
      %v833 = vlaneseq
      %v834 = vshrl.u32 %v833, 7
      %v835 = vadd.s32 %v834, 8
      %v836 = vadd.s32 %v834, 16
      %v837 = vstv %s536
      %v838 = vadd.s32 %v837, 1
      %v839 = vadd.s32 %v837, 2
      %v840 = vadd.s32 %v837, 3
      %v841 = vadd.s32 %v837, 4
      %v842 = vadd.s32 %v837, 5
      %v843 = vadd.s32 %v837, 6
      %v844 = vadd.s32 %v837, 7
      %vm845 = vcmp.ge.s32.totalorder %v834, 1
      %vm846 = vcmp.ge.s32.totalorder %v835, 1
      %vm847 = vcmp.ge.s32.totalorder %v836, 1
      %vm848 = vcmp.le.s32.totalorder %v834, 16
      %vm849 = vcmp.le.s32.totalorder %v835, 16
      %vm850 = vcmp.le.s32.totalorder %v836, 16
      %vm851 = vmand %vm845, %vm848
      %vm852 = vmand %vm846, %vm849
      %vm853 = vmand %vm847, %vm850
      %vm854 = vcmp.ge.s32.totalorder %v837, 1
      %vm855 = vcmp.ge.s32.totalorder %v838, 1
      %vm856 = vcmp.ge.s32.totalorder %v839, 1
      %vm857 = vcmp.ge.s32.totalorder %v840, 1
      %vm858 = vcmp.ge.s32.totalorder %v841, 1
      %vm859 = vcmp.ge.s32.totalorder %v842, 1
      %vm860 = vcmp.ge.s32.totalorder %v843, 1
      %vm861 = vcmp.ge.s32.totalorder %v844, 1
      %vm862 = vmand %vm851, %vm854
      %vm863 = vmand %vm852, %vm854
      %vm864 = vmand %vm853, %vm854
      %vm865 = vmand %vm851, %vm855
      %vm866 = vmand %vm852, %vm855
      %vm867 = vmand %vm853, %vm855
      %vm868 = vmand %vm851, %vm856
      %vm869 = vmand %vm852, %vm856
      %vm870 = vmand %vm853, %vm856
      %vm871 = vmand %vm851, %vm857
      %vm872 = vmand %vm852, %vm857
      %vm873 = vmand %vm853, %vm857
      %vm874 = vmand %vm851, %vm858
      %vm875 = vmand %vm852, %vm858
      %vm876 = vmand %vm853, %vm858
      %vm877 = vmand %vm851, %vm859
      %vm878 = vmand %vm852, %vm859
      %vm879 = vmand %vm853, %vm859
      %vm880 = vmand %vm851, %vm860
      %vm881 = vmand %vm852, %vm860
      %vm882 = vmand %vm853, %vm860
      %vm883 = vmand %vm851, %vm861
      %vm884 = vmand %vm852, %vm861
      %vm885 = vmand %vm853, %vm861
      %vm886 = vcmp.le.s32.totalorder %v837, 16
      %vm887 = vcmp.le.s32.totalorder %v838, 16
      %vm888 = vcmp.le.s32.totalorder %v839, 16
      %vm889 = vcmp.le.s32.totalorder %v840, 16
      %vm890 = vcmp.le.s32.totalorder %v841, 16
      %vm891 = vcmp.le.s32.totalorder %v842, 16
      %vm892 = vcmp.le.s32.totalorder %v843, 16
      %vm893 = vcmp.le.s32.totalorder %v844, 16
      %vm894 = vmand %vm862, %vm886
      %vm895 = vmand %vm863, %vm886
      %vm896 = vmand %vm864, %vm886
      %vm897 = vmand %vm865, %vm887
      %vm898 = vmand %vm866, %vm887
      %vm899 = vmand %vm867, %vm887
      %vm900 = vmand %vm868, %vm888
      %vm901 = vmand %vm869, %vm888
      %vm902 = vmand %vm870, %vm888
      %vm903 = vmand %vm871, %vm889
      %vm904 = vmand %vm872, %vm889
      %vm905 = vmand %vm873, %vm889
      %vm906 = vmand %vm874, %vm890
      %vm907 = vmand %vm875, %vm890
      %vm908 = vmand %vm876, %vm890
      %vm909 = vmand %vm877, %vm891
      %vm910 = vmand %vm878, %vm891
      %vm911 = vmand %vm879, %vm891
      %vm912 = vmand %vm880, %vm892
      %vm913 = vmand %vm881, %vm892
      %vm914 = vmand %vm882, %vm892
      %vm915 = vmand %vm883, %vm893
      %vm916 = vmand %vm884, %vm893
      %vm917 = vmand %vm885, %vm893
      %v918 = vsel %vm894, %v809, 0.0
      %v919 = vsel %vm895, %v810, 0.0
      %v920 = vsel %vm896, %v811, 0.0
      %v921 = vsel %vm897, %v812, 0.0
      %v922 = vsel %vm898, %v813, 0.0
      %v923 = vsel %vm899, %v814, 0.0
      %v924 = vsel %vm900, %v815, 0.0
      %v925 = vsel %vm901, %v816, 0.0
      %v926 = vsel %vm902, %v817, 0.0
      %v927 = vsel %vm903, %v818, 0.0
      %v928 = vsel %vm904, %v819, 0.0
      %v929 = vsel %vm905, %v820, 0.0
      %v930 = vsel %vm906, %v821, 0.0
      %v931 = vsel %vm907, %v822, 0.0
      %v932 = vsel %vm908, %v823, 0.0
      %v933 = vsel %vm909, %v824, 0.0
      %v934 = vsel %vm910, %v825, 0.0
      %v935 = vsel %vm911, %v826, 0.0
      %v936 = vsel %vm912, %v827, 0.0
      %v937 = vsel %vm913, %v828, 0.0
      %v938 = vsel %vm914, %v829, 0.0
      %v939 = vsel %vm915, %v830, 0.0
      %v940 = vsel %vm916, %v831, 0.0
      %v941 = vsel %vm917, %v832, 0.0
      %s942 = sadd.s32 %s25, 1
      %s943 = smul.u32 %s942, 8
      %v950 = vunpack.c.l.b16 %v530
      %v951 = vunpack.c.l.b16 %v531
      %v952 = vunpack.c.l.b16 %v532
      %v953 = vunpack.c.l.b16 %v533
      %v954 = vunpack.c.l.b16 %v534
      %v955 = vunpack.c.l.b16 %v535
      %v956 = vpack.c.b16 %v951, %v950
      %v957 = vpack.c.b16 %v953, %v952
      %v958 = vpack.c.b16 %v955, %v954
      %962 = vmatprep.subr.bf16.mxu0 0
      %963 = vmatpush1.bf16.msra.mxu0 %v664
      %964 = vmatprep.subr.bf16.mxu0 0
      %965 = vmatpush1.bf16.msra.mxu0 %v665
      %966 = vmatprep.subr.bf16.mxu0 0
      %967 = vmatpush1.bf16.msra.mxu0 %v666
      %968 = vmatprep.subr.bf16.mxu0 0
      %969 = vmatpush1.bf16.msra.mxu0 %v667
      %970 = vmatprep.subr.bf16.mxu0 0
      %971 = vmatpush1.bf16.msra.mxu0 %v668
      %972 = vmatprep.subr.bf16.mxu0 0
      %973 = vmatpush1.bf16.msra.mxu0 %v669
      %974 = vmatprep.subr.bf16.mxu0 0
      %975 = vmatpush1.bf16.msra.mxu0 %v670
      %976 = vmatprep.subr.bf16.mxu0 0
      %977 = vmatpush1.bf16.msra.mxu0 %v671
      %978 = vmatprep.subr.bf16.mxu0 0
      %979 = vmatpush1.bf16.msra.mxu0 0
      %980 = vmatprep.subr.bf16.mxu0 0
      %981 = vmatpush1.bf16.msra.mxu0 0
      %982 = vmatprep.subr.bf16.mxu0 0
      %983 = vmatpush1.bf16.msra.mxu0 0
      %984 = vmatprep.subr.bf16.mxu0 0
      %985 = vmatpush1.bf16.msra.mxu0 0
      %986 = vmatprep.subr.bf16.mxu0 0
      %987 = vmatpush1.bf16.msra.mxu0 0
      %988 = vmatprep.subr.bf16.mxu0 0
      %989 = vmatpush1.bf16.msra.mxu0 0
      %990 = vmatprep.subr.bf16.mxu0 0
      %991 = vmatpush1.bf16.msra.mxu0 0
      %992 = vmatprep.subr.bf16.mxu0 0
      %993 = vmatpush1.bf16.msra.mxu0 0
      %994 = vmatprep.mubr.bf16.mxu0 0
      %995 = vmatmul.mubr.bf16.gmra.mrb[0].mxu0 %v956
      %v996 = vpop.f32.mrb[0].mxu0
      %v997 = vadd.f32 %v558, %v996
      %v998 = vpop.f32.mrb[0].mxu0
      %v999 = vpop.f32.mrb[0].mxu0
      %v1000 = vadd.f32 %v558, %v999
      %v1001 = vpop.f32.mrb[0].mxu0
      %1002 = vmatprep.mubr.bf16.mxu0 0
      %1003 = vmatmul.mubr.bf16.gmra.mrb[0].mxu0 %v957
      %v1004 = vpop.f32.mrb[0].mxu0
      %v1005 = vadd.f32 %v558, %v1004
      %v1006 = vpop.f32.mrb[0].mxu0
      %v1007 = vpop.f32.mrb[0].mxu0
      %v1008 = vadd.f32 %v558, %v1007
      %v1009 = vpop.f32.mrb[0].mxu0
      %1010 = vmatprep.mubr.bf16.mxu0 0
      %1011 = vmatmul.mubr.bf16.gmra.mrb[0].mxu0 %v958
      %v1012 = vpop.f32.mrb[0].mxu0
      %v1013 = vadd.f32 %v558, %v1012
      %v1014 = vpop.f32.mrb[0].mxu0
      %v1015 = vpop.f32.mrb[0].mxu0
      %v1016 = vadd.f32 %v558, %v1015
      %v1017 = vpop.f32.mrb[0].mxu0
      %1018 = vdwg.mxu0
      %v1019 = vmax.f32 %v997, 0.0
      %v1020 = vmax.f32 %v1000, 0.0
      %v1021 = vmax.f32 %v1005, 0.0
      %v1022 = vmax.f32 %v1008, 0.0
      %v1023 = vmax.f32 %v1013, 0.0
      %v1024 = vmax.f32 %v1016, 0.0
      %v1025 = vstv %s943
      %v1026 = vadd.s32 %v1025, 1
      %vm1027 = vcmp.ge.s32.totalorder %v1025, 1
      %vm1028 = vcmp.ge.s32.totalorder %v1026, 1
      %vm1029 = vmand %vm851, %vm1027
      %vm1030 = vmand %vm852, %vm1027
      %vm1031 = vmand %vm853, %vm1027
      %vm1032 = vmand %vm851, %vm1028
      %vm1033 = vmand %vm852, %vm1028
      %vm1034 = vmand %vm853, %vm1028
      %vm1035 = vcmp.le.s32.totalorder %v1025, 16
      %vm1036 = vcmp.le.s32.totalorder %v1026, 16
      %vm1037 = vmand %vm1029, %vm1035
      %vm1038 = vmand %vm1030, %vm1035
      %vm1039 = vmand %vm1031, %vm1035
      %vm1040 = vmand %vm1032, %vm1036
      %vm1041 = vmand %vm1033, %vm1036
      %vm1042 = vmand %vm1034, %vm1036
      %v1043 = vsel %vm1037, %v1019, 0.0
      %v1044 = vsel %vm1038, %v1020, 0.0
      %v1045 = vsel %vm1039, %v1021, 0.0
      %v1046 = vsel %vm1040, %v1022, 0.0
      %v1047 = vsel %vm1041, %v1023, 0.0
      %v1048 = vsel %vm1042, %v1024, 0.0
      %v1049 = vrot.slane %v918, 7
      %v1050 = vrot.slane %v921, 7
      %v1051 = vrot.slane %v924, 7
      %v1052 = vrot.slane %v927, 7
      %v1053 = vrot.slane %v930, 7
      %v1054 = vrot.slane %v933, 7
      %v1055 = vrot.slane %v936, 7
      %v1056 = vrot.slane %v939, 7
      %v1057 = vrot.slane %v1043, 7
      %v1058 = vrot.slane %v1046, 7
      %v1059 = vrot.slane %v919, 7
      %v1060 = vrot.slane %v922, 7
      %v1061 = vrot.slane %v925, 7
      %v1062 = vrot.slane %v928, 7
      %v1063 = vrot.slane %v931, 7
      %v1064 = vrot.slane %v934, 7
      %v1065 = vrot.slane %v937, 7
      %v1066 = vrot.slane %v940, 7
      %v1067 = vrot.slane %v1044, 7
      %v1068 = vrot.slane %v1047, 7
      %v1069 = vrot.slane %v920, 7
      %v1070 = vrot.slane %v923, 7
      %v1071 = vrot.slane %v926, 7
      %v1072 = vrot.slane %v929, 7
      %v1073 = vrot.slane %v932, 7
      %v1074 = vrot.slane %v935, 7
      %v1075 = vrot.slane %v938, 7
      %v1076 = vrot.slane %v941, 7
      %v1077 = vrot.slane %v1045, 7
      %v1078 = vrot.slane %v1048, 7
      %vm1079 = vcmp.lt.s32.totalorder %v834, 1
      %v1080 = vsel %vm1079, %v1059, %v1069
      %v1081 = vsel %vm1079, %v1060, %v1070
      %v1082 = vsel %vm1079, %v1061, %v1071
      %v1083 = vsel %vm1079, %v1062, %v1072
      %v1084 = vsel %vm1079, %v1063, %v1073
      %v1085 = vsel %vm1079, %v1064, %v1074
      %v1086 = vsel %vm1079, %v1065, %v1075
      %v1087 = vsel %vm1079, %v1066, %v1076
      %v1088 = vsel %vm1079, %v1067, %v1077
      %v1089 = vsel %vm1079, %v1068, %v1078
      %v1090 = vsel %vm1079, %v1049, %v1059
      %v1091 = vsel %vm1079, %v1050, %v1060
      %v1092 = vsel %vm1079, %v1051, %v1061
      %v1093 = vsel %vm1079, %v1052, %v1062
      %v1094 = vsel %vm1079, %v1053, %v1063
      %v1095 = vsel %vm1079, %v1054, %v1064
      %v1096 = vsel %vm1079, %v1055, %v1065
      %v1097 = vsel %vm1079, %v1056, %v1066
      %v1098 = vsel %vm1079, %v1057, %v1067
      %v1099 = vsel %vm1079, %v1058, %v1068
      %v1100 = vsel %vm1079, %v1069, %v1049
      %v1101 = vsel %vm1079, %v1070, %v1050
      %v1102 = vsel %vm1079, %v1071, %v1051
      %v1103 = vsel %vm1079, %v1072, %v1052
      %v1104 = vsel %vm1079, %v1073, %v1053
      %v1105 = vsel %vm1079, %v1074, %v1054
      %v1106 = vsel %vm1079, %v1075, %v1055
      %v1107 = vsel %vm1079, %v1076, %v1056
      %v1108 = vsel %vm1079, %v1077, %v1057
      %v1109 = vsel %vm1079, %v1078, %v1058
      %v1110 = vrot.slane %v918, 1
      %v1111 = vrot.slane %v921, 1
      %v1112 = vrot.slane %v924, 1
      %v1113 = vrot.slane %v927, 1
      %v1114 = vrot.slane %v930, 1
      %v1115 = vrot.slane %v933, 1
      %v1116 = vrot.slane %v936, 1
      %v1117 = vrot.slane %v939, 1
      %v1118 = vrot.slane %v1043, 1
      %v1119 = vrot.slane %v1046, 1
      %v1120 = vrot.slane %v919, 1
      %v1121 = vrot.slane %v922, 1
      %v1122 = vrot.slane %v925, 1
      %v1123 = vrot.slane %v928, 1
      %v1124 = vrot.slane %v931, 1
      %v1125 = vrot.slane %v934, 1
      %v1126 = vrot.slane %v937, 1
      %v1127 = vrot.slane %v940, 1
      %v1128 = vrot.slane %v1044, 1
      %v1129 = vrot.slane %v1047, 1
      %v1130 = vrot.slane %v920, 1
      %v1131 = vrot.slane %v923, 1
      %v1132 = vrot.slane %v926, 1
      %v1133 = vrot.slane %v929, 1
      %v1134 = vrot.slane %v932, 1
      %v1135 = vrot.slane %v935, 1
      %v1136 = vrot.slane %v938, 1
      %v1137 = vrot.slane %v941, 1
      %v1138 = vrot.slane %v1045, 1
      %v1139 = vrot.slane %v1048, 1
      %vm1140 = vcmp.lt.s32.totalorder %v834, 7
      %v1141 = vsel %vm1140, %v1120, %v1130
      %v1142 = vsel %vm1140, %v1121, %v1131
      %v1143 = vsel %vm1140, %v1122, %v1132
      %v1144 = vsel %vm1140, %v1123, %v1133
      %v1145 = vsel %vm1140, %v1124, %v1134
      %v1146 = vsel %vm1140, %v1125, %v1135
      %v1147 = vsel %vm1140, %v1126, %v1136
      %v1148 = vsel %vm1140, %v1127, %v1137
      %v1149 = vsel %vm1140, %v1128, %v1138
      %v1150 = vsel %vm1140, %v1129, %v1139
      %v1151 = vsel %vm1140, %v1110, %v1120
      %v1152 = vsel %vm1140, %v1111, %v1121
      %v1153 = vsel %vm1140, %v1112, %v1122
      %v1154 = vsel %vm1140, %v1113, %v1123
      %v1155 = vsel %vm1140, %v1114, %v1124
      %v1156 = vsel %vm1140, %v1115, %v1125
      %v1157 = vsel %vm1140, %v1116, %v1126
      %v1158 = vsel %vm1140, %v1117, %v1127
      %v1159 = vsel %vm1140, %v1118, %v1128
      %v1160 = vsel %vm1140, %v1119, %v1129
      %v1161 = vsel %vm1140, %v1130, %v1110
      %v1162 = vsel %vm1140, %v1131, %v1111
      %v1163 = vsel %vm1140, %v1132, %v1112
      %v1164 = vsel %vm1140, %v1133, %v1113
      %v1165 = vsel %vm1140, %v1134, %v1114
      %v1166 = vsel %vm1140, %v1135, %v1115
      %v1167 = vsel %vm1140, %v1136, %v1116
      %v1168 = vsel %vm1140, %v1137, %v1117
      %v1169 = vsel %vm1140, %v1138, %v1118
      %v1170 = vsel %vm1140, %v1139, %v1119
      %v1171 = vpack.c.bf16 %v1090, %v1100
      %v1172 = vpack.c.bf16 %v919, %v918
      %v1173 = vpack.c.bf16 %v1141, %v1151
      %v1174 = vpack.c.bf16 %v1080, %v1080
      %v1175 = vpack.c.bf16 %v920, %v920
      %v1176 = vpack.c.bf16 %v1161, %v1161
      %v1177 = vpack.c.bf16 %v1091, %v1101
      %v1178 = vpack.c.bf16 %v922, %v921
      %v1179 = vpack.c.bf16 %v1142, %v1152
      %v1180 = vpack.c.bf16 %v1081, %v1081
      %v1181 = vpack.c.bf16 %v923, %v923
      %v1182 = vpack.c.bf16 %v1162, %v1162
      %v1183 = vpack.c.bf16 %v1092, %v1102
      %v1184 = vpack.c.bf16 %v925, %v924
      %v1185 = vpack.c.bf16 %v1143, %v1153
      %v1186 = vpack.c.bf16 %v1082, %v1082
      %v1187 = vpack.c.bf16 %v926, %v926
      %v1188 = vpack.c.bf16 %v1163, %v1163
      %v1189 = vpack.c.bf16 %v1093, %v1103
      %v1190 = vpack.c.bf16 %v928, %v927
      %v1191 = vpack.c.bf16 %v1144, %v1154
      %v1192 = vpack.c.bf16 %v1083, %v1083
      %v1193 = vpack.c.bf16 %v929, %v929
      %v1194 = vpack.c.bf16 %v1164, %v1164
      %v1195 = vpack.c.bf16 %v1094, %v1104
      %v1196 = vpack.c.bf16 %v931, %v930
      %v1197 = vpack.c.bf16 %v1145, %v1155
      %v1198 = vpack.c.bf16 %v1084, %v1084
      %v1199 = vpack.c.bf16 %v932, %v932
      %v1200 = vpack.c.bf16 %v1165, %v1165
      %v1201 = vpack.c.bf16 %v1095, %v1105
      %v1202 = vpack.c.bf16 %v934, %v933
      %v1203 = vpack.c.bf16 %v1146, %v1156
      %v1204 = vpack.c.bf16 %v1085, %v1085
      %v1205 = vpack.c.bf16 %v935, %v935
      %v1206 = vpack.c.bf16 %v1166, %v1166
      %v1207 = vpack.c.bf16 %v1096, %v1106
      %v1208 = vpack.c.bf16 %v937, %v936
      %v1209 = vpack.c.bf16 %v1147, %v1157
      %v1210 = vpack.c.bf16 %v1086, %v1086
      %v1211 = vpack.c.bf16 %v938, %v938
      %v1212 = vpack.c.bf16 %v1167, %v1167
      %v1213 = vpack.c.bf16 %v1097, %v1107
      %v1214 = vpack.c.bf16 %v940, %v939
      %v1215 = vpack.c.bf16 %v1148, %v1158
      %v1216 = vpack.c.bf16 %v1087, %v1087
      %v1217 = vpack.c.bf16 %v941, %v941
      %v1218 = vpack.c.bf16 %v1168, %v1168
      %v1219 = vpack.c.bf16 %v1098, %v1108
      %v1220 = vpack.c.bf16 %v1044, %v1043
      %v1221 = vpack.c.bf16 %v1149, %v1159
      %v1222 = vpack.c.bf16 %v1088, %v1088
      %v1223 = vpack.c.bf16 %v1045, %v1045
      %v1224 = vpack.c.bf16 %v1169, %v1169
      %v1225 = vpack.c.bf16 %v1099, %v1109
      %v1226 = vpack.c.bf16 %v1047, %v1046
      %v1227 = vpack.c.bf16 %v1150, %v1160
      %v1228 = vpack.c.bf16 %v1089, %v1089
      %v1229 = vpack.c.bf16 %v1048, %v1048
      %v1230 = vpack.c.bf16 %v1170, %v1170
      %v1279 = vunpack.c.l.b16 %v1171
      %v1280 = vunpack.c.l.b16 %v1172
      %v1281 = vunpack.c.l.b16 %v1173
      %v1282 = vunpack.c.h.b16 %v1171
      %v1283 = vunpack.c.h.b16 %v1172
      %v1284 = vunpack.c.h.b16 %v1173
      %v1285 = vunpack.c.l.b16 %v1174
      %v1286 = vunpack.c.l.b16 %v1175
      %v1287 = vunpack.c.l.b16 %v1176
      %v1288 = vunpack.c.l.b16 %v1177
      %v1289 = vunpack.c.l.b16 %v1178
      %v1290 = vunpack.c.l.b16 %v1179
      %v1291 = vunpack.c.h.b16 %v1177
      %v1292 = vunpack.c.h.b16 %v1178
      %v1293 = vunpack.c.h.b16 %v1179
      %v1294 = vunpack.c.l.b16 %v1180
      %v1295 = vunpack.c.l.b16 %v1181
      %v1296 = vunpack.c.l.b16 %v1182
      %v1297 = vunpack.c.l.b16 %v1183
      %v1298 = vunpack.c.l.b16 %v1184
      %v1299 = vunpack.c.l.b16 %v1185
      %v1300 = vunpack.c.h.b16 %v1183
      %v1301 = vunpack.c.h.b16 %v1184
      %v1302 = vunpack.c.h.b16 %v1185
      %v1303 = vunpack.c.l.b16 %v1186
      %v1304 = vunpack.c.l.b16 %v1187
      %v1305 = vunpack.c.l.b16 %v1188
      %v1306 = vunpack.c.l.b16 %v1189
      %v1307 = vunpack.c.l.b16 %v1190
      %v1308 = vunpack.c.l.b16 %v1191
      %v1309 = vunpack.c.h.b16 %v1189
      %v1310 = vunpack.c.h.b16 %v1190
      %v1311 = vunpack.c.h.b16 %v1191
      %v1312 = vunpack.c.l.b16 %v1192
      %v1313 = vunpack.c.l.b16 %v1193
      %v1314 = vunpack.c.l.b16 %v1194
      %v1315 = vunpack.c.l.b16 %v1195
      %v1316 = vunpack.c.l.b16 %v1196
      %v1317 = vunpack.c.l.b16 %v1197
      %v1318 = vunpack.c.h.b16 %v1195
      %v1319 = vunpack.c.h.b16 %v1196
      %v1320 = vunpack.c.h.b16 %v1197
      %v1321 = vunpack.c.l.b16 %v1198
      %v1322 = vunpack.c.l.b16 %v1199
      %v1323 = vunpack.c.l.b16 %v1200
      %v1324 = vunpack.c.l.b16 %v1201
      %v1325 = vunpack.c.l.b16 %v1202
      %v1326 = vunpack.c.l.b16 %v1203
      %v1327 = vunpack.c.h.b16 %v1201
      %v1328 = vunpack.c.h.b16 %v1202
      %v1329 = vunpack.c.h.b16 %v1203
      %v1330 = vunpack.c.l.b16 %v1204
      %v1331 = vunpack.c.l.b16 %v1205
      %v1332 = vunpack.c.l.b16 %v1206
      %v1333 = vunpack.c.l.b16 %v1207
      %v1334 = vunpack.c.l.b16 %v1208
      %v1335 = vunpack.c.l.b16 %v1209
      %v1336 = vunpack.c.h.b16 %v1207
      %v1337 = vunpack.c.h.b16 %v1208
      %v1338 = vunpack.c.h.b16 %v1209
      %v1339 = vunpack.c.l.b16 %v1210
      %v1340 = vunpack.c.l.b16 %v1211
      %v1341 = vunpack.c.l.b16 %v1212
      %v1342 = vunpack.c.l.b16 %v1213
      %v1343 = vunpack.c.l.b16 %v1214
      %v1344 = vunpack.c.l.b16 %v1215
      %v1345 = vunpack.c.h.b16 %v1213
      %v1346 = vunpack.c.h.b16 %v1214
      %v1347 = vunpack.c.h.b16 %v1215
      %v1348 = vunpack.c.l.b16 %v1216
      %v1349 = vunpack.c.l.b16 %v1217
      %v1350 = vunpack.c.l.b16 %v1218
      %v1351 = vld [vmem:[%s4] sm:$0xf]
      %v1352 = vld [vmem:[%s4 + $0x4] sm:$0xf]
      %v1353 = vld [vmem:[%s4 + $0x8] sm:$0xf]
      %v1354 = vld [vmem:[%s4 + $0xc] sm:$0xf]
      %v1355 = vld [vmem:[%s4 + $0x10] sm:$0xf]
      %v1356 = vld [vmem:[%s4 + $0x14] sm:$0xf]
      %v1357 = vld [vmem:[%s4 + $0x18] sm:$0xf]
      %v1358 = vld [vmem:[%s4 + $0x1c] sm:$0xf]
      %v1359 = vld [vmem:[%s4 + $0x20] sm:$0xf]
      %v1360 = vld [vmem:[%s4 + $0x24] sm:$0xf]
      %v1361 = vld [vmem:[%s4 + $0x28] sm:$0xf]
      %v1362 = vld [vmem:[%s4 + $0x2c] sm:$0xf]
      %v1363 = vld [vmem:[%s4 + $0x30] sm:$0xf]
      %v1364 = vld [vmem:[%s4 + $0x34] sm:$0xf]
      %v1365 = vld [vmem:[%s4 + $0x38] sm:$0xf]
      %v1366 = vld [vmem:[%s4 + $0x3c] sm:$0xf]
      %v1367 = vld [vmem:[%s4 + $0x40] sm:$0xf]
      %v1368 = vld [vmem:[%s4 + $0x44] sm:$0xf]
      %v1369 = vld [vmem:[%s4 + $0x48] sm:$0xf]
      %v1370 = vld [vmem:[%s4 + $0x4c] sm:$0xf]
      %v1371 = vld [vmem:[%s4 + $0x50] sm:$0xf]
      %v1372 = vld [vmem:[%s4 + $0x54] sm:$0xf]
      %v1373 = vld [vmem:[%s4 + $0x58] sm:$0xf]
      %v1374 = vld [vmem:[%s4 + $0x5c] sm:$0xf]
      %v1375 = vld [vmem:[%s4 + $0x60] sm:$0xf]
      %v1376 = vld [vmem:[%s4 + $0x64] sm:$0xf]
      %v1377 = vld [vmem:[%s4 + $0x68] sm:$0xf]
      %v1378 = vld [vmem:[%s4 + $0x6c] sm:$0xf]
      %v1379 = vld [vmem:[%s4 + $0x70] sm:$0xf]
      %v1380 = vld [vmem:[%s4 + $0x74] sm:$0xf]
      %v1381 = vld [vmem:[%s4 + $0x78] sm:$0xf]
      %v1382 = vld [vmem:[%s4 + $0x7c] sm:$0xf]
      %v1383 = vld [vmem:[%s4 + $0x80] sm:$0xf]
      %v1384 = vld [vmem:[%s4 + $0x84] sm:$0xf]
      %v1385 = vld [vmem:[%s4 + $0x88] sm:$0xf]
      %v1386 = vld [vmem:[%s4 + $0x8c] sm:$0xf]
      %v1387 = vld [vmem:[%s4 + $0x90] sm:$0xf]
      %v1388 = vld [vmem:[%s4 + $0x94] sm:$0xf]
      %v1389 = vld [vmem:[%s4 + $0x98] sm:$0xf]
      %v1390 = vld [vmem:[%s4 + $0x9c] sm:$0xf]
      %v1391 = vld [vmem:[%s4 + $0xa0] sm:$0xf]
      %v1392 = vld [vmem:[%s4 + $0xa4] sm:$0xf]
      %v1393 = vld [vmem:[%s4 + $0xa8] sm:$0xf]
      %v1394 = vld [vmem:[%s4 + $0xac] sm:$0xf]
      %v1395 = vld [vmem:[%s4 + $0xb0] sm:$0xf]
      %v1396 = vld [vmem:[%s4 + $0xb4] sm:$0xf]
      %v1397 = vld [vmem:[%s4 + $0xb8] sm:$0xf]
      %v1398 = vld [vmem:[%s4 + $0xbc] sm:$0xf]
      %v1405 = vunpack.c.l.b16 %v1219
      %v1406 = vunpack.c.l.b16 %v1220
      %v1407 = vunpack.c.l.b16 %v1221
      %v1408 = vunpack.c.h.b16 %v1219
      %v1409 = vunpack.c.h.b16 %v1220
      %v1410 = vunpack.c.h.b16 %v1221
      %v1411 = vunpack.c.l.b16 %v1222
      %v1412 = vunpack.c.l.b16 %v1223
      %v1413 = vunpack.c.l.b16 %v1224
      %s1414 = scalar_lea.vmem %s4, 192
      %v1415 = vld [vmem:[%s1414] sm:$0xf]
      %v1416 = vld [vmem:[%s1414 + $0x4] sm:$0xf]
      %v1417 = vld [vmem:[%s1414 + $0x8] sm:$0xf]
      %v1418 = vld [vmem:[%s1414 + $0xc] sm:$0xf]
      %v1419 = vld [vmem:[%s1414 + $0x10] sm:$0xf]
      %v1420 = vld [vmem:[%s1414 + $0x14] sm:$0xf]
      %v1421 = vld [vmem:[%s1414 + $0x18] sm:$0xf]
      %v1422 = vld [vmem:[%s1414 + $0x1c] sm:$0xf]
      %v1423 = vld [vmem:[%s1414 + $0x20] sm:$0xf]
      %v1424 = vld [vmem:[%s1414 + $0x24] sm:$0xf]
      %v1425 = vld [vmem:[%s1414 + $0x28] sm:$0xf]
      %v1426 = vld [vmem:[%s1414 + $0x2c] sm:$0xf]
      %v1427 = vld [vmem:[%s1414 + $0x30] sm:$0xf]
      %v1428 = vld [vmem:[%s1414 + $0x34] sm:$0xf]
      %v1429 = vld [vmem:[%s1414 + $0x38] sm:$0xf]
      %v1430 = vld [vmem:[%s1414 + $0x3c] sm:$0xf]
      %v1431 = vld [vmem:[%s1414 + $0x40] sm:$0xf]
      %v1432 = vld [vmem:[%s1414 + $0x44] sm:$0xf]
      %v1433 = vld [vmem:[%s1414 + $0x48] sm:$0xf]
      %v1434 = vld [vmem:[%s1414 + $0x4c] sm:$0xf]
      %v1435 = vld [vmem:[%s1414 + $0x50] sm:$0xf]
      %v1436 = vld [vmem:[%s1414 + $0x54] sm:$0xf]
      %v1437 = vld [vmem:[%s1414 + $0x58] sm:$0xf]
      %v1438 = vld [vmem:[%s1414 + $0x5c] sm:$0xf]
      %v1439 = vld [vmem:[%s1414 + $0x60] sm:$0xf]
      %v1440 = vld [vmem:[%s1414 + $0x64] sm:$0xf]
      %v1441 = vld [vmem:[%s1414 + $0x68] sm:$0xf]
      %v1442 = vld [vmem:[%s1414 + $0x6c] sm:$0xf]
      %v1443 = vld [vmem:[%s1414 + $0x70] sm:$0xf]
      %v1444 = vld [vmem:[%s1414 + $0x74] sm:$0xf]
      %v1445 = vld [vmem:[%s1414 + $0x78] sm:$0xf]
      %v1446 = vld [vmem:[%s1414 + $0x7c] sm:$0xf]
      %v1447 = vld [vmem:[%s1414 + $0x80] sm:$0xf]
      %v1448 = vld [vmem:[%s1414 + $0x84] sm:$0xf]
      %v1449 = vld [vmem:[%s1414 + $0x88] sm:$0xf]
      %v1450 = vld [vmem:[%s1414 + $0x8c] sm:$0xf]
      %v1451 = vld [vmem:[%s1414 + $0x90] sm:$0xf]
      %v1452 = vld [vmem:[%s1414 + $0x94] sm:$0xf]
      %v1453 = vld [vmem:[%s1414 + $0x98] sm:$0xf]
      %v1454 = vld [vmem:[%s1414 + $0x9c] sm:$0xf]
      %v1455 = vld [vmem:[%s1414 + $0xa0] sm:$0xf]
      %v1456 = vld [vmem:[%s1414 + $0xa4] sm:$0xf]
      %v1457 = vld [vmem:[%s1414 + $0xa8] sm:$0xf]
      %v1458 = vld [vmem:[%s1414 + $0xac] sm:$0xf]
      %v1459 = vld [vmem:[%s1414 + $0xb0] sm:$0xf]
      %v1460 = vld [vmem:[%s1414 + $0xb4] sm:$0xf]
      %v1461 = vld [vmem:[%s1414 + $0xb8] sm:$0xf]
      %v1462 = vld [vmem:[%s1414 + $0xbc] sm:$0xf]
      %v1463 = vpack.c.b16 %v1291, %v1288
      %v1464 = vpack.c.b16 %v1292, %v1289
      %v1465 = vpack.c.b16 %v1293, %v1290
      %v1466 = vpack.c.b16 %v1297, %v1294
      %v1467 = vpack.c.b16 %v1298, %v1295
      %v1468 = vpack.c.b16 %v1299, %v1296
      %v1469 = vpack.c.b16 %v1303, %v1300
      %v1470 = vpack.c.b16 %v1304, %v1301
      %v1471 = vpack.c.b16 %v1305, %v1302
      %v1472 = vpack.c.b16 %v1309, %v1306
      %v1473 = vpack.c.b16 %v1310, %v1307
      %v1474 = vpack.c.b16 %v1311, %v1308
      %v1475 = vpack.c.b16 %v1315, %v1312
      %v1476 = vpack.c.b16 %v1316, %v1313
      %v1477 = vpack.c.b16 %v1317, %v1314
      %v1478 = vpack.c.b16 %v1321, %v1318
      %v1479 = vpack.c.b16 %v1322, %v1319
      %v1480 = vpack.c.b16 %v1323, %v1320
      %v1481 = vpack.c.b16 %v1327, %v1324
      %v1482 = vpack.c.b16 %v1328, %v1325
      %v1483 = vpack.c.b16 %v1329, %v1326
      %v1484 = vpack.c.b16 %v1333, %v1330
      %v1485 = vpack.c.b16 %v1334, %v1331
      %v1486 = vpack.c.b16 %v1335, %v1332
      %v1487 = vpack.c.b16 %v1339, %v1336
      %v1488 = vpack.c.b16 %v1340, %v1337
      %v1489 = vpack.c.b16 %v1341, %v1338
      %v1490 = vpack.c.b16 %v1345, %v1342
      %v1491 = vpack.c.b16 %v1346, %v1343
      %v1492 = vpack.c.b16 %v1347, %v1344
      %v1493 = vpack.c.b16 %v1405, %v1348
      %v1494 = vpack.c.b16 %v1406, %v1349
      %v1495 = vpack.c.b16 %v1407, %v1350
      %v1496 = vpack.c.b16 %v1411, %v1408
      %v1497 = vpack.c.b16 %v1412, %v1409
      %v1498 = vpack.c.b16 %v1413, %v1410
      %v1583 = vunpack.c.l.b16 %v1415
      %v1584 = vunpack.c.l.b16 %v1416
      %v1585 = vunpack.c.l.b16 %v1417
      %v1586 = vunpack.c.l.b16 %v1418
      %v1587 = vunpack.c.l.b16 %v1419
      %v1588 = vunpack.c.l.b16 %v1420
      %v1589 = vunpack.c.l.b16 %v1421
      %v1590 = vunpack.c.l.b16 %v1422
      %v1591 = vunpack.c.l.b16 %v1423
      %v1592 = vunpack.c.l.b16 %v1424
      %v1593 = vunpack.c.l.b16 %v1425
      %v1594 = vunpack.c.l.b16 %v1426
      %v1595 = vunpack.c.l.b16 %v1427
      %v1596 = vunpack.c.l.b16 %v1428
      %v1597 = vunpack.c.l.b16 %v1429
      %v1598 = vunpack.c.l.b16 %v1430
      %v1599 = vunpack.c.l.b16 %v1431
      %v1600 = vunpack.c.l.b16 %v1432
      %v1601 = vunpack.c.l.b16 %v1433
      %v1602 = vunpack.c.l.b16 %v1434
      %v1603 = vunpack.c.l.b16 %v1435
      %v1604 = vunpack.c.l.b16 %v1436
      %v1605 = vunpack.c.l.b16 %v1437
      %v1606 = vunpack.c.l.b16 %v1438
      %v1607 = vunpack.c.l.b16 %v1439
      %v1608 = vunpack.c.l.b16 %v1440
      %v1609 = vunpack.c.l.b16 %v1441
      %v1610 = vunpack.c.l.b16 %v1442
      %v1611 = vunpack.c.l.b16 %v1443
      %v1612 = vunpack.c.l.b16 %v1444
      %v1613 = vunpack.c.l.b16 %v1445
      %v1614 = vunpack.c.l.b16 %v1446
      %v1615 = vunpack.c.l.b16 %v1447
      %v1616 = vunpack.c.l.b16 %v1448
      %v1617 = vunpack.c.l.b16 %v1449
      %v1618 = vunpack.c.l.b16 %v1450
      %v1619 = vunpack.c.l.b16 %v1451
      %v1620 = vunpack.c.l.b16 %v1452
      %v1621 = vunpack.c.l.b16 %v1453
      %v1622 = vunpack.c.l.b16 %v1454
      %v1623 = vunpack.c.l.b16 %v1455
      %v1624 = vunpack.c.l.b16 %v1456
      %v1625 = vunpack.c.l.b16 %v1457
      %v1626 = vunpack.c.l.b16 %v1458
      %v1627 = vunpack.c.l.b16 %v1459
      %v1628 = vunpack.c.l.b16 %v1460
      %v1629 = vunpack.c.l.b16 %v1461
      %v1630 = vunpack.c.l.b16 %v1462
      %v1631 = vpack.c.b16 %v1584, %v1583
      %v1632 = vpack.c.b16 %v1586, %v1585
      %v1633 = vpack.c.b16 %v1588, %v1587
      %v1634 = vpack.c.b16 %v1590, %v1589
      %v1635 = vpack.c.b16 %v1592, %v1591
      %v1636 = vpack.c.b16 %v1594, %v1593
      %v1637 = vpack.c.b16 %v1596, %v1595
      %v1638 = vpack.c.b16 %v1598, %v1597
      %v1639 = vpack.c.b16 %v1600, %v1599
      %v1640 = vpack.c.b16 %v1602, %v1601
      %v1641 = vpack.c.b16 %v1604, %v1603
      %v1642 = vpack.c.b16 %v1606, %v1605
      %v1643 = vpack.c.b16 %v1608, %v1607
      %v1644 = vpack.c.b16 %v1610, %v1609
      %v1645 = vpack.c.b16 %v1612, %v1611
      %v1646 = vpack.c.b16 %v1614, %v1613
      %v1647 = vpack.c.b16 %v1616, %v1615
      %v1648 = vpack.c.b16 %v1618, %v1617
      %v1649 = vpack.c.b16 %v1620, %v1619
      %v1650 = vpack.c.b16 %v1622, %v1621
      %v1651 = vpack.c.b16 %v1624, %v1623
      %v1652 = vpack.c.b16 %v1626, %v1625
      %v1653 = vpack.c.b16 %v1628, %v1627
      %v1654 = vpack.c.b16 %v1630, %v1629
      %1679 = vmatprep.subr.bf16.mxu0 0
      %1680 = vmatpush1.bf16.msra.mxu0 %v1631
      %1681 = vmatprep.subr.bf16.mxu0 0
      %1682 = vmatpush1.bf16.msra.mxu0 %v1632
      %1683 = vmatprep.subr.bf16.mxu0 0
      %1684 = vmatpush1.bf16.msra.mxu0 %v1633
      %1685 = vmatprep.subr.bf16.mxu0 0
      %1686 = vmatpush1.bf16.msra.mxu0 %v1634
      %1687 = vmatprep.subr.bf16.mxu0 0
      %1688 = vmatpush1.bf16.msra.mxu0 %v1635
      %1689 = vmatprep.subr.bf16.mxu0 0
      %1690 = vmatpush1.bf16.msra.mxu0 %v1636
      %1691 = vmatprep.subr.bf16.mxu0 0
      %1692 = vmatpush1.bf16.msra.mxu0 %v1637
      %1693 = vmatprep.subr.bf16.mxu0 0
      %1694 = vmatpush1.bf16.msra.mxu0 %v1638
      %1695 = vmatprep.subr.bf16.mxu0 0
      %1696 = vmatpush1.bf16.msra.mxu0 %v1639
      %1697 = vmatprep.subr.bf16.mxu0 0
      %1698 = vmatpush1.bf16.msra.mxu0 %v1640
      %1699 = vmatprep.subr.bf16.mxu0 0
      %1700 = vmatpush1.bf16.msra.mxu0 %v1641
      %1701 = vmatprep.subr.bf16.mxu0 0
      %1702 = vmatpush1.bf16.msra.mxu0 %v1642
      %1703 = vmatprep.subr.bf16.mxu0 0
      %1704 = vmatpush1.bf16.msra.mxu0 %v1643
      %1705 = vmatprep.subr.bf16.mxu0 0
      %1706 = vmatpush1.bf16.msra.mxu0 %v1644
      %1707 = vmatprep.subr.bf16.mxu0 0
      %1708 = vmatpush1.bf16.msra.mxu0 %v1645
      %1709 = vmatprep.subr.bf16.mxu0 0
      %1710 = vmatpush1.bf16.msra.mxu0 %v1646
      %1711 = vmatprep.mubr.bf16.mxu0 %v1464
      %1712 = vmatmul.mubr.bf16.gmra.mrb[0].mxu0 %v1463
      %v1713 = vpop.f32.mrb[0].mxu0
      %v1714 = vadd.f32 0.0, %v1713
      %v1715 = vpop.f32.mrb[0].mxu0
      %v1716 = vpop.f32.mrb[0].mxu0
      %v1717 = vadd.f32 0.0, %v1716
      %v1718 = vpop.f32.mrb[0].mxu0
      %1719 = vmatprep.mubr.bf16.mxu0 %v1467
      %1720 = vmatmul.mubr.bf16.gmra.mrb[0].mxu0 %v1466
      %v1721 = vpop.f32.mrb[0].mxu0
      %v1722 = vadd.f32 0.0, %v1721
      %v1723 = vpop.f32.mrb[0].mxu0
      %v1724 = vpop.f32.mrb[0].mxu0
      %v1725 = vadd.f32 0.0, %v1724
      %v1726 = vpop.f32.mrb[0].mxu0
      %1727 = vmatprep.mubr.bf16.mxu0 %v1470
      %1728 = vmatmul.mubr.bf16.gmra.mrb[0].mxu0 %v1469
      %v1729 = vpop.f32.mrb[0].mxu0
      %v1730 = vadd.f32 0.0, %v1729
      %v1731 = vpop.f32.mrb[0].mxu0
      %v1732 = vpop.f32.mrb[0].mxu0
      %v1733 = vadd.f32 0.0, %v1732
      %v1734 = vpop.f32.mrb[0].mxu0
      %1735 = vmatprep.mubr.bf16.mxu0 %v1473
      %1736 = vmatmul.mubr.bf16.gmra.mrb[0].mxu0 %v1472
      %v1737 = vpop.f32.mrb[0].mxu0
      %v1738 = vadd.f32 0.0, %v1737
      %v1739 = vpop.f32.mrb[0].mxu0
      %v1740 = vpop.f32.mrb[0].mxu0
      %v1741 = vadd.f32 0.0, %v1740
      %v1742 = vpop.f32.mrb[0].mxu0
      %1743 = vmatprep.mubr.bf16.mxu0 %v1476
      %1744 = vmatmul.mubr.bf16.gmra.mrb[0].mxu0 %v1475
      %v1745 = vpop.f32.mrb[0].mxu0
      %v1746 = vadd.f32 0.0, %v1745
      %v1747 = vpop.f32.mrb[0].mxu0
      %v1748 = vpop.f32.mrb[0].mxu0
      %v1749 = vadd.f32 0.0, %v1748
      %v1750 = vpop.f32.mrb[0].mxu0
      %1751 = vmatprep.mubr.bf16.mxu0 %v1479
      %1752 = vmatmul.mubr.bf16.gmra.mrb[0].mxu0 %v1478
      %v1753 = vpop.f32.mrb[0].mxu0
      %v1754 = vadd.f32 0.0, %v1753
      %v1755 = vpop.f32.mrb[0].mxu0
      %v1756 = vpop.f32.mrb[0].mxu0
      %v1757 = vadd.f32 0.0, %v1756
      %v1758 = vpop.f32.mrb[0].mxu0
      %1759 = vmatprep.mubr.bf16.mxu0 %v1482
      %1760 = vmatmul.mubr.bf16.gmra.mrb[0].mxu0 %v1481
      %v1761 = vpop.f32.mrb[0].mxu0
      %v1762 = vadd.f32 0.0, %v1761
      %v1763 = vpop.f32.mrb[0].mxu0
      %v1764 = vpop.f32.mrb[0].mxu0
      %v1765 = vadd.f32 0.0, %v1764
      %v1766 = vpop.f32.mrb[0].mxu0
      %1767 = vmatprep.mubr.bf16.mxu0 %v1485
      %1768 = vmatmul.mubr.bf16.gmra.mrb[0].mxu0 %v1484
      %v1769 = vpop.f32.mrb[0].mxu0
      %v1770 = vadd.f32 0.0, %v1769
      %v1771 = vpop.f32.mrb[0].mxu0
      %v1772 = vpop.f32.mrb[0].mxu0
      %v1773 = vadd.f32 0.0, %v1772
      %v1774 = vpop.f32.mrb[0].mxu0
      %1775 = vmatprep.mubr.bf16.mxu0 %v1488
      %1776 = vmatmul.mubr.bf16.gmra.mrb[0].mxu0 %v1487
      %v1777 = vpop.f32.mrb[0].mxu0
      %v1778 = vadd.f32 0.0, %v1777
      %v1779 = vpop.f32.mrb[0].mxu0
      %v1780 = vpop.f32.mrb[0].mxu0
      %v1781 = vadd.f32 0.0, %v1780
      %v1782 = vpop.f32.mrb[0].mxu0
      %1783 = vmatprep.mubr.bf16.mxu0 %v1491
      %1784 = vmatmul.mubr.bf16.gmra.mrb[0].mxu0 %v1490
      %v1785 = vpop.f32.mrb[0].mxu0
      %v1786 = vadd.f32 0.0, %v1785
      %v1787 = vpop.f32.mrb[0].mxu0
      %v1788 = vpop.f32.mrb[0].mxu0
      %v1789 = vadd.f32 0.0, %v1788
      %v1790 = vpop.f32.mrb[0].mxu0
      %1791 = vmatprep.mubr.bf16.mxu0 %v1494
      %1792 = vmatmul.mubr.bf16.gmra.mrb[0].mxu0 %v1493
      %v1793 = vpop.f32.mrb[0].mxu0
      %v1794 = vadd.f32 0.0, %v1793
      %v1795 = vpop.f32.mrb[0].mxu0
      %v1796 = vpop.f32.mrb[0].mxu0
      %v1797 = vadd.f32 0.0, %v1796
      %v1798 = vpop.f32.mrb[0].mxu0
      %1799 = vmatprep.mubr.bf16.mxu0 %v1497
      %1800 = vmatmul.mubr.bf16.gmra.mrb[0].mxu0 %v1496
      %v1801 = vpop.f32.mrb[0].mxu0
      %v1802 = vadd.f32 0.0, %v1801
      %v1803 = vpop.f32.mrb[0].mxu0
      %v1804 = vpop.f32.mrb[0].mxu0
      %v1805 = vadd.f32 0.0, %v1804
      %v1806 = vpop.f32.mrb[0].mxu0
      %1807 = vdwg.mxu0
      %1808 = vmatprep.subr.bf16.mxu0 0
      %1809 = vmatpush1.bf16.msra.mxu0 %v1647
      %1810 = vmatprep.subr.bf16.mxu0 0
      %1811 = vmatpush1.bf16.msra.mxu0 %v1648
      %1812 = vmatprep.subr.bf16.mxu0 0
      %1813 = vmatpush1.bf16.msra.mxu0 %v1649
      %1814 = vmatprep.subr.bf16.mxu0 0
      %1815 = vmatpush1.bf16.msra.mxu0 %v1650
      %1816 = vmatprep.subr.bf16.mxu0 0
      %1817 = vmatpush1.bf16.msra.mxu0 %v1651
      %1818 = vmatprep.subr.bf16.mxu0 0
      %1819 = vmatpush1.bf16.msra.mxu0 %v1652
      %1820 = vmatprep.subr.bf16.mxu0 0
      %1821 = vmatpush1.bf16.msra.mxu0 %v1653
      %1822 = vmatprep.subr.bf16.mxu0 0
      %1823 = vmatpush1.bf16.msra.mxu0 %v1654
      %1824 = vmatprep.subr.bf16.mxu0 0
      %1825 = vmatpush1.bf16.msra.mxu0 0
      %1826 = vmatprep.subr.bf16.mxu0 0
      %1827 = vmatpush1.bf16.msra.mxu0 0
      %1828 = vmatprep.subr.bf16.mxu0 0
      %1829 = vmatpush1.bf16.msra.mxu0 0
      %1830 = vmatprep.subr.bf16.mxu0 0
      %1831 = vmatpush1.bf16.msra.mxu0 0
      %1832 = vmatprep.subr.bf16.mxu0 0
      %1833 = vmatpush1.bf16.msra.mxu0 0
      %1834 = vmatprep.subr.bf16.mxu0 0
      %1835 = vmatpush1.bf16.msra.mxu0 0
      %1836 = vmatprep.subr.bf16.mxu0 0
      %1837 = vmatpush1.bf16.msra.mxu0 0
      %1838 = vmatprep.subr.bf16.mxu0 0
      %1839 = vmatpush1.bf16.msra.mxu0 0
      %1840 = vmatprep.mubr.bf16.mxu0 0
      %1841 = vmatmul.mubr.bf16.gmra.mrb[0].mxu0 %v1465
      %v1842 = vpop.f32.mrb[0].mxu0
      %v1843 = vadd.f32 %v1714, %v1842
      %v1844 = vpop.f32.mrb[0].mxu0
      %v1845 = vpop.f32.mrb[0].mxu0
      %v1846 = vadd.f32 %v1717, %v1845
      %v1847 = vpop.f32.mrb[0].mxu0
      %1848 = vmatprep.mubr.bf16.mxu0 0
      %1849 = vmatmul.mubr.bf16.gmra.mrb[0].mxu0 %v1468
      %v1850 = vpop.f32.mrb[0].mxu0
      %v1851 = vadd.f32 %v1722, %v1850
      %v1852 = vpop.f32.mrb[0].mxu0
      %v1853 = vpop.f32.mrb[0].mxu0
      %v1854 = vadd.f32 %v1725, %v1853
      %v1855 = vpop.f32.mrb[0].mxu0
      %1856 = vmatprep.mubr.bf16.mxu0 0
      %1857 = vmatmul.mubr.bf16.gmra.mrb[0].mxu0 %v1471
      %v1858 = vpop.f32.mrb[0].mxu0
      %v1859 = vadd.f32 %v1730, %v1858
      %v1860 = vpop.f32.mrb[0].mxu0
      %v1861 = vpop.f32.mrb[0].mxu0
      %v1862 = vadd.f32 %v1733, %v1861
      %v1863 = vpop.f32.mrb[0].mxu0
      %1864 = vmatprep.mubr.bf16.mxu0 0
      %1865 = vmatmul.mubr.bf16.gmra.mrb[0].mxu0 %v1474
      %v1866 = vpop.f32.mrb[0].mxu0
      %v1867 = vadd.f32 %v1738, %v1866
      %v1868 = vpop.f32.mrb[0].mxu0
      %v1869 = vpop.f32.mrb[0].mxu0
      %v1870 = vadd.f32 %v1741, %v1869
      %v1871 = vpop.f32.mrb[0].mxu0
      %1872 = vmatprep.mubr.bf16.mxu0 0
      %1873 = vmatmul.mubr.bf16.gmra.mrb[0].mxu0 %v1477
      %v1874 = vpop.f32.mrb[0].mxu0
      %v1875 = vadd.f32 %v1746, %v1874
      %v1876 = vpop.f32.mrb[0].mxu0
      %v1877 = vpop.f32.mrb[0].mxu0
      %v1878 = vadd.f32 %v1749, %v1877
      %v1879 = vpop.f32.mrb[0].mxu0
      %1880 = vmatprep.mubr.bf16.mxu0 0
      %1881 = vmatmul.mubr.bf16.gmra.mrb[0].mxu0 %v1480
      %v1882 = vpop.f32.mrb[0].mxu0
      %v1883 = vadd.f32 %v1754, %v1882
      %v1884 = vpop.f32.mrb[0].mxu0
      %v1885 = vpop.f32.mrb[0].mxu0
      %v1886 = vadd.f32 %v1757, %v1885
      %v1887 = vpop.f32.mrb[0].mxu0
      %1888 = vmatprep.mubr.bf16.mxu0 0
      %1889 = vmatmul.mubr.bf16.gmra.mrb[0].mxu0 %v1483
      %v1890 = vpop.f32.mrb[0].mxu0
      %v1891 = vadd.f32 %v1762, %v1890
      %v1892 = vpop.f32.mrb[0].mxu0
      %v1893 = vpop.f32.mrb[0].mxu0
      %v1894 = vadd.f32 %v1765, %v1893
      %v1895 = vpop.f32.mrb[0].mxu0
      %1896 = vmatprep.mubr.bf16.mxu0 0
      %1897 = vmatmul.mubr.bf16.gmra.mrb[0].mxu0 %v1486
      %v1898 = vpop.f32.mrb[0].mxu0
      %v1899 = vadd.f32 %v1770, %v1898
      %v1900 = vpop.f32.mrb[0].mxu0
      %v1901 = vpop.f32.mrb[0].mxu0
      %v1902 = vadd.f32 %v1773, %v1901
      %v1903 = vpop.f32.mrb[0].mxu0
      %1904 = vmatprep.mubr.bf16.mxu0 0
      %1905 = vmatmul.mubr.bf16.gmra.mrb[0].mxu0 %v1489
      %v1906 = vpop.f32.mrb[0].mxu0
      %v1907 = vadd.f32 %v1778, %v1906
      %v1908 = vpop.f32.mrb[0].mxu0
      %v1909 = vpop.f32.mrb[0].mxu0
      %v1910 = vadd.f32 %v1781, %v1909
      %v1911 = vpop.f32.mrb[0].mxu0
      %1912 = vmatprep.mubr.bf16.mxu0 0
      %1913 = vmatmul.mubr.bf16.gmra.mrb[0].mxu0 %v1492
      %v1914 = vpop.f32.mrb[0].mxu0
      %v1915 = vadd.f32 %v1786, %v1914
      %v1916 = vpop.f32.mrb[0].mxu0
      %v1917 = vpop.f32.mrb[0].mxu0
      %v1918 = vadd.f32 %v1789, %v1917
      %v1919 = vpop.f32.mrb[0].mxu0
      %1920 = vmatprep.mubr.bf16.mxu0 0
      %1921 = vmatmul.mubr.bf16.gmra.mrb[0].mxu0 %v1495
      %v1922 = vpop.f32.mrb[0].mxu0
      %v1923 = vadd.f32 %v1794, %v1922
      %v1924 = vpop.f32.mrb[0].mxu0
      %v1925 = vpop.f32.mrb[0].mxu0
      %v1926 = vadd.f32 %v1797, %v1925
      %v1927 = vpop.f32.mrb[0].mxu0
      %1928 = vmatprep.mubr.bf16.mxu0 0
      %1929 = vmatmul.mubr.bf16.gmra.mrb[0].mxu0 %v1498
      %v1930 = vpop.f32.mrb[0].mxu0
      %v1931 = vadd.f32 %v1802, %v1930
      %v1932 = vpop.f32.mrb[0].mxu0
      %v1933 = vpop.f32.mrb[0].mxu0
      %v1934 = vadd.f32 %v1805, %v1933
      %v1935 = vpop.f32.mrb[0].mxu0
      %1936 = vdwg.mxu0
      %v1937 = vpack.c.b16 %v1282, %v1279
      %v1938 = vpack.c.b16 %v1283, %v1280
      %v1939 = vpack.c.b16 %v1284, %v1281
      %v1940 = vpack.c.b16 %v1288, %v1285
      %v1941 = vpack.c.b16 %v1289, %v1286
      %v1942 = vpack.c.b16 %v1290, %v1287
      %v1943 = vpack.c.b16 %v1294, %v1291
      %v1944 = vpack.c.b16 %v1295, %v1292
      %v1945 = vpack.c.b16 %v1296, %v1293
      %v1946 = vpack.c.b16 %v1300, %v1297
      %v1947 = vpack.c.b16 %v1301, %v1298
      %v1948 = vpack.c.b16 %v1302, %v1299
      %v1949 = vpack.c.b16 %v1306, %v1303
      %v1950 = vpack.c.b16 %v1307, %v1304
      %v1951 = vpack.c.b16 %v1308, %v1305
      %v1952 = vpack.c.b16 %v1312, %v1309
      %v1953 = vpack.c.b16 %v1313, %v1310
      %v1954 = vpack.c.b16 %v1314, %v1311
      %v1955 = vpack.c.b16 %v1318, %v1315
      %v1956 = vpack.c.b16 %v1319, %v1316
      %v1957 = vpack.c.b16 %v1320, %v1317
      %v1958 = vpack.c.b16 %v1324, %v1321
      %v1959 = vpack.c.b16 %v1325, %v1322
      %v1960 = vpack.c.b16 %v1326, %v1323
      %v1961 = vpack.c.b16 %v1330, %v1327
      %v1962 = vpack.c.b16 %v1331, %v1328
      %v1963 = vpack.c.b16 %v1332, %v1329
      %v1964 = vpack.c.b16 %v1336, %v1333
      %v1965 = vpack.c.b16 %v1337, %v1334
      %v1966 = vpack.c.b16 %v1338, %v1335
      %v1967 = vpack.c.b16 %v1342, %v1339
      %v1968 = vpack.c.b16 %v1343, %v1340
      %v1969 = vpack.c.b16 %v1344, %v1341
      %v1970 = vpack.c.b16 %v1348, %v1345
      %v1971 = vpack.c.b16 %v1349, %v1346
      %v1972 = vpack.c.b16 %v1350, %v1347
      %v2057 = vunpack.c.l.b16 %v1351
      %v2058 = vunpack.c.l.b16 %v1352
      %v2059 = vunpack.c.l.b16 %v1353
      %v2060 = vunpack.c.l.b16 %v1354
      %v2061 = vunpack.c.l.b16 %v1355
      %v2062 = vunpack.c.l.b16 %v1356
      %v2063 = vunpack.c.l.b16 %v1357
      %v2064 = vunpack.c.l.b16 %v1358
      %v2065 = vunpack.c.l.b16 %v1359
      %v2066 = vunpack.c.l.b16 %v1360
      %v2067 = vunpack.c.l.b16 %v1361
      %v2068 = vunpack.c.l.b16 %v1362
      %v2069 = vunpack.c.l.b16 %v1363
      %v2070 = vunpack.c.l.b16 %v1364
      %v2071 = vunpack.c.l.b16 %v1365
      %v2072 = vunpack.c.l.b16 %v1366
      %v2073 = vunpack.c.l.b16 %v1367
      %v2074 = vunpack.c.l.b16 %v1368
      %v2075 = vunpack.c.l.b16 %v1369
      %v2076 = vunpack.c.l.b16 %v1370
      %v2077 = vunpack.c.l.b16 %v1371
      %v2078 = vunpack.c.l.b16 %v1372
      %v2079 = vunpack.c.l.b16 %v1373
      %v2080 = vunpack.c.l.b16 %v1374
      %v2081 = vunpack.c.l.b16 %v1375
      %v2082 = vunpack.c.l.b16 %v1376
      %v2083 = vunpack.c.l.b16 %v1377
      %v2084 = vunpack.c.l.b16 %v1378
      %v2085 = vunpack.c.l.b16 %v1379
      %v2086 = vunpack.c.l.b16 %v1380
      %v2087 = vunpack.c.l.b16 %v1381
      %v2088 = vunpack.c.l.b16 %v1382
      %v2089 = vunpack.c.l.b16 %v1383
      %v2090 = vunpack.c.l.b16 %v1384
      %v2091 = vunpack.c.l.b16 %v1385
      %v2092 = vunpack.c.l.b16 %v1386
      %v2093 = vunpack.c.l.b16 %v1387
      %v2094 = vunpack.c.l.b16 %v1388
      %v2095 = vunpack.c.l.b16 %v1389
      %v2096 = vunpack.c.l.b16 %v1390
      %v2097 = vunpack.c.l.b16 %v1391
      %v2098 = vunpack.c.l.b16 %v1392
      %v2099 = vunpack.c.l.b16 %v1393
      %v2100 = vunpack.c.l.b16 %v1394
      %v2101 = vunpack.c.l.b16 %v1395
      %v2102 = vunpack.c.l.b16 %v1396
      %v2103 = vunpack.c.l.b16 %v1397
      %v2104 = vunpack.c.l.b16 %v1398
      %v2105 = vpack.c.b16 %v2058, %v2057
      %v2106 = vpack.c.b16 %v2060, %v2059
      %v2107 = vpack.c.b16 %v2062, %v2061
      %v2108 = vpack.c.b16 %v2064, %v2063
      %v2109 = vpack.c.b16 %v2066, %v2065
      %v2110 = vpack.c.b16 %v2068, %v2067
      %v2111 = vpack.c.b16 %v2070, %v2069
      %v2112 = vpack.c.b16 %v2072, %v2071
      %v2113 = vpack.c.b16 %v2074, %v2073
      %v2114 = vpack.c.b16 %v2076, %v2075
      %v2115 = vpack.c.b16 %v2078, %v2077
      %v2116 = vpack.c.b16 %v2080, %v2079
      %v2117 = vpack.c.b16 %v2082, %v2081
      %v2118 = vpack.c.b16 %v2084, %v2083
      %v2119 = vpack.c.b16 %v2086, %v2085
      %v2120 = vpack.c.b16 %v2088, %v2087
      %v2121 = vpack.c.b16 %v2090, %v2089
      %v2122 = vpack.c.b16 %v2092, %v2091
      %v2123 = vpack.c.b16 %v2094, %v2093
      %v2124 = vpack.c.b16 %v2096, %v2095
      %v2125 = vpack.c.b16 %v2098, %v2097
      %v2126 = vpack.c.b16 %v2100, %v2099
      %v2127 = vpack.c.b16 %v2102, %v2101
      %v2128 = vpack.c.b16 %v2104, %v2103
      %2153 = vmatprep.subr.bf16.mxu0 0
      %2154 = vmatpush1.bf16.msra.mxu0 %v2105
      %2155 = vmatprep.subr.bf16.mxu0 0
      %2156 = vmatpush1.bf16.msra.mxu0 %v2106
      %2157 = vmatprep.subr.bf16.mxu0 0
      %2158 = vmatpush1.bf16.msra.mxu0 %v2107
      %2159 = vmatprep.subr.bf16.mxu0 0
      %2160 = vmatpush1.bf16.msra.mxu0 %v2108
      %2161 = vmatprep.subr.bf16.mxu0 0
      %2162 = vmatpush1.bf16.msra.mxu0 %v2109
      %2163 = vmatprep.subr.bf16.mxu0 0
      %2164 = vmatpush1.bf16.msra.mxu0 %v2110
      %2165 = vmatprep.subr.bf16.mxu0 0
      %2166 = vmatpush1.bf16.msra.mxu0 %v2111
      %2167 = vmatprep.subr.bf16.mxu0 0
      %2168 = vmatpush1.bf16.msra.mxu0 %v2112
      %2169 = vmatprep.subr.bf16.mxu0 0
      %2170 = vmatpush1.bf16.msra.mxu0 %v2113
      %2171 = vmatprep.subr.bf16.mxu0 0
      %2172 = vmatpush1.bf16.msra.mxu0 %v2114
      %2173 = vmatprep.subr.bf16.mxu0 0
      %2174 = vmatpush1.bf16.msra.mxu0 %v2115
      %2175 = vmatprep.subr.bf16.mxu0 0
      %2176 = vmatpush1.bf16.msra.mxu0 %v2116
      %2177 = vmatprep.subr.bf16.mxu0 0
      %2178 = vmatpush1.bf16.msra.mxu0 %v2117
      %2179 = vmatprep.subr.bf16.mxu0 0
      %2180 = vmatpush1.bf16.msra.mxu0 %v2118
      %2181 = vmatprep.subr.bf16.mxu0 0
      %2182 = vmatpush1.bf16.msra.mxu0 %v2119
      %2183 = vmatprep.subr.bf16.mxu0 0
      %2184 = vmatpush1.bf16.msra.mxu0 %v2120
      %2185 = vmatprep.mubr.bf16.mxu0 %v1938
      %2186 = vmatmul.mubr.bf16.gmra.mrb[0].mxu0 %v1937
      %v2187 = vpop.f32.mrb[0].mxu0
      %v2188 = vadd.f32 %v1843, %v2187
      %v2189 = vpop.f32.mrb[0].mxu0
      %v2190 = vpop.f32.mrb[0].mxu0
      %v2191 = vadd.f32 %v1846, %v2190
      %v2192 = vpop.f32.mrb[0].mxu0
      %2193 = vmatprep.mubr.bf16.mxu0 %v1941
      %2194 = vmatmul.mubr.bf16.gmra.mrb[0].mxu0 %v1940
      %v2195 = vpop.f32.mrb[0].mxu0
      %v2196 = vadd.f32 %v1851, %v2195
      %v2197 = vpop.f32.mrb[0].mxu0
      %v2198 = vpop.f32.mrb[0].mxu0
      %v2199 = vadd.f32 %v1854, %v2198
      %v2200 = vpop.f32.mrb[0].mxu0
      %2201 = vmatprep.mubr.bf16.mxu0 %v1944
      %2202 = vmatmul.mubr.bf16.gmra.mrb[0].mxu0 %v1943
      %v2203 = vpop.f32.mrb[0].mxu0
      %v2204 = vadd.f32 %v1859, %v2203
      %v2205 = vpop.f32.mrb[0].mxu0
      %v2206 = vpop.f32.mrb[0].mxu0
      %v2207 = vadd.f32 %v1862, %v2206
      %v2208 = vpop.f32.mrb[0].mxu0
      %2209 = vmatprep.mubr.bf16.mxu0 %v1947
      %2210 = vmatmul.mubr.bf16.gmra.mrb[0].mxu0 %v1946
      %v2211 = vpop.f32.mrb[0].mxu0
      %v2212 = vadd.f32 %v1867, %v2211
      %v2213 = vpop.f32.mrb[0].mxu0
      %v2214 = vpop.f32.mrb[0].mxu0
      %v2215 = vadd.f32 %v1870, %v2214
      %v2216 = vpop.f32.mrb[0].mxu0
      %2217 = vmatprep.mubr.bf16.mxu0 %v1950
      %2218 = vmatmul.mubr.bf16.gmra.mrb[0].mxu0 %v1949
      %v2219 = vpop.f32.mrb[0].mxu0
      %v2220 = vadd.f32 %v1875, %v2219
      %v2221 = vpop.f32.mrb[0].mxu0
      %v2222 = vpop.f32.mrb[0].mxu0
      %v2223 = vadd.f32 %v1878, %v2222
      %v2224 = vpop.f32.mrb[0].mxu0
      %2225 = vmatprep.mubr.bf16.mxu0 %v1953
      %2226 = vmatmul.mubr.bf16.gmra.mrb[0].mxu0 %v1952
      %v2227 = vpop.f32.mrb[0].mxu0
      %v2228 = vadd.f32 %v1883, %v2227
      %v2229 = vpop.f32.mrb[0].mxu0
      %v2230 = vpop.f32.mrb[0].mxu0
      %v2231 = vadd.f32 %v1886, %v2230
      %v2232 = vpop.f32.mrb[0].mxu0
      %2233 = vmatprep.mubr.bf16.mxu0 %v1956
      %2234 = vmatmul.mubr.bf16.gmra.mrb[0].mxu0 %v1955
      %v2235 = vpop.f32.mrb[0].mxu0
      %v2236 = vadd.f32 %v1891, %v2235
      %v2237 = vpop.f32.mrb[0].mxu0
      %v2238 = vpop.f32.mrb[0].mxu0
      %v2239 = vadd.f32 %v1894, %v2238
      %v2240 = vpop.f32.mrb[0].mxu0
      %2241 = vmatprep.mubr.bf16.mxu0 %v1959
      %2242 = vmatmul.mubr.bf16.gmra.mrb[0].mxu0 %v1958
      %v2243 = vpop.f32.mrb[0].mxu0
      %v2244 = vadd.f32 %v1899, %v2243
      %v2245 = vpop.f32.mrb[0].mxu0
      %v2246 = vpop.f32.mrb[0].mxu0
      %v2247 = vadd.f32 %v1902, %v2246
      %v2248 = vpop.f32.mrb[0].mxu0
      %2249 = vmatprep.mubr.bf16.mxu0 %v1962
      %2250 = vmatmul.mubr.bf16.gmra.mrb[0].mxu0 %v1961
      %v2251 = vpop.f32.mrb[0].mxu0
      %v2252 = vadd.f32 %v1907, %v2251
      %v2253 = vpop.f32.mrb[0].mxu0
      %v2254 = vpop.f32.mrb[0].mxu0
      %v2255 = vadd.f32 %v1910, %v2254
      %v2256 = vpop.f32.mrb[0].mxu0
      %2257 = vmatprep.mubr.bf16.mxu0 %v1965
      %2258 = vmatmul.mubr.bf16.gmra.mrb[0].mxu0 %v1964
      %v2259 = vpop.f32.mrb[0].mxu0
      %v2260 = vadd.f32 %v1915, %v2259
      %v2261 = vpop.f32.mrb[0].mxu0
      %v2262 = vpop.f32.mrb[0].mxu0
      %v2263 = vadd.f32 %v1918, %v2262
      %v2264 = vpop.f32.mrb[0].mxu0
      %2265 = vmatprep.mubr.bf16.mxu0 %v1968
      %2266 = vmatmul.mubr.bf16.gmra.mrb[0].mxu0 %v1967
      %v2267 = vpop.f32.mrb[0].mxu0
      %v2268 = vadd.f32 %v1923, %v2267
      %v2269 = vpop.f32.mrb[0].mxu0
      %v2270 = vpop.f32.mrb[0].mxu0
      %v2271 = vadd.f32 %v1926, %v2270
      %v2272 = vpop.f32.mrb[0].mxu0
      %2273 = vmatprep.mubr.bf16.mxu0 %v1971
      %2274 = vmatmul.mubr.bf16.gmra.mrb[0].mxu0 %v1970
      %v2275 = vpop.f32.mrb[0].mxu0
      %v2276 = vadd.f32 %v1931, %v2275
      %v2277 = vpop.f32.mrb[0].mxu0
      %v2278 = vpop.f32.mrb[0].mxu0
      %v2279 = vadd.f32 %v1934, %v2278
      %v2280 = vpop.f32.mrb[0].mxu0
      %2281 = vdwg.mxu0
      %2282 = vmatprep.subr.bf16.mxu0 0
      %2283 = vmatpush1.bf16.msra.mxu0 %v2121
      %2284 = vmatprep.subr.bf16.mxu0 0
      %2285 = vmatpush1.bf16.msra.mxu0 %v2122
      %2286 = vmatprep.subr.bf16.mxu0 0
      %2287 = vmatpush1.bf16.msra.mxu0 %v2123
      %2288 = vmatprep.subr.bf16.mxu0 0
      %2289 = vmatpush1.bf16.msra.mxu0 %v2124
      %2290 = vmatprep.subr.bf16.mxu0 0
      %2291 = vmatpush1.bf16.msra.mxu0 %v2125
      %2292 = vmatprep.subr.bf16.mxu0 0
      %2293 = vmatpush1.bf16.msra.mxu0 %v2126
      %2294 = vmatprep.subr.bf16.mxu0 0
      %2295 = vmatpush1.bf16.msra.mxu0 %v2127
      %2296 = vmatprep.subr.bf16.mxu0 0
      %2297 = vmatpush1.bf16.msra.mxu0 %v2128
      %2298 = vmatprep.subr.bf16.mxu0 0
      %2299 = vmatpush1.bf16.msra.mxu0 0
      %2300 = vmatprep.subr.bf16.mxu0 0
      %2301 = vmatpush1.bf16.msra.mxu0 0
      %2302 = vmatprep.subr.bf16.mxu0 0
      %2303 = vmatpush1.bf16.msra.mxu0 0
      %2304 = vmatprep.subr.bf16.mxu0 0
      %2305 = vmatpush1.bf16.msra.mxu0 0
      %2306 = vmatprep.subr.bf16.mxu0 0
      %2307 = vmatpush1.bf16.msra.mxu0 0
      %2308 = vmatprep.subr.bf16.mxu0 0
      %2309 = vmatpush1.bf16.msra.mxu0 0
      %2310 = vmatprep.subr.bf16.mxu0 0
      %2311 = vmatpush1.bf16.msra.mxu0 0
      %2312 = vmatprep.subr.bf16.mxu0 0
      %2313 = vmatpush1.bf16.msra.mxu0 0
      %2314 = vmatprep.mubr.bf16.mxu0 0
      %2315 = vmatmul.mubr.bf16.gmra.mrb[0].mxu0 %v1939
      %v2316 = vpop.f32.mrb[0].mxu0
      %v2317 = vadd.f32 %v2188, %v2316
      %v2318 = vpop.f32.mrb[0].mxu0
      %v2319 = vpop.f32.mrb[0].mxu0
      %v2320 = vadd.f32 %v2191, %v2319
      %v2321 = vpop.f32.mrb[0].mxu0
      %2322 = vmatprep.mubr.bf16.mxu0 0
      %2323 = vmatmul.mubr.bf16.gmra.mrb[0].mxu0 %v1942
      %v2324 = vpop.f32.mrb[0].mxu0
      %v2325 = vadd.f32 %v2196, %v2324
      %v2326 = vpop.f32.mrb[0].mxu0
      %v2327 = vpop.f32.mrb[0].mxu0
      %v2328 = vadd.f32 %v2199, %v2327
      %v2329 = vpop.f32.mrb[0].mxu0
      %2330 = vmatprep.mubr.bf16.mxu0 0
      %2331 = vmatmul.mubr.bf16.gmra.mrb[0].mxu0 %v1945
      %v2332 = vpop.f32.mrb[0].mxu0
      %v2333 = vadd.f32 %v2204, %v2332
      %v2334 = vpop.f32.mrb[0].mxu0
      %v2335 = vpop.f32.mrb[0].mxu0
      %v2336 = vadd.f32 %v2207, %v2335
      %v2337 = vpop.f32.mrb[0].mxu0
      %2338 = vmatprep.mubr.bf16.mxu0 0
      %2339 = vmatmul.mubr.bf16.gmra.mrb[0].mxu0 %v1948
      %v2340 = vpop.f32.mrb[0].mxu0
      %v2341 = vadd.f32 %v2212, %v2340
      %v2342 = vpop.f32.mrb[0].mxu0
      %v2343 = vpop.f32.mrb[0].mxu0
      %v2344 = vadd.f32 %v2215, %v2343
      %v2345 = vpop.f32.mrb[0].mxu0
      %2346 = vmatprep.mubr.bf16.mxu0 0
      %2347 = vmatmul.mubr.bf16.gmra.mrb[0].mxu0 %v1951
      %v2348 = vpop.f32.mrb[0].mxu0
      %v2349 = vadd.f32 %v2220, %v2348
      %v2350 = vpop.f32.mrb[0].mxu0
      %v2351 = vpop.f32.mrb[0].mxu0
      %v2352 = vadd.f32 %v2223, %v2351
      %v2353 = vpop.f32.mrb[0].mxu0
      %2354 = vmatprep.mubr.bf16.mxu0 0
      %2355 = vmatmul.mubr.bf16.gmra.mrb[0].mxu0 %v1954
      %v2356 = vpop.f32.mrb[0].mxu0
      %v2357 = vadd.f32 %v2228, %v2356
      %v2358 = vpop.f32.mrb[0].mxu0
      %v2359 = vpop.f32.mrb[0].mxu0
      %v2360 = vadd.f32 %v2231, %v2359
      %v2361 = vpop.f32.mrb[0].mxu0
      %2362 = vmatprep.mubr.bf16.mxu0 0
      %2363 = vmatmul.mubr.bf16.gmra.mrb[0].mxu0 %v1957
      %v2364 = vpop.f32.mrb[0].mxu0
      %v2365 = vadd.f32 %v2236, %v2364
      %v2366 = vpop.f32.mrb[0].mxu0
      %v2367 = vpop.f32.mrb[0].mxu0
      %v2368 = vadd.f32 %v2239, %v2367
      %v2369 = vpop.f32.mrb[0].mxu0
      %2370 = vmatprep.mubr.bf16.mxu0 0
      %2371 = vmatmul.mubr.bf16.gmra.mrb[0].mxu0 %v1960
      %v2372 = vpop.f32.mrb[0].mxu0
      %v2373 = vadd.f32 %v2244, %v2372
      %v2374 = vpop.f32.mrb[0].mxu0
      %v2375 = vpop.f32.mrb[0].mxu0
      %v2376 = vadd.f32 %v2247, %v2375
      %v2377 = vpop.f32.mrb[0].mxu0
      %2378 = vmatprep.mubr.bf16.mxu0 0
      %2379 = vmatmul.mubr.bf16.gmra.mrb[0].mxu0 %v1963
      %v2380 = vpop.f32.mrb[0].mxu0
      %v2381 = vadd.f32 %v2252, %v2380
      %v2382 = vpop.f32.mrb[0].mxu0
      %v2383 = vpop.f32.mrb[0].mxu0
      %v2384 = vadd.f32 %v2255, %v2383
      %v2385 = vpop.f32.mrb[0].mxu0
      %2386 = vmatprep.mubr.bf16.mxu0 0
      %2387 = vmatmul.mubr.bf16.gmra.mrb[0].mxu0 %v1966
      %v2388 = vpop.f32.mrb[0].mxu0
      %v2389 = vadd.f32 %v2260, %v2388
      %v2390 = vpop.f32.mrb[0].mxu0
      %v2391 = vpop.f32.mrb[0].mxu0
      %v2392 = vadd.f32 %v2263, %v2391
      %v2393 = vpop.f32.mrb[0].mxu0
      %2394 = vmatprep.mubr.bf16.mxu0 0
      %2395 = vmatmul.mubr.bf16.gmra.mrb[0].mxu0 %v1969
      %v2396 = vpop.f32.mrb[0].mxu0
      %v2397 = vadd.f32 %v2268, %v2396
      %v2398 = vpop.f32.mrb[0].mxu0
      %v2399 = vpop.f32.mrb[0].mxu0
      %v2400 = vadd.f32 %v2271, %v2399
      %v2401 = vpop.f32.mrb[0].mxu0
      %2402 = vmatprep.mubr.bf16.mxu0 0
      %2403 = vmatmul.mubr.bf16.gmra.mrb[0].mxu0 %v1972
      %v2404 = vpop.f32.mrb[0].mxu0
      %v2405 = vadd.f32 %v2276, %v2404
      %v2406 = vpop.f32.mrb[0].mxu0
      %v2407 = vpop.f32.mrb[0].mxu0
      %v2408 = vadd.f32 %v2279, %v2407
      %v2409 = vpop.f32.mrb[0].mxu0
      %2410 = vdwg.mxu0
      %v2417 = vunpack.c.l.b16 %v1225
      %v2418 = vunpack.c.l.b16 %v1226
      %v2419 = vunpack.c.l.b16 %v1227
      %v2420 = vunpack.c.h.b16 %v1225
      %v2421 = vunpack.c.h.b16 %v1226
      %v2422 = vunpack.c.h.b16 %v1227
      %v2423 = vunpack.c.l.b16 %v1228
      %v2424 = vunpack.c.l.b16 %v1229
      %v2425 = vunpack.c.l.b16 %v1230
      %s2426 = scalar_lea.vmem %s4, 384
      %v2427 = vld [vmem:[%s2426] sm:$0xf]
      %v2428 = vld [vmem:[%s2426 + $0x4] sm:$0xf]
      %v2429 = vld [vmem:[%s2426 + $0x8] sm:$0xf]
      %v2430 = vld [vmem:[%s2426 + $0xc] sm:$0xf]
      %v2431 = vld [vmem:[%s2426 + $0x10] sm:$0xf]
      %v2432 = vld [vmem:[%s2426 + $0x14] sm:$0xf]
      %v2433 = vld [vmem:[%s2426 + $0x18] sm:$0xf]
      %v2434 = vld [vmem:[%s2426 + $0x1c] sm:$0xf]
      %v2435 = vld [vmem:[%s2426 + $0x20] sm:$0xf]
      %v2436 = vld [vmem:[%s2426 + $0x24] sm:$0xf]
      %v2437 = vld [vmem:[%s2426 + $0x28] sm:$0xf]
      %v2438 = vld [vmem:[%s2426 + $0x2c] sm:$0xf]
      %v2439 = vld [vmem:[%s2426 + $0x30] sm:$0xf]
      %v2440 = vld [vmem:[%s2426 + $0x34] sm:$0xf]
      %v2441 = vld [vmem:[%s2426 + $0x38] sm:$0xf]
      %v2442 = vld [vmem:[%s2426 + $0x3c] sm:$0xf]
      %v2443 = vld [vmem:[%s2426 + $0x40] sm:$0xf]
      %v2444 = vld [vmem:[%s2426 + $0x44] sm:$0xf]
      %v2445 = vld [vmem:[%s2426 + $0x48] sm:$0xf]
      %v2446 = vld [vmem:[%s2426 + $0x4c] sm:$0xf]
      %v2447 = vld [vmem:[%s2426 + $0x50] sm:$0xf]
      %v2448 = vld [vmem:[%s2426 + $0x54] sm:$0xf]
      %v2449 = vld [vmem:[%s2426 + $0x58] sm:$0xf]
      %v2450 = vld [vmem:[%s2426 + $0x5c] sm:$0xf]
      %v2451 = vld [vmem:[%s2426 + $0x60] sm:$0xf]
      %v2452 = vld [vmem:[%s2426 + $0x64] sm:$0xf]
      %v2453 = vld [vmem:[%s2426 + $0x68] sm:$0xf]
      %v2454 = vld [vmem:[%s2426 + $0x6c] sm:$0xf]
      %v2455 = vld [vmem:[%s2426 + $0x70] sm:$0xf]
      %v2456 = vld [vmem:[%s2426 + $0x74] sm:$0xf]
      %v2457 = vld [vmem:[%s2426 + $0x78] sm:$0xf]
      %v2458 = vld [vmem:[%s2426 + $0x7c] sm:$0xf]
      %v2459 = vld [vmem:[%s2426 + $0x80] sm:$0xf]
      %v2460 = vld [vmem:[%s2426 + $0x84] sm:$0xf]
      %v2461 = vld [vmem:[%s2426 + $0x88] sm:$0xf]
      %v2462 = vld [vmem:[%s2426 + $0x8c] sm:$0xf]
      %v2463 = vld [vmem:[%s2426 + $0x90] sm:$0xf]
      %v2464 = vld [vmem:[%s2426 + $0x94] sm:$0xf]
      %v2465 = vld [vmem:[%s2426 + $0x98] sm:$0xf]
      %v2466 = vld [vmem:[%s2426 + $0x9c] sm:$0xf]
      %v2467 = vld [vmem:[%s2426 + $0xa0] sm:$0xf]
      %v2468 = vld [vmem:[%s2426 + $0xa4] sm:$0xf]
      %v2469 = vld [vmem:[%s2426 + $0xa8] sm:$0xf]
      %v2470 = vld [vmem:[%s2426 + $0xac] sm:$0xf]
      %v2471 = vld [vmem:[%s2426 + $0xb0] sm:$0xf]
      %v2472 = vld [vmem:[%s2426 + $0xb4] sm:$0xf]
      %v2473 = vld [vmem:[%s2426 + $0xb8] sm:$0xf]
      %v2474 = vld [vmem:[%s2426 + $0xbc] sm:$0xf]
      %v2475 = vpack.c.b16 %v1408, %v1405
      %v2476 = vpack.c.b16 %v1409, %v1406
      %v2477 = vpack.c.b16 %v1410, %v1407
      %v2478 = vpack.c.b16 %v2417, %v1411
      %v2479 = vpack.c.b16 %v2418, %v1412
      %v2480 = vpack.c.b16 %v2419, %v1413
      %v2481 = vpack.c.b16 %v2423, %v2420
      %v2482 = vpack.c.b16 %v2424, %v2421
      %v2483 = vpack.c.b16 %v2425, %v2422
      %v2541 = vunpack.c.l.b16 %v2427
      %v2542 = vunpack.c.l.b16 %v2428
      %v2543 = vunpack.c.l.b16 %v2429
      %v2544 = vunpack.c.l.b16 %v2430
      %v2545 = vunpack.c.l.b16 %v2431
      %v2546 = vunpack.c.l.b16 %v2432
      %v2547 = vunpack.c.l.b16 %v2433
      %v2548 = vunpack.c.l.b16 %v2434
      %v2549 = vunpack.c.l.b16 %v2435
      %v2550 = vunpack.c.l.b16 %v2436
      %v2551 = vunpack.c.l.b16 %v2437
      %v2552 = vunpack.c.l.b16 %v2438
      %v2553 = vunpack.c.l.b16 %v2439
      %v2554 = vunpack.c.l.b16 %v2440
      %v2555 = vunpack.c.l.b16 %v2441
      %v2556 = vunpack.c.l.b16 %v2442
      %v2557 = vunpack.c.l.b16 %v2443
      %v2558 = vunpack.c.l.b16 %v2444
      %v2559 = vunpack.c.l.b16 %v2445
      %v2560 = vunpack.c.l.b16 %v2446
      %v2561 = vunpack.c.l.b16 %v2447
      %v2562 = vunpack.c.l.b16 %v2448
      %v2563 = vunpack.c.l.b16 %v2449
      %v2564 = vunpack.c.l.b16 %v2450
      %v2565 = vunpack.c.l.b16 %v2451
      %v2566 = vunpack.c.l.b16 %v2452
      %v2567 = vunpack.c.l.b16 %v2453
      %v2568 = vunpack.c.l.b16 %v2454
      %v2569 = vunpack.c.l.b16 %v2455
      %v2570 = vunpack.c.l.b16 %v2456
      %v2571 = vunpack.c.l.b16 %v2457
      %v2572 = vunpack.c.l.b16 %v2458
      %v2573 = vunpack.c.l.b16 %v2459
      %v2574 = vunpack.c.l.b16 %v2460
      %v2575 = vunpack.c.l.b16 %v2461
      %v2576 = vunpack.c.l.b16 %v2462
      %v2577 = vunpack.c.l.b16 %v2463
      %v2578 = vunpack.c.l.b16 %v2464
      %v2579 = vunpack.c.l.b16 %v2465
      %v2580 = vunpack.c.l.b16 %v2466
      %v2581 = vunpack.c.l.b16 %v2467
      %v2582 = vunpack.c.l.b16 %v2468
      %v2583 = vunpack.c.l.b16 %v2469
      %v2584 = vunpack.c.l.b16 %v2470
      %v2585 = vunpack.c.l.b16 %v2471
      %v2586 = vunpack.c.l.b16 %v2472
      %v2587 = vunpack.c.l.b16 %v2473
      %v2588 = vunpack.c.l.b16 %v2474
      %v2589 = vpack.c.b16 %v2542, %v2541
      %v2590 = vpack.c.b16 %v2544, %v2543
      %v2591 = vpack.c.b16 %v2546, %v2545
      %v2592 = vpack.c.b16 %v2548, %v2547
      %v2593 = vpack.c.b16 %v2550, %v2549
      %v2594 = vpack.c.b16 %v2552, %v2551
      %v2595 = vpack.c.b16 %v2554, %v2553
      %v2596 = vpack.c.b16 %v2556, %v2555
      %v2597 = vpack.c.b16 %v2558, %v2557
      %v2598 = vpack.c.b16 %v2560, %v2559
      %v2599 = vpack.c.b16 %v2562, %v2561
      %v2600 = vpack.c.b16 %v2564, %v2563
      %v2601 = vpack.c.b16 %v2566, %v2565
      %v2602 = vpack.c.b16 %v2568, %v2567
      %v2603 = vpack.c.b16 %v2570, %v2569
      %v2604 = vpack.c.b16 %v2572, %v2571
      %v2605 = vpack.c.b16 %v2574, %v2573
      %v2606 = vpack.c.b16 %v2576, %v2575
      %v2607 = vpack.c.b16 %v2578, %v2577
      %v2608 = vpack.c.b16 %v2580, %v2579
      %v2609 = vpack.c.b16 %v2582, %v2581
      %v2610 = vpack.c.b16 %v2584, %v2583
      %v2611 = vpack.c.b16 %v2586, %v2585
      %v2612 = vpack.c.b16 %v2588, %v2587
      %2637 = vmatprep.subr.bf16.mxu0 0
      %2638 = vmatpush1.bf16.msra.mxu0 %v2589
      %2639 = vmatprep.subr.bf16.mxu0 0
      %2640 = vmatpush1.bf16.msra.mxu0 %v2590
      %2641 = vmatprep.subr.bf16.mxu0 0
      %2642 = vmatpush1.bf16.msra.mxu0 %v2591
      %2643 = vmatprep.subr.bf16.mxu0 0
      %2644 = vmatpush1.bf16.msra.mxu0 %v2592
      %2645 = vmatprep.subr.bf16.mxu0 0
      %2646 = vmatpush1.bf16.msra.mxu0 %v2593
      %2647 = vmatprep.subr.bf16.mxu0 0
      %2648 = vmatpush1.bf16.msra.mxu0 %v2594
      %2649 = vmatprep.subr.bf16.mxu0 0
      %2650 = vmatpush1.bf16.msra.mxu0 %v2595
      %2651 = vmatprep.subr.bf16.mxu0 0
      %2652 = vmatpush1.bf16.msra.mxu0 %v2596
      %2653 = vmatprep.subr.bf16.mxu0 0
      %2654 = vmatpush1.bf16.msra.mxu0 %v2597
      %2655 = vmatprep.subr.bf16.mxu0 0
      %2656 = vmatpush1.bf16.msra.mxu0 %v2598
      %2657 = vmatprep.subr.bf16.mxu0 0
      %2658 = vmatpush1.bf16.msra.mxu0 %v2599
      %2659 = vmatprep.subr.bf16.mxu0 0
      %2660 = vmatpush1.bf16.msra.mxu0 %v2600
      %2661 = vmatprep.subr.bf16.mxu0 0
      %2662 = vmatpush1.bf16.msra.mxu0 %v2601
      %2663 = vmatprep.subr.bf16.mxu0 0
      %2664 = vmatpush1.bf16.msra.mxu0 %v2602
      %2665 = vmatprep.subr.bf16.mxu0 0
      %2666 = vmatpush1.bf16.msra.mxu0 %v2603
      %2667 = vmatprep.subr.bf16.mxu0 0
      %2668 = vmatpush1.bf16.msra.mxu0 %v2604
      %2669 = vmatprep.mubr.bf16.mxu0 %v1947
      %2670 = vmatmul.mubr.bf16.gmra.mrb[0].mxu0 %v1946
      %v2671 = vpop.f32.mrb[0].mxu0
      %v2672 = vadd.f32 0.0, %v2671
      %v2673 = vpop.f32.mrb[0].mxu0
      %v2674 = vpop.f32.mrb[0].mxu0
      %v2675 = vadd.f32 0.0, %v2674
      %v2676 = vpop.f32.mrb[0].mxu0
      %2677 = vmatprep.mubr.bf16.mxu0 %v1950
      %2678 = vmatmul.mubr.bf16.gmra.mrb[0].mxu0 %v1949
      %v2679 = vpop.f32.mrb[0].mxu0
      %v2680 = vadd.f32 0.0, %v2679
      %v2681 = vpop.f32.mrb[0].mxu0
      %v2682 = vpop.f32.mrb[0].mxu0
      %v2683 = vadd.f32 0.0, %v2682
      %v2684 = vpop.f32.mrb[0].mxu0
      %2685 = vmatprep.mubr.bf16.mxu0 %v1953
      %2686 = vmatmul.mubr.bf16.gmra.mrb[0].mxu0 %v1952
      %v2687 = vpop.f32.mrb[0].mxu0
      %v2688 = vadd.f32 0.0, %v2687
      %v2689 = vpop.f32.mrb[0].mxu0
      %v2690 = vpop.f32.mrb[0].mxu0
      %v2691 = vadd.f32 0.0, %v2690
      %v2692 = vpop.f32.mrb[0].mxu0
      %2693 = vmatprep.mubr.bf16.mxu0 %v1956
      %2694 = vmatmul.mubr.bf16.gmra.mrb[0].mxu0 %v1955
      %v2695 = vpop.f32.mrb[0].mxu0
      %v2696 = vadd.f32 0.0, %v2695
      %v2697 = vpop.f32.mrb[0].mxu0
      %v2698 = vpop.f32.mrb[0].mxu0
      %v2699 = vadd.f32 0.0, %v2698
      %v2700 = vpop.f32.mrb[0].mxu0
      %2701 = vmatprep.mubr.bf16.mxu0 %v1959
      %2702 = vmatmul.mubr.bf16.gmra.mrb[0].mxu0 %v1958
      %v2703 = vpop.f32.mrb[0].mxu0
      %v2704 = vadd.f32 0.0, %v2703
      %v2705 = vpop.f32.mrb[0].mxu0
      %v2706 = vpop.f32.mrb[0].mxu0
      %v2707 = vadd.f32 0.0, %v2706
      %v2708 = vpop.f32.mrb[0].mxu0
      %2709 = vmatprep.mubr.bf16.mxu0 %v1962
      %2710 = vmatmul.mubr.bf16.gmra.mrb[0].mxu0 %v1961
      %v2711 = vpop.f32.mrb[0].mxu0
      %v2712 = vadd.f32 0.0, %v2711
      %v2713 = vpop.f32.mrb[0].mxu0
      %v2714 = vpop.f32.mrb[0].mxu0
      %v2715 = vadd.f32 0.0, %v2714
      %v2716 = vpop.f32.mrb[0].mxu0
      %2717 = vmatprep.mubr.bf16.mxu0 %v1965
      %2718 = vmatmul.mubr.bf16.gmra.mrb[0].mxu0 %v1964
      %v2719 = vpop.f32.mrb[0].mxu0
      %v2720 = vadd.f32 0.0, %v2719
      %v2721 = vpop.f32.mrb[0].mxu0
      %v2722 = vpop.f32.mrb[0].mxu0
      %v2723 = vadd.f32 0.0, %v2722
      %v2724 = vpop.f32.mrb[0].mxu0
      %2725 = vmatprep.mubr.bf16.mxu0 %v1968
      %2726 = vmatmul.mubr.bf16.gmra.mrb[0].mxu0 %v1967
      %v2727 = vpop.f32.mrb[0].mxu0
      %v2728 = vadd.f32 0.0, %v2727
      %v2729 = vpop.f32.mrb[0].mxu0
      %v2730 = vpop.f32.mrb[0].mxu0
      %v2731 = vadd.f32 0.0, %v2730
      %v2732 = vpop.f32.mrb[0].mxu0
      %2733 = vmatprep.mubr.bf16.mxu0 %v1971
      %2734 = vmatmul.mubr.bf16.gmra.mrb[0].mxu0 %v1970
      %v2735 = vpop.f32.mrb[0].mxu0
      %v2736 = vadd.f32 0.0, %v2735
      %v2737 = vpop.f32.mrb[0].mxu0
      %v2738 = vpop.f32.mrb[0].mxu0
      %v2739 = vadd.f32 0.0, %v2738
      %v2740 = vpop.f32.mrb[0].mxu0
      %2741 = vmatprep.mubr.bf16.mxu0 %v2476
      %2742 = vmatmul.mubr.bf16.gmra.mrb[0].mxu0 %v2475
      %v2743 = vpop.f32.mrb[0].mxu0
      %v2744 = vadd.f32 0.0, %v2743
      %v2745 = vpop.f32.mrb[0].mxu0
      %v2746 = vpop.f32.mrb[0].mxu0
      %v2747 = vadd.f32 0.0, %v2746
      %v2748 = vpop.f32.mrb[0].mxu0
      %2749 = vmatprep.mubr.bf16.mxu0 %v2479
      %2750 = vmatmul.mubr.bf16.gmra.mrb[0].mxu0 %v2478
      %v2751 = vpop.f32.mrb[0].mxu0
      %v2752 = vadd.f32 0.0, %v2751
      %v2753 = vpop.f32.mrb[0].mxu0
      %v2754 = vpop.f32.mrb[0].mxu0
      %v2755 = vadd.f32 0.0, %v2754
      %v2756 = vpop.f32.mrb[0].mxu0
      %2757 = vmatprep.mubr.bf16.mxu0 %v2482
      %2758 = vmatmul.mubr.bf16.gmra.mrb[0].mxu0 %v2481
      %v2759 = vpop.f32.mrb[0].mxu0
      %v2760 = vadd.f32 0.0, %v2759
      %v2761 = vpop.f32.mrb[0].mxu0
      %v2762 = vpop.f32.mrb[0].mxu0
      %v2763 = vadd.f32 0.0, %v2762
      %v2764 = vpop.f32.mrb[0].mxu0
      %2765 = vdwg.mxu0
      %2766 = vmatprep.subr.bf16.mxu0 0
      %2767 = vmatpush1.bf16.msra.mxu0 %v2605
      %2768 = vmatprep.subr.bf16.mxu0 0
      %2769 = vmatpush1.bf16.msra.mxu0 %v2606
      %2770 = vmatprep.subr.bf16.mxu0 0
      %2771 = vmatpush1.bf16.msra.mxu0 %v2607
      %2772 = vmatprep.subr.bf16.mxu0 0
      %2773 = vmatpush1.bf16.msra.mxu0 %v2608
      %2774 = vmatprep.subr.bf16.mxu0 0
      %2775 = vmatpush1.bf16.msra.mxu0 %v2609
      %2776 = vmatprep.subr.bf16.mxu0 0
      %2777 = vmatpush1.bf16.msra.mxu0 %v2610
      %2778 = vmatprep.subr.bf16.mxu0 0
      %2779 = vmatpush1.bf16.msra.mxu0 %v2611
      %2780 = vmatprep.subr.bf16.mxu0 0
      %2781 = vmatpush1.bf16.msra.mxu0 %v2612
      %2782 = vmatprep.subr.bf16.mxu0 0
      %2783 = vmatpush1.bf16.msra.mxu0 0
      %2784 = vmatprep.subr.bf16.mxu0 0
      %2785 = vmatpush1.bf16.msra.mxu0 0
      %2786 = vmatprep.subr.bf16.mxu0 0
      %2787 = vmatpush1.bf16.msra.mxu0 0
      %2788 = vmatprep.subr.bf16.mxu0 0
      %2789 = vmatpush1.bf16.msra.mxu0 0
      %2790 = vmatprep.subr.bf16.mxu0 0
      %2791 = vmatpush1.bf16.msra.mxu0 0
      %2792 = vmatprep.subr.bf16.mxu0 0
      %2793 = vmatpush1.bf16.msra.mxu0 0
      %2794 = vmatprep.subr.bf16.mxu0 0
      %2795 = vmatpush1.bf16.msra.mxu0 0
      %2796 = vmatprep.subr.bf16.mxu0 0
      %2797 = vmatpush1.bf16.msra.mxu0 0
      %2798 = vmatprep.mubr.bf16.mxu0 0
      %2799 = vmatmul.mubr.bf16.gmra.mrb[0].mxu0 %v1948
      %v2800 = vpop.f32.mrb[0].mxu0
      %v2801 = vadd.f32 %v2672, %v2800
      %v2802 = vpop.f32.mrb[0].mxu0
      %v2803 = vpop.f32.mrb[0].mxu0
      %v2804 = vadd.f32 %v2675, %v2803
      %v2805 = vpop.f32.mrb[0].mxu0
      %2806 = vmatprep.mubr.bf16.mxu0 0
      %2807 = vmatmul.mubr.bf16.gmra.mrb[0].mxu0 %v1951
      %v2808 = vpop.f32.mrb[0].mxu0
      %v2809 = vadd.f32 %v2680, %v2808
      %v2810 = vpop.f32.mrb[0].mxu0
      %v2811 = vpop.f32.mrb[0].mxu0
      %v2812 = vadd.f32 %v2683, %v2811
      %v2813 = vpop.f32.mrb[0].mxu0
      %2814 = vmatprep.mubr.bf16.mxu0 0
      %2815 = vmatmul.mubr.bf16.gmra.mrb[0].mxu0 %v1954
      %v2816 = vpop.f32.mrb[0].mxu0
      %v2817 = vadd.f32 %v2688, %v2816
      %v2818 = vpop.f32.mrb[0].mxu0
      %v2819 = vpop.f32.mrb[0].mxu0
      %v2820 = vadd.f32 %v2691, %v2819
      %v2821 = vpop.f32.mrb[0].mxu0
      %2822 = vmatprep.mubr.bf16.mxu0 0
      %2823 = vmatmul.mubr.bf16.gmra.mrb[0].mxu0 %v1957
      %v2824 = vpop.f32.mrb[0].mxu0
      %v2825 = vadd.f32 %v2696, %v2824
      %v2826 = vpop.f32.mrb[0].mxu0
      %v2827 = vpop.f32.mrb[0].mxu0
      %v2828 = vadd.f32 %v2699, %v2827
      %v2829 = vpop.f32.mrb[0].mxu0
      %2830 = vmatprep.mubr.bf16.mxu0 0
      %2831 = vmatmul.mubr.bf16.gmra.mrb[0].mxu0 %v1960
      %v2832 = vpop.f32.mrb[0].mxu0
      %v2833 = vadd.f32 %v2704, %v2832
      %v2834 = vpop.f32.mrb[0].mxu0
      %v2835 = vpop.f32.mrb[0].mxu0
      %v2836 = vadd.f32 %v2707, %v2835
      %v2837 = vpop.f32.mrb[0].mxu0
      %2838 = vmatprep.mubr.bf16.mxu0 0
      %2839 = vmatmul.mubr.bf16.gmra.mrb[0].mxu0 %v1963
      %v2840 = vpop.f32.mrb[0].mxu0
      %v2841 = vadd.f32 %v2712, %v2840
      %v2842 = vpop.f32.mrb[0].mxu0
      %v2843 = vpop.f32.mrb[0].mxu0
      %v2844 = vadd.f32 %v2715, %v2843
      %v2845 = vpop.f32.mrb[0].mxu0
      %2846 = vmatprep.mubr.bf16.mxu0 0
      %2847 = vmatmul.mubr.bf16.gmra.mrb[0].mxu0 %v1966
      %v2848 = vpop.f32.mrb[0].mxu0
      %v2849 = vadd.f32 %v2720, %v2848
      %v2850 = vpop.f32.mrb[0].mxu0
      %v2851 = vpop.f32.mrb[0].mxu0
      %v2852 = vadd.f32 %v2723, %v2851
      %v2853 = vpop.f32.mrb[0].mxu0
      %2854 = vmatprep.mubr.bf16.mxu0 0
      %2855 = vmatmul.mubr.bf16.gmra.mrb[0].mxu0 %v1969
      %v2856 = vpop.f32.mrb[0].mxu0
      %v2857 = vadd.f32 %v2728, %v2856
      %v2858 = vpop.f32.mrb[0].mxu0
      %v2859 = vpop.f32.mrb[0].mxu0
      %v2860 = vadd.f32 %v2731, %v2859
      %v2861 = vpop.f32.mrb[0].mxu0
      %2862 = vmatprep.mubr.bf16.mxu0 0
      %2863 = vmatmul.mubr.bf16.gmra.mrb[0].mxu0 %v1972
      %v2864 = vpop.f32.mrb[0].mxu0
      %v2865 = vadd.f32 %v2736, %v2864
      %v2866 = vpop.f32.mrb[0].mxu0
      %v2867 = vpop.f32.mrb[0].mxu0
      %v2868 = vadd.f32 %v2739, %v2867
      %v2869 = vpop.f32.mrb[0].mxu0
      %2870 = vmatprep.mubr.bf16.mxu0 0
      %2871 = vmatmul.mubr.bf16.gmra.mrb[0].mxu0 %v2477
      %v2872 = vpop.f32.mrb[0].mxu0
      %v2873 = vadd.f32 %v2744, %v2872
      %v2874 = vpop.f32.mrb[0].mxu0
      %v2875 = vpop.f32.mrb[0].mxu0
      %v2876 = vadd.f32 %v2747, %v2875
      %v2877 = vpop.f32.mrb[0].mxu0
      %2878 = vmatprep.mubr.bf16.mxu0 0
      %2879 = vmatmul.mubr.bf16.gmra.mrb[0].mxu0 %v2480
      %v2880 = vpop.f32.mrb[0].mxu0
      %v2881 = vadd.f32 %v2752, %v2880
      %v2882 = vpop.f32.mrb[0].mxu0
      %v2883 = vpop.f32.mrb[0].mxu0
      %v2884 = vadd.f32 %v2755, %v2883
      %v2885 = vpop.f32.mrb[0].mxu0
      %2886 = vmatprep.mubr.bf16.mxu0 0
      %2887 = vmatmul.mubr.bf16.gmra.mrb[0].mxu0 %v2483
      %v2888 = vpop.f32.mrb[0].mxu0
      %v2889 = vadd.f32 %v2760, %v2888
      %v2890 = vpop.f32.mrb[0].mxu0
      %v2891 = vpop.f32.mrb[0].mxu0
      %v2892 = vadd.f32 %v2763, %v2891
      %v2893 = vpop.f32.mrb[0].mxu0
      %2894 = vdwg.mxu0
      %v2895 = vadd.f32 %v2317, %v2801
      %v2896 = vadd.f32 %v2320, %v2804
      %v2897 = vadd.f32 %v2325, %v2809
      %v2898 = vadd.f32 %v2328, %v2812
      %v2899 = vadd.f32 %v2333, %v2817
      %v2900 = vadd.f32 %v2336, %v2820
      %v2901 = vadd.f32 %v2341, %v2825
      %v2902 = vadd.f32 %v2344, %v2828
      %v2903 = vadd.f32 %v2349, %v2833
      %v2904 = vadd.f32 %v2352, %v2836
      %v2905 = vadd.f32 %v2357, %v2841
      %v2906 = vadd.f32 %v2360, %v2844
      %v2907 = vadd.f32 %v2365, %v2849
      %v2908 = vadd.f32 %v2368, %v2852
      %v2909 = vadd.f32 %v2373, %v2857
      %v2910 = vadd.f32 %v2376, %v2860
      %v2911 = vadd.f32 %v2381, %v2865
      %v2912 = vadd.f32 %v2384, %v2868
      %v2913 = vadd.f32 %v2389, %v2873
      %v2914 = vadd.f32 %v2392, %v2876
      %v2915 = vadd.f32 %v2397, %v2881
      %v2916 = vadd.f32 %v2400, %v2884
      %v2917 = vadd.f32 %v2405, %v2889
      %v2918 = vadd.f32 %v2408, %v2892
      %v2919 = vld [vmem:[%s7] sm:$0x1]
      %v2921 = vlaneseq
      %v2922 = vshrl.u32 %v2921, 7
      %v2923 = vsub.s32 0, %v2922
      %v2924 = vrot.slane %v2919, %v2923
      %v2926 = vadd.f32 %v2895, %v2924
      %v2927 = vadd.f32 %v2896, %v2924
      %v2928 = vadd.f32 %v2897, %v2924
      %v2929 = vadd.f32 %v2898, %v2924
      %v2930 = vadd.f32 %v2899, %v2924
      %v2931 = vadd.f32 %v2900, %v2924
      %v2932 = vadd.f32 %v2901, %v2924
      %v2933 = vadd.f32 %v2902, %v2924
      %v2934 = vadd.f32 %v2903, %v2924
      %v2935 = vadd.f32 %v2904, %v2924
      %v2936 = vadd.f32 %v2905, %v2924
      %v2937 = vadd.f32 %v2906, %v2924
      %v2938 = vadd.f32 %v2907, %v2924
      %v2939 = vadd.f32 %v2908, %v2924
      %v2940 = vadd.f32 %v2909, %v2924
      %v2941 = vadd.f32 %v2910, %v2924
      %v2942 = vadd.f32 %v2911, %v2924
      %v2943 = vadd.f32 %v2912, %v2924
      %v2944 = vadd.f32 %v2913, %v2924
      %v2945 = vadd.f32 %v2914, %v2924
      %v2946 = vadd.f32 %v2915, %v2924
      %v2947 = vadd.f32 %v2916, %v2924
      %v2948 = vadd.f32 %v2917, %v2924
      %v2949 = vadd.f32 %v2918, %v2924
      %v2950 = vmax.f32 %v2926, 0.0
      %v2951 = vmax.f32 %v2927, 0.0
      %v2952 = vmax.f32 %v2928, 0.0
      %v2953 = vmax.f32 %v2929, 0.0
      %v2954 = vmax.f32 %v2930, 0.0
      %v2955 = vmax.f32 %v2931, 0.0
      %v2956 = vmax.f32 %v2932, 0.0
      %v2957 = vmax.f32 %v2933, 0.0
      %v2958 = vmax.f32 %v2934, 0.0
      %v2959 = vmax.f32 %v2935, 0.0
      %v2960 = vmax.f32 %v2936, 0.0
      %v2961 = vmax.f32 %v2937, 0.0
      %v2962 = vmax.f32 %v2938, 0.0
      %v2963 = vmax.f32 %v2939, 0.0
      %v2964 = vmax.f32 %v2940, 0.0
      %v2965 = vmax.f32 %v2941, 0.0
      %v2966 = vmax.f32 %v2942, 0.0
      %v2967 = vmax.f32 %v2943, 0.0
      %v2968 = vmax.f32 %v2944, 0.0
      %v2969 = vmax.f32 %v2945, 0.0
      %v2970 = vmax.f32 %v2946, 0.0
      %v2971 = vmax.f32 %v2947, 0.0
      %v2972 = vmax.f32 %v2948, 0.0
      %v2973 = vmax.f32 %v2949, 0.0
      %v2974 = vpack.c.bf16 %v2951, %v2950
      %v2975 = vpack.c.bf16 %v2953, %v2952
      %v2976 = vpack.c.bf16 %v2955, %v2954
      %v2977 = vpack.c.bf16 %v2957, %v2956
      %v2978 = vpack.c.bf16 %v2959, %v2958
      %v2979 = vpack.c.bf16 %v2961, %v2960
      %v2980 = vpack.c.bf16 %v2963, %v2962
      %v2981 = vpack.c.bf16 %v2965, %v2964
      %v2982 = vpack.c.bf16 %v2967, %v2966
      %v2983 = vpack.c.bf16 %v2969, %v2968
      %v2984 = vpack.c.bf16 %v2971, %v2970
      %v2985 = vpack.c.bf16 %v2973, %v2972
      %v2986 = vld [vmem:[%s5] sm:$0xf]
      %v2987 = vld [vmem:[%s5 + $0x4] sm:$0xf]
      %v2988 = vld [vmem:[%s5 + $0x8] sm:$0xf]
      %v2989 = vld [vmem:[%s5 + $0xc] sm:$0xf]
      %v2990 = vld [vmem:[%s5 + $0x10] sm:$0xf]
      %v2991 = vld [vmem:[%s5 + $0x14] sm:$0xf]
      %v2992 = vld [vmem:[%s5 + $0x18] sm:$0xf]
      %v2993 = vld [vmem:[%s5 + $0x1c] sm:$0xf]
      %v2994 = vld [vmem:[%s5 + $0x20] sm:$0xf]
      %v2995 = vld [vmem:[%s5 + $0x24] sm:$0xf]
      %v2996 = vld [vmem:[%s5 + $0x28] sm:$0xf]
      %v2997 = vld [vmem:[%s5 + $0x2c] sm:$0xf]
      %v2998 = vld [vmem:[%s5 + $0x30] sm:$0xf]
      %v2999 = vld [vmem:[%s5 + $0x34] sm:$0xf]
      %v3000 = vld [vmem:[%s5 + $0x38] sm:$0xf]
      %v3001 = vld [vmem:[%s5 + $0x3c] sm:$0xf]
      %v3002 = vld [vmem:[%s8] sm:$0x1]
      %v3004 = vlaneseq
      %v3005 = vshrl.u32 %v3004, 7
      %v3006 = vsub.s32 0, %v3005
      %v3007 = vrot.slane %v3002, %v3006
      %v3025 = vunpack.c.l.b16 %v2986
      %v3026 = vunpack.c.l.b16 %v2987
      %v3027 = vunpack.c.l.b16 %v2988
      %v3028 = vunpack.c.l.b16 %v2989
      %v3029 = vunpack.c.l.b16 %v2990
      %v3030 = vunpack.c.l.b16 %v2991
      %v3031 = vunpack.c.l.b16 %v2992
      %v3032 = vunpack.c.l.b16 %v2993
      %v3033 = vunpack.c.l.b16 %v2994
      %v3034 = vunpack.c.l.b16 %v2995
      %v3035 = vunpack.c.l.b16 %v2996
      %v3036 = vunpack.c.l.b16 %v2997
      %v3037 = vunpack.c.l.b16 %v2998
      %v3038 = vunpack.c.l.b16 %v2999
      %v3039 = vunpack.c.l.b16 %v3000
      %v3040 = vunpack.c.l.b16 %v3001
      %v3041 = vpack.c.b16 %v3026, %v3025
      %v3042 = vpack.c.b16 %v3028, %v3027
      %v3043 = vpack.c.b16 %v3030, %v3029
      %v3044 = vpack.c.b16 %v3032, %v3031
      %v3045 = vpack.c.b16 %v3034, %v3033
      %v3046 = vpack.c.b16 %v3036, %v3035
      %v3047 = vpack.c.b16 %v3038, %v3037
      %v3048 = vpack.c.b16 %v3040, %v3039
      %3057 = vmatprep.subr.bf16.mxu0 0
      %3058 = vmatpush1.bf16.msra.mxu0 %v3041
      %3059 = vmatprep.subr.bf16.mxu0 0
      %3060 = vmatpush1.bf16.msra.mxu0 %v3042
      %3061 = vmatprep.subr.bf16.mxu0 0
      %3062 = vmatpush1.bf16.msra.mxu0 %v3043
      %3063 = vmatprep.subr.bf16.mxu0 0
      %3064 = vmatpush1.bf16.msra.mxu0 %v3044
      %3065 = vmatprep.subr.bf16.mxu0 0
      %3066 = vmatpush1.bf16.msra.mxu0 %v3045
      %3067 = vmatprep.subr.bf16.mxu0 0
      %3068 = vmatpush1.bf16.msra.mxu0 %v3046
      %3069 = vmatprep.subr.bf16.mxu0 0
      %3070 = vmatpush1.bf16.msra.mxu0 %v3047
      %3071 = vmatprep.subr.bf16.mxu0 0
      %3072 = vmatpush1.bf16.msra.mxu0 %v3048
      %3073 = vmatprep.subr.bf16.mxu0 0
      %3074 = vmatpush1.bf16.msra.mxu0 0
      %3075 = vmatprep.subr.bf16.mxu0 0
      %3076 = vmatpush1.bf16.msra.mxu0 0
      %3077 = vmatprep.subr.bf16.mxu0 0
      %3078 = vmatpush1.bf16.msra.mxu0 0
      %3079 = vmatprep.subr.bf16.mxu0 0
      %3080 = vmatpush1.bf16.msra.mxu0 0
      %3081 = vmatprep.subr.bf16.mxu0 0
      %3082 = vmatpush1.bf16.msra.mxu0 0
      %3083 = vmatprep.subr.bf16.mxu0 0
      %3084 = vmatpush1.bf16.msra.mxu0 0
      %3085 = vmatprep.subr.bf16.mxu0 0
      %3086 = vmatpush1.bf16.msra.mxu0 0
      %3087 = vmatprep.subr.bf16.mxu0 0
      %3088 = vmatpush1.bf16.msra.mxu0 0
      %3089 = vmatprep.mubr.bf16.mxu0 0
      %3090 = vmatmul.mubr.bf16.gmra.mrb[0].mxu0 %v2974
      %v3091 = vpop.f32.mrb[0].mxu0
      %v3092 = vadd.f32 %v3007, %v3091
      %v3093 = vpop.f32.mrb[0].mxu0
      %v3094 = vpop.f32.mrb[0].mxu0
      %v3095 = vadd.f32 %v3007, %v3094
      %v3096 = vpop.f32.mrb[0].mxu0
      %3097 = vmatprep.mubr.bf16.mxu0 0
      %3098 = vmatmul.mubr.bf16.gmra.mrb[0].mxu0 %v2975
      %v3099 = vpop.f32.mrb[0].mxu0
      %v3100 = vadd.f32 %v3007, %v3099
      %v3101 = vpop.f32.mrb[0].mxu0
      %v3102 = vpop.f32.mrb[0].mxu0
      %v3103 = vadd.f32 %v3007, %v3102
      %v3104 = vpop.f32.mrb[0].mxu0
      %3105 = vmatprep.mubr.bf16.mxu0 0
      %3106 = vmatmul.mubr.bf16.gmra.mrb[0].mxu0 %v2976
      %v3107 = vpop.f32.mrb[0].mxu0
      %v3108 = vadd.f32 %v3007, %v3107
      %v3109 = vpop.f32.mrb[0].mxu0
      %v3110 = vpop.f32.mrb[0].mxu0
      %v3111 = vadd.f32 %v3007, %v3110
      %v3112 = vpop.f32.mrb[0].mxu0
      %3113 = vmatprep.mubr.bf16.mxu0 0
      %3114 = vmatmul.mubr.bf16.gmra.mrb[0].mxu0 %v2977
      %v3115 = vpop.f32.mrb[0].mxu0
      %v3116 = vadd.f32 %v3007, %v3115
      %v3117 = vpop.f32.mrb[0].mxu0
      %v3118 = vpop.f32.mrb[0].mxu0
      %v3119 = vadd.f32 %v3007, %v3118
      %v3120 = vpop.f32.mrb[0].mxu0
      %3121 = vmatprep.mubr.bf16.mxu0 0
      %3122 = vmatmul.mubr.bf16.gmra.mrb[0].mxu0 %v2978
      %v3123 = vpop.f32.mrb[0].mxu0
      %v3124 = vadd.f32 %v3007, %v3123
      %v3125 = vpop.f32.mrb[0].mxu0
      %v3126 = vpop.f32.mrb[0].mxu0
      %v3127 = vadd.f32 %v3007, %v3126
      %v3128 = vpop.f32.mrb[0].mxu0
      %3129 = vmatprep.mubr.bf16.mxu0 0
      %3130 = vmatmul.mubr.bf16.gmra.mrb[0].mxu0 %v2979
      %v3131 = vpop.f32.mrb[0].mxu0
      %v3132 = vadd.f32 %v3007, %v3131
      %v3133 = vpop.f32.mrb[0].mxu0
      %v3134 = vpop.f32.mrb[0].mxu0
      %v3135 = vadd.f32 %v3007, %v3134
      %v3136 = vpop.f32.mrb[0].mxu0
      %3137 = vmatprep.mubr.bf16.mxu0 0
      %3138 = vmatmul.mubr.bf16.gmra.mrb[0].mxu0 %v2980
      %v3139 = vpop.f32.mrb[0].mxu0
      %v3140 = vadd.f32 %v3007, %v3139
      %v3141 = vpop.f32.mrb[0].mxu0
      %v3142 = vpop.f32.mrb[0].mxu0
      %v3143 = vadd.f32 %v3007, %v3142
      %v3144 = vpop.f32.mrb[0].mxu0
      %3145 = vmatprep.mubr.bf16.mxu0 0
      %3146 = vmatmul.mubr.bf16.gmra.mrb[0].mxu0 %v2981
      %v3147 = vpop.f32.mrb[0].mxu0
      %v3148 = vadd.f32 %v3007, %v3147
      %v3149 = vpop.f32.mrb[0].mxu0
      %v3150 = vpop.f32.mrb[0].mxu0
      %v3151 = vadd.f32 %v3007, %v3150
      %v3152 = vpop.f32.mrb[0].mxu0
      %3153 = vmatprep.mubr.bf16.mxu0 0
      %3154 = vmatmul.mubr.bf16.gmra.mrb[0].mxu0 %v2982
      %v3155 = vpop.f32.mrb[0].mxu0
      %v3156 = vadd.f32 %v3007, %v3155
      %v3157 = vpop.f32.mrb[0].mxu0
      %v3158 = vpop.f32.mrb[0].mxu0
      %v3159 = vadd.f32 %v3007, %v3158
      %v3160 = vpop.f32.mrb[0].mxu0
      %3161 = vmatprep.mubr.bf16.mxu0 0
      %3162 = vmatmul.mubr.bf16.gmra.mrb[0].mxu0 %v2983
      %v3163 = vpop.f32.mrb[0].mxu0
      %v3164 = vadd.f32 %v3007, %v3163
      %v3165 = vpop.f32.mrb[0].mxu0
      %v3166 = vpop.f32.mrb[0].mxu0
      %v3167 = vadd.f32 %v3007, %v3166
      %v3168 = vpop.f32.mrb[0].mxu0
      %3169 = vmatprep.mubr.bf16.mxu0 0
      %3170 = vmatmul.mubr.bf16.gmra.mrb[0].mxu0 %v2984
      %v3171 = vpop.f32.mrb[0].mxu0
      %v3172 = vadd.f32 %v3007, %v3171
      %v3173 = vpop.f32.mrb[0].mxu0
      %v3174 = vpop.f32.mrb[0].mxu0
      %v3175 = vadd.f32 %v3007, %v3174
      %v3176 = vpop.f32.mrb[0].mxu0
      %3177 = vmatprep.mubr.bf16.mxu0 0
      %3178 = vmatmul.mubr.bf16.gmra.mrb[0].mxu0 %v2985
      %v3179 = vpop.f32.mrb[0].mxu0
      %v3180 = vadd.f32 %v3007, %v3179
      %v3181 = vpop.f32.mrb[0].mxu0
      %v3182 = vpop.f32.mrb[0].mxu0
      %v3183 = vadd.f32 %v3007, %v3182
      %v3184 = vpop.f32.mrb[0].mxu0
      %3185 = vdwg.mxu0
      %v3186 = vunpack.c.l.bf16 %v509
      %v3187 = vunpack.c.l.bf16 %v510
      %v3188 = vunpack.c.l.bf16 %v511
      %v3189 = vunpack.c.l.bf16 %v512
      %v3190 = vunpack.c.l.bf16 %v513
      %v3191 = vunpack.c.l.bf16 %v514
      %v3192 = vunpack.c.l.bf16 %v515
      %v3193 = vunpack.c.l.bf16 %v516
      %v3194 = vunpack.c.l.bf16 %v517
      %v3195 = vunpack.c.l.bf16 %v518
      %v3196 = vunpack.c.l.bf16 %v519
      %v3197 = vunpack.c.l.bf16 %v520
      %v3198 = vunpack.c.l.bf16 %v521
      %v3199 = vunpack.c.l.bf16 %v522
      %v3200 = vunpack.c.l.bf16 %v523
      %v3201 = vunpack.c.l.bf16 %v524
      %v3202 = vunpack.c.l.bf16 %v525
      %v3203 = vunpack.c.l.bf16 %v526
      %v3204 = vunpack.c.l.bf16 %v527
      %v3205 = vunpack.c.l.bf16 %v528
      %v3206 = vunpack.c.l.bf16 %v529
      %v3207 = vunpack.c.l.bf16 %v530
      %v3208 = vunpack.c.l.bf16 %v531
      %v3209 = vunpack.c.l.bf16 %v532
      %v3210 = vadd.f32 %v3092, %v3186
      %v3211 = vadd.f32 %v3095, %v3187
      %v3212 = vadd.f32 %v3100, %v3188
      %v3213 = vadd.f32 %v3103, %v3189
      %v3214 = vadd.f32 %v3108, %v3190
      %v3215 = vadd.f32 %v3111, %v3191
      %v3216 = vadd.f32 %v3116, %v3192
      %v3217 = vadd.f32 %v3119, %v3193
      %v3218 = vadd.f32 %v3124, %v3194
      %v3219 = vadd.f32 %v3127, %v3195
      %v3220 = vadd.f32 %v3132, %v3196
      %v3221 = vadd.f32 %v3135, %v3197
      %v3222 = vadd.f32 %v3140, %v3198
      %v3223 = vadd.f32 %v3143, %v3199
      %v3224 = vadd.f32 %v3148, %v3200
      %v3225 = vadd.f32 %v3151, %v3201
      %v3226 = vadd.f32 %v3156, %v3202
      %v3227 = vadd.f32 %v3159, %v3203
      %v3228 = vadd.f32 %v3164, %v3204
      %v3229 = vadd.f32 %v3167, %v3205
      %v3230 = vadd.f32 %v3172, %v3206
      %v3231 = vadd.f32 %v3175, %v3207
      %v3232 = vadd.f32 %v3180, %v3208
      %v3233 = vadd.f32 %v3183, %v3209
      %v3234 = vmax.f32 %v3210, 0.0
      %v3235 = vmax.f32 %v3211, 0.0
      %v3236 = vmax.f32 %v3212, 0.0
      %v3237 = vmax.f32 %v3213, 0.0
      %v3238 = vmax.f32 %v3214, 0.0
      %v3239 = vmax.f32 %v3215, 0.0
      %v3240 = vmax.f32 %v3216, 0.0
      %v3241 = vmax.f32 %v3217, 0.0
      %v3242 = vmax.f32 %v3218, 0.0
      %v3243 = vmax.f32 %v3219, 0.0
      %v3244 = vmax.f32 %v3220, 0.0
      %v3245 = vmax.f32 %v3221, 0.0
      %v3246 = vmax.f32 %v3222, 0.0
      %v3247 = vmax.f32 %v3223, 0.0
      %v3248 = vmax.f32 %v3224, 0.0
      %v3249 = vmax.f32 %v3225, 0.0
      %v3250 = vmax.f32 %v3226, 0.0
      %v3251 = vmax.f32 %v3227, 0.0
      %v3252 = vmax.f32 %v3228, 0.0
      %v3253 = vmax.f32 %v3229, 0.0
      %v3254 = vmax.f32 %v3230, 0.0
      %v3255 = vmax.f32 %v3231, 0.0
      %v3256 = vmax.f32 %v3232, 0.0
      %v3257 = vmax.f32 %v3233, 0.0
      %3258 = vst [vmem:[%s503] sm:$0xff] %v3234
      %3259 = vst [vmem:[%s503 + $0x8] sm:$0xff] %v3235
      %3260 = vst [vmem:[%s503 + $0x10] sm:$0xff] %v3236
      %3261 = vst [vmem:[%s503 + $0x18] sm:$0xff] %v3237
      %3262 = vst [vmem:[%s503 + $0x20] sm:$0xff] %v3238
      %3263 = vst [vmem:[%s503 + $0x28] sm:$0xff] %v3239
      %3264 = vst [vmem:[%s503 + $0x30] sm:$0xff] %v3240
      %3265 = vst [vmem:[%s503 + $0x38] sm:$0xff] %v3241
      %3266 = vst [vmem:[%s503 + $0x40] sm:$0xff] %v3242
      %3267 = vst [vmem:[%s503 + $0x48] sm:$0xff] %v3243
      %3268 = vst [vmem:[%s503 + $0x50] sm:$0xff] %v3244
      %3269 = vst [vmem:[%s503 + $0x58] sm:$0xff] %v3245
      %3270 = vst [vmem:[%s503 + $0x60] sm:$0xff] %v3246
      %3271 = vst [vmem:[%s503 + $0x68] sm:$0xff] %v3247
      %3272 = vst [vmem:[%s503 + $0x70] sm:$0xff] %v3248
      %3273 = vst [vmem:[%s503 + $0x78] sm:$0xff] %v3249
      %3274 = vst [vmem:[%s503 + $0x80] sm:$0xff] %v3250
      %3275 = vst [vmem:[%s503 + $0x88] sm:$0xff] %v3251
      %3276 = vst [vmem:[%s503 + $0x90] sm:$0xff] %v3252
      %3277 = vst [vmem:[%s503 + $0x98] sm:$0xff] %v3253
      %3278 = vst [vmem:[%s503 + $0xa0] sm:$0xff] %v3254
      %3279 = vst [vmem:[%s503 + $0xa8] sm:$0xff] %v3255
      %3280 = vst [vmem:[%s503 + $0xb0] sm:$0xff] %v3256
      %3281 = vst [vmem:[%s503 + $0xb8] sm:$0xff] %v3257
      %s3282 = smul.u32 8, %s25
      %p3283 = scmp.lt.s32.totalorder %s24, 1
      %s3284 = scalar_select %p3283, %s24, 1
      %p3285 = scmp.lt.s32.totalorder %s3282, 15
      %s3286 = scalar_select %p3285, %s3282, 15
      %s3287 = smul.addr %s3286, 3
      %s3288 = smul.addr %s3284, 48
      %s3289 = sadd.s32 %s3287, %s3288
      %s3290 = smul.addr %s3289, 8
      %s3291 = scalar_lea.vmem %s9, %s3290
      // Predicated region
      $region57: #{bottleneck_forward.1} parent=55 // pred_check
        %p3292 = pneg %p272
      $region58: #{bottleneck_forward.1} parent=55 // pred_check_branch
        %3294 = sbr.rel (%p3292) target = $region60
      $region59: #{bottleneck_forward.1} parent=55 // pred_region
        %s3295 = smul.u32 8, %s25
      $region60: #{bottleneck_forward.1} parent=55 // pred_fallthru
        _
    $region56: #{bottleneck_forward.1} parent=5 // pred_fallthru
      _
    %p3296 = scmp.le.s32.totalorder 2, %s15
    // Predicated region
    $region61: #{bottleneck_forward.1} parent=5 // pred_check
      %p3297 = pneg %p3296
    $region62: #{bottleneck_forward.1} parent=5 // pred_check_branch
      %3299 = sbr.rel (%p3297) target = $region64
    $region63: #{bottleneck_forward.1} parent=5 // pred_region
      %s3300 = ssub.s32 %s15, 2
      // Predicated region
      $region65: #{bottleneck_forward.1} parent=63 // pred_check
        %p3301 = pneg %p278
      $region66: #{bottleneck_forward.1} parent=63 // pred_check_branch
        %3303 = sbr.rel (%p3301) target = $region68
      $region67: #{bottleneck_forward.1} parent=63 // pred_region
        %s3304 = smul.u32 8, %s27
        %p3305 = scmp.lt.s32.totalorder %s26, 1
        %s3306 = scalar_select %p3305, %s26, 1
        %p3307 = scmp.lt.s32.totalorder %s3304, 15
        %s3308 = scalar_select %p3307, %s3304, 15
        %s3309 = smul.addr %s3308, 3
        %s3310 = smul.addr %s3306, 48
        %s3311 = sadd.s32 %s3309, %s3310
        %s3312 = smul.addr %s3311, 8
        %s3313 = scalar_lea.vmem %s9, %s3312
      $region68: #{bottleneck_forward.1} parent=63 // pred_fallthru
        _
    $region64: #{bottleneck_forward.1} parent=5 // pred_fallthru
      _
  $region6: #{bottleneck_forward.1} parent=0 // loop_footer
    %s19 = sadd.s32 1, %s15
  $region7: #{bottleneck_forward.1} parent=0 // loop_footer_branch
    %14 = sbr.rel target = $region3
  $region8: #{bottleneck_forward.1} parent=0 // loop_exit
    _

</llo_original>
